<compile_context>
chip_gen: v7x
topology: tpu7x:2x2x1
jax: 0.10.0
libtpu: 0.0.40
codegen_flags: <defaults>
</compile_context>

<pallas_src>
import functools

import jax
import jax.numpy as jnp
from jax.experimental import pallas as pl
from jax.experimental.pallas import tpu as pltpu


# ---------------------------------------------------------------------------
# small helpers
# ---------------------------------------------------------------------------
def _round_up(x, m):
    return ((x + m - 1) // m) * m


def _fold_bn(p):
    """Fold eval-mode BatchNorm (eps=1e-3) into a stacked (2, Cout, 1) scale/bias."""
    scale = p["gamma"] / jnp.sqrt(p["var"] + 1e-3)
    bias = p["beta"] - p["mean"] * scale
    return jnp.stack([scale.reshape(-1, 1), bias.reshape(-1, 1)]).astype(jnp.float32)


def _shift_lanes(v, off):
    """s[:, r] = v[:, r + off] with zero fill out of range (off is a static int)."""
    c, p = v.shape
    if off == 0:
        return v
    if off > 0:
        return jnp.concatenate([v[:, off:], jnp.zeros((c, off), v.dtype)], axis=1)
    return jnp.concatenate([jnp.zeros((c, -off), v.dtype), v[:, :p + off]], axis=1)


# ---------------------------------------------------------------------------
# the fused C3 Pallas kernel (one grid step == one image)
# ---------------------------------------------------------------------------
def _c3_kernel(x_ref, w12_ref, sb12_ref, wb1_ref, sb1_ref, wb2_ref, sb2_ref,
               wa_ref, wb_ref, sb3_ref, mask_ref, o_ref,
               *, c_hidden, n_bottleneck, wpad, shortcut):
    dtype = x_ref.dtype                       # MXU operand dtype (bf16 or f32)
    mask = mask_ref[...]                      # (1, P): 1 at valid (interior) pixels

    # --- cv1 + cv2 as a single matmul (concatenated weights) ---------------
    y = jnp.dot(w12_ref[...], x_ref[...], preferred_element_type=jnp.float32)
    y = y * sb12_ref[0] + sb12_ref[1]         # folded BatchNorm (eval mode)
    y = y * jax.nn.sigmoid(y)                 # SiLU
    m = y[:c_hidden, :]                       # running Bottleneck state (f32)
    y2 = y[c_hidden:, :]                      # cv2 branch, reused by cv3

    # --- Bottleneck chain, entirely in VMEM ---------------------------------
    for b in range(n_bottleneck):
        # 1x1 Conv + BN + SiLU; zero the padding ring so it acts as conv padding.
        h = jnp.dot(wb1_ref[b], m.astype(dtype),
                    preferred_element_type=jnp.float32)
        h = h * sb1_ref[b, 0] + sb1_ref[b, 1]
        h = h * jax.nn.sigmoid(h)
        h = (h * mask).astype(dtype)

        # 3x3 Conv as 9 static lane shifts + matmuls (no im2col, no HBM traffic).
        acc = None
        for kh in range(3):
            for kw in range(3):
                off = (kh - 1) * wpad + (kw - 1)
                tap = _shift_lanes(h, off)
                part = jnp.dot(wb2_ref[b, kh * 3 + kw], tap,
                               preferred_element_type=jnp.float32)
                acc = part if acc is None else acc + part

        z = acc * sb2_ref[b, 0] + sb2_ref[b, 1]
        z = z * jax.nn.sigmoid(z)
        if shortcut:
            z = z + m                          # residual, f32
        m = z * mask                           # keep the padding ring exactly zero

    # --- cv3 without materializing the channel concat -----------------------
    out = jnp.dot(wa_ref[...], m.astype(dtype), preferred_element_type=jnp.float32)
    out = out + jnp.dot(wb_ref[...], y2.astype(dtype),
                        preferred_element_type=jnp.float32)
    out = out * sb3_ref[0] + sb3_ref[1]
    out = out * jax.nn.sigmoid(out)
    o_ref[...] = out.astype(o_ref.dtype)


def _c3_pallas(x_t, params, n_img, p_img, wpad, mask, shortcut, dtype):
    c1 = x_t.shape[0]
    c_ = params["cv1"]["w"].shape[0]
    c2 = params["cv3"]["w"].shape[0]
    nb = len(params["m"])
    assert nb >= 1, "C3 needs at least one Bottleneck"

    # cv1/cv2 fused weight + folded BN
    w12 = jnp.concatenate([params["cv1"]["w"].reshape(c_, c1),
                           params["cv2"]["w"].reshape(c_, c1)], axis=0).astype(dtype)
    sb12 = jnp.concatenate([_fold_bn(params["cv1"]),
                            _fold_bn(params["cv2"])], axis=1)          # (2, 2c_, 1)
    # Bottleneck weights stacked over the chain
    wb1 = jnp.stack([bp["cv1"]["w"].reshape(c_, c_)
                     for bp in params["m"]]).astype(dtype)             # (nb, c_, c_)
    sb1 = jnp.stack([_fold_bn(bp["cv1"]) for bp in params["m"]])       # (nb, 2, c_, 1)
    wb2 = jnp.stack([jnp.transpose(bp["cv2"]["w"], (2, 3, 0, 1)).reshape(9, c_, c_)
                     for bp in params["m"]]).astype(dtype)             # (nb, 9, c_, c_)
    sb2 = jnp.stack([_fold_bn(bp["cv2"]) for bp in params["m"]])       # (nb, 2, c_, 1)
    # cv3 split (concat-free)
    w3 = params["cv3"]["w"].reshape(c2, 2 * c_)
    wa = w3[:, :c_].astype(dtype)
    wb = w3[:, c_:].astype(dtype)
    sb3 = _fold_bn(params["cv3"])                                      # (2, c2, 1)

    kernel = functools.partial(_c3_kernel, c_hidden=c_, n_bottleneck=nb,
                               wpad=wpad, shortcut=shortcut)
    return pl.pallas_call(
        kernel,
        grid=(n_img,),
        in_specs=[
            pl.BlockSpec((c1, p_img), lambda n: (0, n)),          # x (per image)
            pl.BlockSpec((2 * c_, c1), lambda n: (0, 0)),          # w12
            pl.BlockSpec((2, 2 * c_, 1), lambda n: (0, 0, 0)),     # sb12
            pl.BlockSpec((nb, c_, c_), lambda n: (0, 0, 0)),       # wb1
            pl.BlockSpec((nb, 2, c_, 1), lambda n: (0, 0, 0, 0)),  # sb1
            pl.BlockSpec((nb, 9, c_, c_), lambda n: (0, 0, 0, 0)), # wb2
            pl.BlockSpec((nb, 2, c_, 1), lambda n: (0, 0, 0, 0)),  # sb2
            pl.BlockSpec((c2, c_), lambda n: (0, 0)),              # cv3 (m half)
            pl.BlockSpec((c2, c_), lambda n: (0, 0)),              # cv3 (y2 half)
            pl.BlockSpec((2, c2, 1), lambda n: (0, 0, 0)),         # sb3
            pl.BlockSpec((1, p_img), lambda n: (0, 0)),            # interior mask
        ],
        out_specs=pl.BlockSpec((c2, p_img), lambda n: (0, n)),
        out_shape=jax.ShapeDtypeStruct((c2, n_img * p_img), jnp.float32),
        compiler_params=pltpu.CompilerParams(
            dimension_semantics=("parallel",)),
    )(x_t, w12, sb12, wb1, sb1, wb2, sb2, wa, wb, sb3, mask)


# ---------------------------------------------------------------------------
# layout glue (pure data movement in plain JAX, once at the boundaries)
# ---------------------------------------------------------------------------
def _to_padded_flat_t(x_nchw, p_img, dtype):
    """(N,C,H,W) -> (C, N*p_img): channels on sublanes; each image is a
    contiguous, zero-padded, flattened (H+2)*(W+2) lane range (padded to p_img)."""
    n, c, h, w = x_nchw.shape
    xp = jnp.pad(x_nchw, ((0, 0), (0, 0), (1, 1), (1, 1)))
    xf = xp.reshape(n, c, (h + 2) * (w + 2))
    xf = jnp.pad(xf, ((0, 0), (0, 0), (0, p_img - xf.shape[-1])))
    return jnp.transpose(xf, (1, 0, 2)).reshape(c, n * p_img).astype(dtype)


def _from_padded_flat_t(y_t, n, h, w, p_img):
    """(C, N*p_img) -> (N,C,H,W)."""
    c = y_t.shape[0]
    y = y_t.reshape(c, n, p_img)[:, :, :(h + 2) * (w + 2)]
    y = y.reshape(c, n, h + 2, w + 2)
    return jnp.transpose(y, (1, 0, 2, 3))[:, :, 1:h + 1, 1:w + 1]


def _interior_mask(h, w, p_img):
    m = jnp.pad(jnp.ones((h, w), jnp.float32), ((1, 1), (1, 1)))
    m = m.reshape(1, (h + 2) * (w + 2))
    return jnp.pad(m, ((0, 0), (0, p_img - m.shape[1])))


# ---------------------------------------------------------------------------
# C3 forward (NCHW in / NCHW out, matching the PyTorch module)
# ---------------------------------------------------------------------------
def c3_forward(params, x, shortcut=True, compute_dtype=jnp.bfloat16):
    n, _, h, w = x.shape
    p_img = _round_up((h + 2) * (w + 2), 128)        # lanes per image (128-mult.)
    x_t = _to_padded_flat_t(x, p_img, compute_dtype)
    mask = _interior_mask(h, w, p_img)
    out_t = _c3_pallas(x_t, params, n, p_img, w + 2, mask, shortcut, compute_dtype)
    return _from_padded_flat_t(out_t, n, h, w, p_img)


# ---------------------------------------------------------------------------
# parameters
# ---------------------------------------------------------------------------
def make_conv_params(key, cin, cout, k):
    kw, kg, kb, km, kv = jax.random.split(key, 5)
    fan_in = cin * k * k
    return {
        "w": jax.random.normal(kw, (cout, cin, k, k), jnp.float32)
             / jnp.sqrt(jnp.float32(fan_in)),
        "gamma": jax.random.uniform(kg, (cout,), jnp.float32, 0.5, 1.5),
        "beta": 0.1 * jax.random.normal(kb, (cout,), jnp.float32),
        "mean": 0.1 * jax.random.normal(km, (cout,), jnp.float32),
        "var": jax.random.uniform(kv, (cout,), jnp.float32, 0.5, 1.5),
    }


def make_c3_params(key, c1, c2, n=1, e=0.5):
    c_ = int(c2 * e)
    keys = jax.random.split(key, 3 + 2 * n)
    params = {
        "cv1": make_conv_params(keys[0], c1, c_, 1),
        "cv2": make_conv_params(keys[1], c1, c_, 1),
        "cv3": make_conv_params(keys[2], 2 * c_, c2, 1),
        "m": [],
    }
    for i in range(n):
        params["m"].append({
            "cv1": make_conv_params(keys[3 + 2 * i], c_, c_, 1),   # k=(1,1)
            "cv2": make_conv_params(keys[4 + 2 * i], c_, c_, 3),   # k=(3,3)
        })
    return params


# ---------------------------------------------------------------------------
# pure-JAX reference (NCHW) for correctness check of the Pallas path
# ---------------------------------------------------------------------------
def _ref_conv_bn_silu(x, p, pad):
    y = jax.lax.conv_general_dilated(
        x, p["w"], window_strides=(1, 1), padding=[(pad, pad), (pad, pad)],
        dimension_numbers=("NCHW", "OIHW", "NCHW"))
    scale = (p["gamma"] / jnp.sqrt(p["var"] + 1e-3)).reshape(1, -1, 1, 1)
    bias = p["beta"].reshape(1, -1, 1, 1) - p["mean"].reshape(1, -1, 1, 1) * scale
    y = y * scale + bias
    return y * jax.nn.sigmoid(y)


def c3_reference(params, x, shortcut=True):
    y1 = _ref_conv_bn_silu(x, params["cv1"], 0)
    y2 = _ref_conv_bn_silu(x, params["cv2"], 0)
    m = y1
    for bp in params["m"]:
        h = _ref_conv_bn_silu(m, bp["cv1"], 0)
        h = _ref_conv_bn_silu(h, bp["cv2"], 1)
        m = m + h if shortcut else h
    cat = jnp.concatenate([m, y2], axis=1)
    return _ref_conv_bn_silu(cat, params["cv3"], 0)


# ---------------------------------------------------------------------------
if __name__ == "__main__":
    key = jax.random.PRNGKey(0)
    kx, kp = jax.random.split(key)

    # small shapes: N=2, c1=c2=16 (c_=8), H=W=16, 2 bottlenecks, NCHW like torch
    N, H, W, C1, C2, NBOT = 2, 16, 16, 16, 16, 2
    x = jax.random.normal(kx, (N, C1, H, W), jnp.float32)
    params = make_c3_params(kp, C1, C2, n=NBOT, e=0.5)

    ref = jax.block_until_ready(c3_reference(params, x))

    # strict correctness path: f32 MXU operands everywhere
    out_f32 = jax.block_until_ready(
        jax.jit(functools.partial(c3_forward, params,
                                  compute_dtype=jnp.float32))(x))
    assert out_f32.shape == (N, C2, H, W), out_f32.shape
    assert jnp.allclose(out_f32, ref, atol=2e-3, rtol=2e-3), (
        float(jnp.max(jnp.abs(out_f32 - ref))))

    # performance path: bf16 MXU operands, f32 accumulate + f32 epilogue
    out_bf16 = jax.block_until_ready(
        jax.jit(functools.partial(c3_forward, params,
                                  compute_dtype=jnp.bfloat16))(x))
    assert out_bf16.shape == (N, C2, H, W), out_bf16.shape
    assert jnp.allclose(out_bf16, ref, atol=1e-1, rtol=1e-1), (
        float(jnp.max(jnp.abs(out_bf16 - ref))))

    print("KERNEL_OK")
</pallas_src>

<mosaic_0001>
module attributes {stable_mosaic.version = 11 : i64} {
  func.func @_c3_kernel(%arg0: i32, %arg1: memref<16x384xf32, #tpu.memory_space<vmem>>, %arg2: memref<16x16xf32, #tpu.memory_space<vmem>>, %arg3: memref<2x16x1xf32, #tpu.memory_space<vmem>>, %arg4: memref<2x8x8xf32, #tpu.memory_space<vmem>>, %arg5: memref<2x2x8x1xf32, #tpu.memory_space<vmem>>, %arg6: memref<2x9x8x8xf32, #tpu.memory_space<vmem>>, %arg7: memref<2x2x8x1xf32, #tpu.memory_space<vmem>>, %arg8: memref<16x8xf32, #tpu.memory_space<vmem>>, %arg9: memref<16x8xf32, #tpu.memory_space<vmem>>, %arg10: memref<2x16x1xf32, #tpu.memory_space<vmem>>, %arg11: memref<1x384xf32, #tpu.memory_space<vmem>>, %arg12: memref<16x384xf32, #tpu.memory_space<vmem>>) attributes {dimension_semantics = [#tpu.dimension_semantics<parallel>], iteration_bounds = array<i64: 2>, scalar_prefetch = 0 : i64, scratch_operands = 0 : i64, tpu.core_type = #tpu.core_type<tc>, window_params = [{transform_indices = @transform_0, window_bounds = array<i64: 16, 384>}, {pipeline_mode = #tpu.pipeline_mode<synchronous>, transform_indices = @transform_1, window_bounds = array<i64: 16, 16>}, {pipeline_mode = #tpu.pipeline_mode<synchronous>, transform_indices = @transform_2, window_bounds = array<i64: 2, 16, 1>}, {pipeline_mode = #tpu.pipeline_mode<synchronous>, transform_indices = @transform_3, window_bounds = array<i64: 2, 8, 8>}, {pipeline_mode = #tpu.pipeline_mode<synchronous>, transform_indices = @transform_4, window_bounds = array<i64: 2, 2, 8, 1>}, {pipeline_mode = #tpu.pipeline_mode<synchronous>, transform_indices = @transform_5, window_bounds = array<i64: 2, 9, 8, 8>}, {pipeline_mode = #tpu.pipeline_mode<synchronous>, transform_indices = @transform_6, window_bounds = array<i64: 2, 2, 8, 1>}, {pipeline_mode = #tpu.pipeline_mode<synchronous>, transform_indices = @transform_7, window_bounds = array<i64: 16, 8>}, {pipeline_mode = #tpu.pipeline_mode<synchronous>, transform_indices = @transform_8, window_bounds = array<i64: 16, 8>}, {pipeline_mode = #tpu.pipeline_mode<synchronous>, transform_indices = @transform_9, window_bounds = array<i64: 2, 16, 1>}, {pipeline_mode = #tpu.pipeline_mode<synchronous>, transform_indices = @transform_10, window_bounds = array<i64: 1, 384>}, {transform_indices = @transform_11, window_bounds = array<i64: 16, 384>}]} {
    %c0 = arith.constant 0 : index
    %c0_0 = arith.constant 0 : index
    %0 = vector.load %arg11[%c0, %c0_0] : memref<1x384xf32, #tpu.memory_space<vmem>>, vector<1x384xf32>
    %c0_1 = arith.constant 0 : index
    %c0_2 = arith.constant 0 : index
    %1 = vector.load %arg2[%c0_1, %c0_2] : memref<16x16xf32, #tpu.memory_space<vmem>>, vector<16x16xf32>
    %c0_3 = arith.constant 0 : index
    %c0_4 = arith.constant 0 : index
    %2 = vector.load %arg1[%c0_3, %c0_4] : memref<16x384xf32, #tpu.memory_space<vmem>>, vector<16x384xf32>
    %cst = arith.constant dense<0.000000e+00> : vector<16x384xf32>
    %3 = tpu.matmul %1, %2, %cst {dimension_numbers = #tpu.dot_dimension_numbers<[1], [0], [0], [1], [0, 0, 1, 1], [], []>} : vector<16x16xf32>, vector<16x384xf32>, vector<16x384xf32> -> vector<16x384xf32>
    %c0_5 = arith.constant 0 : index
    %c0_6 = arith.constant 0 : index
    %c0_7 = arith.constant 0 : index
    %4 = vector.load %arg3[%c0_5, %c0_6, %c0_7] : memref<2x16x1xf32, #tpu.memory_space<vmem>>, vector<1x16x1xf32>
    %5 = vector.shape_cast %4 : vector<1x16x1xf32> to vector<16x1xf32>
    %6 = vector.broadcast %5 : vector<16x1xf32> to vector<16x384xf32>
    %7 = arith.mulf %3, %6 : vector<16x384xf32>
    %c1 = arith.constant 1 : index
    %c0_8 = arith.constant 0 : index
    %c0_9 = arith.constant 0 : index
    %8 = vector.load %arg3[%c1, %c0_8, %c0_9] : memref<2x16x1xf32, #tpu.memory_space<vmem>>, vector<1x16x1xf32>
    %9 = vector.shape_cast %8 : vector<1x16x1xf32> to vector<16x1xf32>
    %10 = vector.broadcast %9 : vector<16x1xf32> to vector<16x384xf32>
    %11 = arith.addf %7, %10 : vector<16x384xf32>
    %12 = arith.negf %11 : vector<16x384xf32>
    %13 = math.exp %12 : vector<16x384xf32>
    %cst_10 = arith.constant 1.000000e+00 : f32
    %14 = vector.broadcast %cst_10 : f32 to vector<16x384xf32>
    %15 = arith.addf %14, %13 : vector<16x384xf32>
    %16 = arith.divf %14, %15 : vector<16x384xf32>
    %17 = arith.mulf %11, %16 : vector<16x384xf32>
    %18 = vector.extract_strided_slice %17 {offsets = [0, 0], sizes = [8, 384], strides = [1, 1]} : vector<16x384xf32> to vector<8x384xf32>
    %19 = vector.extract_strided_slice %17 {offsets = [8, 0], sizes = [8, 384], strides = [1, 1]} : vector<16x384xf32> to vector<8x384xf32>
    %c0_11 = arith.constant 0 : index
    %c0_12 = arith.constant 0 : index
    %c0_13 = arith.constant 0 : index
    %20 = vector.load %arg4[%c0_11, %c0_12, %c0_13] : memref<2x8x8xf32, #tpu.memory_space<vmem>>, vector<1x8x8xf32>
    %21 = vector.shape_cast %20 : vector<1x8x8xf32> to vector<8x8xf32>
    %cst_14 = arith.constant dense<0.000000e+00> : vector<8x384xf32>
    %22 = tpu.matmul %21, %18, %cst_14 {dimension_numbers = #tpu.dot_dimension_numbers<[1], [0], [0], [1], [0, 0, 1, 1], [], []>} : vector<8x8xf32>, vector<8x384xf32>, vector<8x384xf32> -> vector<8x384xf32>
    %c0_15 = arith.constant 0 : index
    %c0_16 = arith.constant 0 : index
    %c0_17 = arith.constant 0 : index
    %c0_18 = arith.constant 0 : index
    %23 = vector.load %arg5[%c0_15, %c0_16, %c0_17, %c0_18] : memref<2x2x8x1xf32, #tpu.memory_space<vmem>>, vector<1x1x8x1xf32>
    %24 = vector.shape_cast %23 : vector<1x1x8x1xf32> to vector<8x1xf32>
    %25 = vector.broadcast %24 : vector<8x1xf32> to vector<8x384xf32>
    %26 = arith.mulf %22, %25 : vector<8x384xf32>
    %c0_19 = arith.constant 0 : index
    %c1_20 = arith.constant 1 : index
    %c0_21 = arith.constant 0 : index
    %c0_22 = arith.constant 0 : index
    %27 = vector.load %arg5[%c0_19, %c1_20, %c0_21, %c0_22] : memref<2x2x8x1xf32, #tpu.memory_space<vmem>>, vector<1x1x8x1xf32>
    %28 = vector.shape_cast %27 : vector<1x1x8x1xf32> to vector<8x1xf32>
    %29 = vector.broadcast %28 : vector<8x1xf32> to vector<8x384xf32>
    %30 = arith.addf %26, %29 : vector<8x384xf32>
    %31 = arith.negf %30 : vector<8x384xf32>
    %32 = math.exp %31 : vector<8x384xf32>
    %cst_23 = arith.constant 1.000000e+00 : f32
    %33 = vector.broadcast %cst_23 : f32 to vector<8x384xf32>
    %34 = arith.addf %33, %32 : vector<8x384xf32>
    %35 = arith.divf %33, %34 : vector<8x384xf32>
    %36 = arith.mulf %30, %35 : vector<8x384xf32>
    %37 = vector.broadcast %0 : vector<1x384xf32> to vector<8x384xf32>
    %38 = arith.mulf %36, %37 : vector<8x384xf32>
    %cst_24 = arith.constant 0.000000e+00 : f32
    %39 = vector.broadcast %cst_24 : f32 to vector<8x19xf32>
    %40 = vector.extract_strided_slice %38 {offsets = [0, 0], sizes = [8, 365], strides = [1, 1]} : vector<8x384xf32> to vector<8x365xf32>
    %41 = tpu.concatenate %39, %40 in 1 : vector<8x19xf32>, vector<8x365xf32> -> vector<8x384xf32>
    %c0_25 = arith.constant 0 : index
    %c0_26 = arith.constant 0 : index
    %c0_27 = arith.constant 0 : index
    %c0_28 = arith.constant 0 : index
    %42 = vector.load %arg6[%c0_25, %c0_26, %c0_27, %c0_28] : memref<2x9x8x8xf32, #tpu.memory_space<vmem>>, vector<1x1x8x8xf32>
    %43 = vector.shape_cast %42 : vector<1x1x8x8xf32> to vector<8x8xf32>
    %cst_29 = arith.constant dense<0.000000e+00> : vector<8x384xf32>
    %44 = tpu.matmul %43, %41, %cst_29 {dimension_numbers = #tpu.dot_dimension_numbers<[1], [0], [0], [1], [0, 0, 1, 1], [], []>} : vector<8x8xf32>, vector<8x384xf32>, vector<8x384xf32> -> vector<8x384xf32>
    %cst_30 = arith.constant 0.000000e+00 : f32
    %45 = vector.broadcast %cst_30 : f32 to vector<8x18xf32>
    %46 = vector.extract_strided_slice %38 {offsets = [0, 0], sizes = [8, 366], strides = [1, 1]} : vector<8x384xf32> to vector<8x366xf32>
    %47 = tpu.concatenate %45, %46 in 1 : vector<8x18xf32>, vector<8x366xf32> -> vector<8x384xf32>
    %c0_31 = arith.constant 0 : index
    %c1_32 = arith.constant 1 : index
    %c0_33 = arith.constant 0 : index
    %c0_34 = arith.constant 0 : index
    %48 = vector.load %arg6[%c0_31, %c1_32, %c0_33, %c0_34] : memref<2x9x8x8xf32, #tpu.memory_space<vmem>>, vector<1x1x8x8xf32>
    %49 = vector.shape_cast %48 : vector<1x1x8x8xf32> to vector<8x8xf32>
    %cst_35 = arith.constant dense<0.000000e+00> : vector<8x384xf32>
    %50 = tpu.matmul %49, %47, %cst_35 {dimension_numbers = #tpu.dot_dimension_numbers<[1], [0], [0], [1], [0, 0, 1, 1], [], []>} : vector<8x8xf32>, vector<8x384xf32>, vector<8x384xf32> -> vector<8x384xf32>
    %51 = arith.addf %44, %50 : vector<8x384xf32>
    %cst_36 = arith.constant 0.000000e+00 : f32
    %52 = vector.broadcast %cst_36 : f32 to vector<8x17xf32>
    %53 = vector.extract_strided_slice %38 {offsets = [0, 0], sizes = [8, 367], strides = [1, 1]} : vector<8x384xf32> to vector<8x367xf32>
    %54 = tpu.concatenate %52, %53 in 1 : vector<8x17xf32>, vector<8x367xf32> -> vector<8x384xf32>
    %c0_37 = arith.constant 0 : index
    %c2 = arith.constant 2 : index
    %c0_38 = arith.constant 0 : index
    %c0_39 = arith.constant 0 : index
    %55 = vector.load %arg6[%c0_37, %c2, %c0_38, %c0_39] : memref<2x9x8x8xf32, #tpu.memory_space<vmem>>, vector<1x1x8x8xf32>
    %56 = vector.shape_cast %55 : vector<1x1x8x8xf32> to vector<8x8xf32>
    %cst_40 = arith.constant dense<0.000000e+00> : vector<8x384xf32>
    %57 = tpu.matmul %56, %54, %cst_40 {dimension_numbers = #tpu.dot_dimension_numbers<[1], [0], [0], [1], [0, 0, 1, 1], [], []>} : vector<8x8xf32>, vector<8x384xf32>, vector<8x384xf32> -> vector<8x384xf32>
    %58 = arith.addf %51, %57 : vector<8x384xf32>
    %cst_41 = arith.constant 0.000000e+00 : f32
    %59 = vector.broadcast %cst_41 : f32 to vector<8x1xf32>
    %60 = vector.extract_strided_slice %38 {offsets = [0, 0], sizes = [8, 383], strides = [1, 1]} : vector<8x384xf32> to vector<8x383xf32>
    %61 = tpu.concatenate %59, %60 in 1 : vector<8x1xf32>, vector<8x383xf32> -> vector<8x384xf32>
    %c0_42 = arith.constant 0 : index
    %c3 = arith.constant 3 : index
    %c0_43 = arith.constant 0 : index
    %c0_44 = arith.constant 0 : index
    %62 = vector.load %arg6[%c0_42, %c3, %c0_43, %c0_44] : memref<2x9x8x8xf32, #tpu.memory_space<vmem>>, vector<1x1x8x8xf32>
    %63 = vector.shape_cast %62 : vector<1x1x8x8xf32> to vector<8x8xf32>
    %cst_45 = arith.constant dense<0.000000e+00> : vector<8x384xf32>
    %64 = tpu.matmul %63, %61, %cst_45 {dimension_numbers = #tpu.dot_dimension_numbers<[1], [0], [0], [1], [0, 0, 1, 1], [], []>} : vector<8x8xf32>, vector<8x384xf32>, vector<8x384xf32> -> vector<8x384xf32>
    %65 = arith.addf %58, %64 : vector<8x384xf32>
    %c0_46 = arith.constant 0 : index
    %c4 = arith.constant 4 : index
    %c0_47 = arith.constant 0 : index
    %c0_48 = arith.constant 0 : index
    %66 = vector.load %arg6[%c0_46, %c4, %c0_47, %c0_48] : memref<2x9x8x8xf32, #tpu.memory_space<vmem>>, vector<1x1x8x8xf32>
    %67 = vector.shape_cast %66 : vector<1x1x8x8xf32> to vector<8x8xf32>
    %cst_49 = arith.constant dense<0.000000e+00> : vector<8x384xf32>
    %68 = tpu.matmul %67, %38, %cst_49 {dimension_numbers = #tpu.dot_dimension_numbers<[1], [0], [0], [1], [0, 0, 1, 1], [], []>} : vector<8x8xf32>, vector<8x384xf32>, vector<8x384xf32> -> vector<8x384xf32>
    %69 = arith.addf %65, %68 : vector<8x384xf32>
    %70 = vector.extract_strided_slice %38 {offsets = [0, 1], sizes = [8, 383], strides = [1, 1]} : vector<8x384xf32> to vector<8x383xf32>
    %cst_50 = arith.constant 0.000000e+00 : f32
    %71 = vector.broadcast %cst_50 : f32 to vector<8x1xf32>
    %72 = tpu.concatenate %70, %71 in 1 : vector<8x383xf32>, vector<8x1xf32> -> vector<8x384xf32>
    %c0_51 = arith.constant 0 : index
    %c5 = arith.constant 5 : index
    %c0_52 = arith.constant 0 : index
    %c0_53 = arith.constant 0 : index
    %73 = vector.load %arg6[%c0_51, %c5, %c0_52, %c0_53] : memref<2x9x8x8xf32, #tpu.memory_space<vmem>>, vector<1x1x8x8xf32>
    %74 = vector.shape_cast %73 : vector<1x1x8x8xf32> to vector<8x8xf32>
    %cst_54 = arith.constant dense<0.000000e+00> : vector<8x384xf32>
    %75 = tpu.matmul %74, %72, %cst_54 {dimension_numbers = #tpu.dot_dimension_numbers<[1], [0], [0], [1], [0, 0, 1, 1], [], []>} : vector<8x8xf32>, vector<8x384xf32>, vector<8x384xf32> -> vector<8x384xf32>
    %76 = arith.addf %69, %75 : vector<8x384xf32>
    %77 = vector.extract_strided_slice %38 {offsets = [0, 17], sizes = [8, 367], strides = [1, 1]} : vector<8x384xf32> to vector<8x367xf32>
    %cst_55 = arith.constant 0.000000e+00 : f32
    %78 = vector.broadcast %cst_55 : f32 to vector<8x17xf32>
    %79 = tpu.concatenate %77, %78 in 1 : vector<8x367xf32>, vector<8x17xf32> -> vector<8x384xf32>
    %c0_56 = arith.constant 0 : index
    %c6 = arith.constant 6 : index
    %c0_57 = arith.constant 0 : index
    %c0_58 = arith.constant 0 : index
    %80 = vector.load %arg6[%c0_56, %c6, %c0_57, %c0_58] : memref<2x9x8x8xf32, #tpu.memory_space<vmem>>, vector<1x1x8x8xf32>
    %81 = vector.shape_cast %80 : vector<1x1x8x8xf32> to vector<8x8xf32>
    %cst_59 = arith.constant dense<0.000000e+00> : vector<8x384xf32>
    %82 = tpu.matmul %81, %79, %cst_59 {dimension_numbers = #tpu.dot_dimension_numbers<[1], [0], [0], [1], [0, 0, 1, 1], [], []>} : vector<8x8xf32>, vector<8x384xf32>, vector<8x384xf32> -> vector<8x384xf32>
    %83 = arith.addf %76, %82 : vector<8x384xf32>
    %84 = vector.extract_strided_slice %38 {offsets = [0, 18], sizes = [8, 366], strides = [1, 1]} : vector<8x384xf32> to vector<8x366xf32>
    %cst_60 = arith.constant 0.000000e+00 : f32
    %85 = vector.broadcast %cst_60 : f32 to vector<8x18xf32>
    %86 = tpu.concatenate %84, %85 in 1 : vector<8x366xf32>, vector<8x18xf32> -> vector<8x384xf32>
    %c0_61 = arith.constant 0 : index
    %c7 = arith.constant 7 : index
    %c0_62 = arith.constant 0 : index
    %c0_63 = arith.constant 0 : index
    %87 = vector.load %arg6[%c0_61, %c7, %c0_62, %c0_63] : memref<2x9x8x8xf32, #tpu.memory_space<vmem>>, vector<1x1x8x8xf32>
    %88 = vector.shape_cast %87 : vector<1x1x8x8xf32> to vector<8x8xf32>
    %cst_64 = arith.constant dense<0.000000e+00> : vector<8x384xf32>
    %89 = tpu.matmul %88, %86, %cst_64 {dimension_numbers = #tpu.dot_dimension_numbers<[1], [0], [0], [1], [0, 0, 1, 1], [], []>} : vector<8x8xf32>, vector<8x384xf32>, vector<8x384xf32> -> vector<8x384xf32>
    %90 = arith.addf %83, %89 : vector<8x384xf32>
    %91 = vector.extract_strided_slice %38 {offsets = [0, 19], sizes = [8, 365], strides = [1, 1]} : vector<8x384xf32> to vector<8x365xf32>
    %cst_65 = arith.constant 0.000000e+00 : f32
    %92 = vector.broadcast %cst_65 : f32 to vector<8x19xf32>
    %93 = tpu.concatenate %91, %92 in 1 : vector<8x365xf32>, vector<8x19xf32> -> vector<8x384xf32>
    %c0_66 = arith.constant 0 : index
    %c8 = arith.constant 8 : index
    %c0_67 = arith.constant 0 : index
    %c0_68 = arith.constant 0 : index
    %94 = vector.load %arg6[%c0_66, %c8, %c0_67, %c0_68] : memref<2x9x8x8xf32, #tpu.memory_space<vmem>>, vector<1x1x8x8xf32>
    %95 = vector.shape_cast %94 : vector<1x1x8x8xf32> to vector<8x8xf32>
    %cst_69 = arith.constant dense<0.000000e+00> : vector<8x384xf32>
    %96 = tpu.matmul %95, %93, %cst_69 {dimension_numbers = #tpu.dot_dimension_numbers<[1], [0], [0], [1], [0, 0, 1, 1], [], []>} : vector<8x8xf32>, vector<8x384xf32>, vector<8x384xf32> -> vector<8x384xf32>
    %97 = arith.addf %90, %96 : vector<8x384xf32>
    %c0_70 = arith.constant 0 : index
    %c0_71 = arith.constant 0 : index
    %c0_72 = arith.constant 0 : index
    %c0_73 = arith.constant 0 : index
    %98 = vector.load %arg7[%c0_70, %c0_71, %c0_72, %c0_73] : memref<2x2x8x1xf32, #tpu.memory_space<vmem>>, vector<1x1x8x1xf32>
    %99 = vector.shape_cast %98 : vector<1x1x8x1xf32> to vector<8x1xf32>
    %100 = vector.broadcast %99 : vector<8x1xf32> to vector<8x384xf32>
    %101 = arith.mulf %97, %100 : vector<8x384xf32>
    %c0_74 = arith.constant 0 : index
    %c1_75 = arith.constant 1 : index
    %c0_76 = arith.constant 0 : index
    %c0_77 = arith.constant 0 : index
    %102 = vector.load %arg7[%c0_74, %c1_75, %c0_76, %c0_77] : memref<2x2x8x1xf32, #tpu.memory_space<vmem>>, vector<1x1x8x1xf32>
    %103 = vector.shape_cast %102 : vector<1x1x8x1xf32> to vector<8x1xf32>
    %104 = vector.broadcast %103 : vector<8x1xf32> to vector<8x384xf32>
    %105 = arith.addf %101, %104 : vector<8x384xf32>
    %106 = arith.negf %105 : vector<8x384xf32>
    %107 = math.exp %106 : vector<8x384xf32>
    %cst_78 = arith.constant 1.000000e+00 : f32
    %108 = vector.broadcast %cst_78 : f32 to vector<8x384xf32>
    %109 = arith.addf %108, %107 : vector<8x384xf32>
    %110 = arith.divf %108, %109 : vector<8x384xf32>
    %111 = arith.mulf %105, %110 : vector<8x384xf32>
    %112 = arith.addf %111, %18 : vector<8x384xf32>
    %113 = vector.broadcast %0 : vector<1x384xf32> to vector<8x384xf32>
    %114 = arith.mulf %112, %113 : vector<8x384xf32>
    %c1_79 = arith.constant 1 : index
    %c0_80 = arith.constant 0 : index
    %c0_81 = arith.constant 0 : index
    %115 = vector.load %arg4[%c1_79, %c0_80, %c0_81] : memref<2x8x8xf32, #tpu.memory_space<vmem>>, vector<1x8x8xf32>
    %116 = vector.shape_cast %115 : vector<1x8x8xf32> to vector<8x8xf32>
    %cst_82 = arith.constant dense<0.000000e+00> : vector<8x384xf32>
    %117 = tpu.matmul %116, %114, %cst_82 {dimension_numbers = #tpu.dot_dimension_numbers<[1], [0], [0], [1], [0, 0, 1, 1], [], []>} : vector<8x8xf32>, vector<8x384xf32>, vector<8x384xf32> -> vector<8x384xf32>
    %c1_83 = arith.constant 1 : index
    %c0_84 = arith.constant 0 : index
    %c0_85 = arith.constant 0 : index
    %c0_86 = arith.constant 0 : index
    %118 = vector.load %arg5[%c1_83, %c0_84, %c0_85, %c0_86] : memref<2x2x8x1xf32, #tpu.memory_space<vmem>>, vector<1x1x8x1xf32>
    %119 = vector.shape_cast %118 : vector<1x1x8x1xf32> to vector<8x1xf32>
    %120 = vector.broadcast %119 : vector<8x1xf32> to vector<8x384xf32>
    %121 = arith.mulf %117, %120 : vector<8x384xf32>
    %c1_87 = arith.constant 1 : index
    %c1_88 = arith.constant 1 : index
    %c0_89 = arith.constant 0 : index
    %c0_90 = arith.constant 0 : index
    %122 = vector.load %arg5[%c1_87, %c1_88, %c0_89, %c0_90] : memref<2x2x8x1xf32, #tpu.memory_space<vmem>>, vector<1x1x8x1xf32>
    %123 = vector.shape_cast %122 : vector<1x1x8x1xf32> to vector<8x1xf32>
    %124 = vector.broadcast %123 : vector<8x1xf32> to vector<8x384xf32>
    %125 = arith.addf %121, %124 : vector<8x384xf32>
    %126 = arith.negf %125 : vector<8x384xf32>
    %127 = math.exp %126 : vector<8x384xf32>
    %cst_91 = arith.constant 1.000000e+00 : f32
    %128 = vector.broadcast %cst_91 : f32 to vector<8x384xf32>
    %129 = arith.addf %128, %127 : vector<8x384xf32>
    %130 = arith.divf %128, %129 : vector<8x384xf32>
    %131 = arith.mulf %125, %130 : vector<8x384xf32>
    %132 = vector.broadcast %0 : vector<1x384xf32> to vector<8x384xf32>
    %133 = arith.mulf %131, %132 : vector<8x384xf32>
    %cst_92 = arith.constant 0.000000e+00 : f32
    %134 = vector.broadcast %cst_92 : f32 to vector<8x19xf32>
    %135 = vector.extract_strided_slice %133 {offsets = [0, 0], sizes = [8, 365], strides = [1, 1]} : vector<8x384xf32> to vector<8x365xf32>
    %136 = tpu.concatenate %134, %135 in 1 : vector<8x19xf32>, vector<8x365xf32> -> vector<8x384xf32>
    %c1_93 = arith.constant 1 : index
    %c0_94 = arith.constant 0 : index
    %c0_95 = arith.constant 0 : index
    %c0_96 = arith.constant 0 : index
    %137 = vector.load %arg6[%c1_93, %c0_94, %c0_95, %c0_96] : memref<2x9x8x8xf32, #tpu.memory_space<vmem>>, vector<1x1x8x8xf32>
    %138 = vector.shape_cast %137 : vector<1x1x8x8xf32> to vector<8x8xf32>
    %cst_97 = arith.constant dense<0.000000e+00> : vector<8x384xf32>
    %139 = tpu.matmul %138, %136, %cst_97 {dimension_numbers = #tpu.dot_dimension_numbers<[1], [0], [0], [1], [0, 0, 1, 1], [], []>} : vector<8x8xf32>, vector<8x384xf32>, vector<8x384xf32> -> vector<8x384xf32>
    %cst_98 = arith.constant 0.000000e+00 : f32
    %140 = vector.broadcast %cst_98 : f32 to vector<8x18xf32>
    %141 = vector.extract_strided_slice %133 {offsets = [0, 0], sizes = [8, 366], strides = [1, 1]} : vector<8x384xf32> to vector<8x366xf32>
    %142 = tpu.concatenate %140, %141 in 1 : vector<8x18xf32>, vector<8x366xf32> -> vector<8x384xf32>
    %c1_99 = arith.constant 1 : index
    %c1_100 = arith.constant 1 : index
    %c0_101 = arith.constant 0 : index
    %c0_102 = arith.constant 0 : index
    %143 = vector.load %arg6[%c1_99, %c1_100, %c0_101, %c0_102] : memref<2x9x8x8xf32, #tpu.memory_space<vmem>>, vector<1x1x8x8xf32>
    %144 = vector.shape_cast %143 : vector<1x1x8x8xf32> to vector<8x8xf32>
    %cst_103 = arith.constant dense<0.000000e+00> : vector<8x384xf32>
    %145 = tpu.matmul %144, %142, %cst_103 {dimension_numbers = #tpu.dot_dimension_numbers<[1], [0], [0], [1], [0, 0, 1, 1], [], []>} : vector<8x8xf32>, vector<8x384xf32>, vector<8x384xf32> -> vector<8x384xf32>
    %146 = arith.addf %139, %145 : vector<8x384xf32>
    %cst_104 = arith.constant 0.000000e+00 : f32
    %147 = vector.broadcast %cst_104 : f32 to vector<8x17xf32>
    %148 = vector.extract_strided_slice %133 {offsets = [0, 0], sizes = [8, 367], strides = [1, 1]} : vector<8x384xf32> to vector<8x367xf32>
    %149 = tpu.concatenate %147, %148 in 1 : vector<8x17xf32>, vector<8x367xf32> -> vector<8x384xf32>
    %c1_105 = arith.constant 1 : index
    %c2_106 = arith.constant 2 : index
    %c0_107 = arith.constant 0 : index
    %c0_108 = arith.constant 0 : index
    %150 = vector.load %arg6[%c1_105, %c2_106, %c0_107, %c0_108] : memref<2x9x8x8xf32, #tpu.memory_space<vmem>>, vector<1x1x8x8xf32>
    %151 = vector.shape_cast %150 : vector<1x1x8x8xf32> to vector<8x8xf32>
    %cst_109 = arith.constant dense<0.000000e+00> : vector<8x384xf32>
    %152 = tpu.matmul %151, %149, %cst_109 {dimension_numbers = #tpu.dot_dimension_numbers<[1], [0], [0], [1], [0, 0, 1, 1], [], []>} : vector<8x8xf32>, vector<8x384xf32>, vector<8x384xf32> -> vector<8x384xf32>
    %153 = arith.addf %146, %152 : vector<8x384xf32>
    %cst_110 = arith.constant 0.000000e+00 : f32
    %154 = vector.broadcast %cst_110 : f32 to vector<8x1xf32>
    %155 = vector.extract_strided_slice %133 {offsets = [0, 0], sizes = [8, 383], strides = [1, 1]} : vector<8x384xf32> to vector<8x383xf32>
    %156 = tpu.concatenate %154, %155 in 1 : vector<8x1xf32>, vector<8x383xf32> -> vector<8x384xf32>
    %c1_111 = arith.constant 1 : index
    %c3_112 = arith.constant 3 : index
    %c0_113 = arith.constant 0 : index
    %c0_114 = arith.constant 0 : index
    %157 = vector.load %arg6[%c1_111, %c3_112, %c0_113, %c0_114] : memref<2x9x8x8xf32, #tpu.memory_space<vmem>>, vector<1x1x8x8xf32>
    %158 = vector.shape_cast %157 : vector<1x1x8x8xf32> to vector<8x8xf32>
    %cst_115 = arith.constant dense<0.000000e+00> : vector<8x384xf32>
    %159 = tpu.matmul %158, %156, %cst_115 {dimension_numbers = #tpu.dot_dimension_numbers<[1], [0], [0], [1], [0, 0, 1, 1], [], []>} : vector<8x8xf32>, vector<8x384xf32>, vector<8x384xf32> -> vector<8x384xf32>
    %160 = arith.addf %153, %159 : vector<8x384xf32>
    %c1_116 = arith.constant 1 : index
    %c4_117 = arith.constant 4 : index
    %c0_118 = arith.constant 0 : index
    %c0_119 = arith.constant 0 : index
    %161 = vector.load %arg6[%c1_116, %c4_117, %c0_118, %c0_119] : memref<2x9x8x8xf32, #tpu.memory_space<vmem>>, vector<1x1x8x8xf32>
    %162 = vector.shape_cast %161 : vector<1x1x8x8xf32> to vector<8x8xf32>
    %cst_120 = arith.constant dense<0.000000e+00> : vector<8x384xf32>
    %163 = tpu.matmul %162, %133, %cst_120 {dimension_numbers = #tpu.dot_dimension_numbers<[1], [0], [0], [1], [0, 0, 1, 1], [], []>} : vector<8x8xf32>, vector<8x384xf32>, vector<8x384xf32> -> vector<8x384xf32>
    %164 = arith.addf %160, %163 : vector<8x384xf32>
    %165 = vector.extract_strided_slice %133 {offsets = [0, 1], sizes = [8, 383], strides = [1, 1]} : vector<8x384xf32> to vector<8x383xf32>
    %cst_121 = arith.constant 0.000000e+00 : f32
    %166 = vector.broadcast %cst_121 : f32 to vector<8x1xf32>
    %167 = tpu.concatenate %165, %166 in 1 : vector<8x383xf32>, vector<8x1xf32> -> vector<8x384xf32>
    %c1_122 = arith.constant 1 : index
    %c5_123 = arith.constant 5 : index
    %c0_124 = arith.constant 0 : index
    %c0_125 = arith.constant 0 : index
    %168 = vector.load %arg6[%c1_122, %c5_123, %c0_124, %c0_125] : memref<2x9x8x8xf32, #tpu.memory_space<vmem>>, vector<1x1x8x8xf32>
    %169 = vector.shape_cast %168 : vector<1x1x8x8xf32> to vector<8x8xf32>
    %cst_126 = arith.constant dense<0.000000e+00> : vector<8x384xf32>
    %170 = tpu.matmul %169, %167, %cst_126 {dimension_numbers = #tpu.dot_dimension_numbers<[1], [0], [0], [1], [0, 0, 1, 1], [], []>} : vector<8x8xf32>, vector<8x384xf32>, vector<8x384xf32> -> vector<8x384xf32>
    %171 = arith.addf %164, %170 : vector<8x384xf32>
    %172 = vector.extract_strided_slice %133 {offsets = [0, 17], sizes = [8, 367], strides = [1, 1]} : vector<8x384xf32> to vector<8x367xf32>
    %cst_127 = arith.constant 0.000000e+00 : f32
    %173 = vector.broadcast %cst_127 : f32 to vector<8x17xf32>
    %174 = tpu.concatenate %172, %173 in 1 : vector<8x367xf32>, vector<8x17xf32> -> vector<8x384xf32>
    %c1_128 = arith.constant 1 : index
    %c6_129 = arith.constant 6 : index
    %c0_130 = arith.constant 0 : index
    %c0_131 = arith.constant 0 : index
    %175 = vector.load %arg6[%c1_128, %c6_129, %c0_130, %c0_131] : memref<2x9x8x8xf32, #tpu.memory_space<vmem>>, vector<1x1x8x8xf32>
    %176 = vector.shape_cast %175 : vector<1x1x8x8xf32> to vector<8x8xf32>
    %cst_132 = arith.constant dense<0.000000e+00> : vector<8x384xf32>
    %177 = tpu.matmul %176, %174, %cst_132 {dimension_numbers = #tpu.dot_dimension_numbers<[1], [0], [0], [1], [0, 0, 1, 1], [], []>} : vector<8x8xf32>, vector<8x384xf32>, vector<8x384xf32> -> vector<8x384xf32>
    %178 = arith.addf %171, %177 : vector<8x384xf32>
    %179 = vector.extract_strided_slice %133 {offsets = [0, 18], sizes = [8, 366], strides = [1, 1]} : vector<8x384xf32> to vector<8x366xf32>
    %cst_133 = arith.constant 0.000000e+00 : f32
    %180 = vector.broadcast %cst_133 : f32 to vector<8x18xf32>
    %181 = tpu.concatenate %179, %180 in 1 : vector<8x366xf32>, vector<8x18xf32> -> vector<8x384xf32>
    %c1_134 = arith.constant 1 : index
    %c7_135 = arith.constant 7 : index
    %c0_136 = arith.constant 0 : index
    %c0_137 = arith.constant 0 : index
    %182 = vector.load %arg6[%c1_134, %c7_135, %c0_136, %c0_137] : memref<2x9x8x8xf32, #tpu.memory_space<vmem>>, vector<1x1x8x8xf32>
    %183 = vector.shape_cast %182 : vector<1x1x8x8xf32> to vector<8x8xf32>
    %cst_138 = arith.constant dense<0.000000e+00> : vector<8x384xf32>
    %184 = tpu.matmul %183, %181, %cst_138 {dimension_numbers = #tpu.dot_dimension_numbers<[1], [0], [0], [1], [0, 0, 1, 1], [], []>} : vector<8x8xf32>, vector<8x384xf32>, vector<8x384xf32> -> vector<8x384xf32>
    %185 = arith.addf %178, %184 : vector<8x384xf32>
    %186 = vector.extract_strided_slice %133 {offsets = [0, 19], sizes = [8, 365], strides = [1, 1]} : vector<8x384xf32> to vector<8x365xf32>
    %cst_139 = arith.constant 0.000000e+00 : f32
    %187 = vector.broadcast %cst_139 : f32 to vector<8x19xf32>
    %188 = tpu.concatenate %186, %187 in 1 : vector<8x365xf32>, vector<8x19xf32> -> vector<8x384xf32>
    %c1_140 = arith.constant 1 : index
    %c8_141 = arith.constant 8 : index
    %c0_142 = arith.constant 0 : index
    %c0_143 = arith.constant 0 : index
    %189 = vector.load %arg6[%c1_140, %c8_141, %c0_142, %c0_143] : memref<2x9x8x8xf32, #tpu.memory_space<vmem>>, vector<1x1x8x8xf32>
    %190 = vector.shape_cast %189 : vector<1x1x8x8xf32> to vector<8x8xf32>
    %cst_144 = arith.constant dense<0.000000e+00> : vector<8x384xf32>
    %191 = tpu.matmul %190, %188, %cst_144 {dimension_numbers = #tpu.dot_dimension_numbers<[1], [0], [0], [1], [0, 0, 1, 1], [], []>} : vector<8x8xf32>, vector<8x384xf32>, vector<8x384xf32> -> vector<8x384xf32>
    %192 = arith.addf %185, %191 : vector<8x384xf32>
    %c1_145 = arith.constant 1 : index
    %c0_146 = arith.constant 0 : index
    %c0_147 = arith.constant 0 : index
    %c0_148 = arith.constant 0 : index
    %193 = vector.load %arg7[%c1_145, %c0_146, %c0_147, %c0_148] : memref<2x2x8x1xf32, #tpu.memory_space<vmem>>, vector<1x1x8x1xf32>
    %194 = vector.shape_cast %193 : vector<1x1x8x1xf32> to vector<8x1xf32>
    %195 = vector.broadcast %194 : vector<8x1xf32> to vector<8x384xf32>
    %196 = arith.mulf %192, %195 : vector<8x384xf32>
    %c1_149 = arith.constant 1 : index
    %c1_150 = arith.constant 1 : index
    %c0_151 = arith.constant 0 : index
    %c0_152 = arith.constant 0 : index
    %197 = vector.load %arg7[%c1_149, %c1_150, %c0_151, %c0_152] : memref<2x2x8x1xf32, #tpu.memory_space<vmem>>, vector<1x1x8x1xf32>
    %198 = vector.shape_cast %197 : vector<1x1x8x1xf32> to vector<8x1xf32>
    %199 = vector.broadcast %198 : vector<8x1xf32> to vector<8x384xf32>
    %200 = arith.addf %196, %199 : vector<8x384xf32>
    %201 = arith.negf %200 : vector<8x384xf32>
    %202 = math.exp %201 : vector<8x384xf32>
    %cst_153 = arith.constant 1.000000e+00 : f32
    %203 = vector.broadcast %cst_153 : f32 to vector<8x384xf32>
    %204 = arith.addf %203, %202 : vector<8x384xf32>
    %205 = arith.divf %203, %204 : vector<8x384xf32>
    %206 = arith.mulf %200, %205 : vector<8x384xf32>
    %207 = arith.addf %206, %114 : vector<8x384xf32>
    %208 = vector.broadcast %0 : vector<1x384xf32> to vector<8x384xf32>
    %209 = arith.mulf %207, %208 : vector<8x384xf32>
    %c0_154 = arith.constant 0 : index
    %c0_155 = arith.constant 0 : index
    %210 = vector.load %arg8[%c0_154, %c0_155] : memref<16x8xf32, #tpu.memory_space<vmem>>, vector<16x8xf32>
    %cst_156 = arith.constant dense<0.000000e+00> : vector<16x384xf32>
    %211 = tpu.matmul %210, %209, %cst_156 {dimension_numbers = #tpu.dot_dimension_numbers<[1], [0], [0], [1], [0, 0, 1, 1], [], []>} : vector<16x8xf32>, vector<8x384xf32>, vector<16x384xf32> -> vector<16x384xf32>
    %c0_157 = arith.constant 0 : index
    %c0_158 = arith.constant 0 : index
    %212 = vector.load %arg9[%c0_157, %c0_158] : memref<16x8xf32, #tpu.memory_space<vmem>>, vector<16x8xf32>
    %cst_159 = arith.constant dense<0.000000e+00> : vector<16x384xf32>
    %213 = tpu.matmul %212, %19, %cst_159 {dimension_numbers = #tpu.dot_dimension_numbers<[1], [0], [0], [1], [0, 0, 1, 1], [], []>} : vector<16x8xf32>, vector<8x384xf32>, vector<16x384xf32> -> vector<16x384xf32>
    %214 = arith.addf %211, %213 : vector<16x384xf32>
    %c0_160 = arith.constant 0 : index
    %c0_161 = arith.constant 0 : index
    %c0_162 = arith.constant 0 : index
    %215 = vector.load %arg10[%c0_160, %c0_161, %c0_162] : memref<2x16x1xf32, #tpu.memory_space<vmem>>, vector<1x16x1xf32>
    %216 = vector.shape_cast %215 : vector<1x16x1xf32> to vector<16x1xf32>
    %217 = vector.broadcast %216 : vector<16x1xf32> to vector<16x384xf32>
    %218 = arith.mulf %214, %217 : vector<16x384xf32>
    %c1_163 = arith.constant 1 : index
    %c0_164 = arith.constant 0 : index
    %c0_165 = arith.constant 0 : index
    %219 = vector.load %arg10[%c1_163, %c0_164, %c0_165] : memref<2x16x1xf32, #tpu.memory_space<vmem>>, vector<1x16x1xf32>
    %220 = vector.shape_cast %219 : vector<1x16x1xf32> to vector<16x1xf32>
    %221 = vector.broadcast %220 : vector<16x1xf32> to vector<16x384xf32>
    %222 = arith.addf %218, %221 : vector<16x384xf32>
    %223 = arith.negf %222 : vector<16x384xf32>
    %224 = math.exp %223 : vector<16x384xf32>
    %cst_166 = arith.constant 1.000000e+00 : f32
    %225 = vector.broadcast %cst_166 : f32 to vector<16x384xf32>
    %226 = arith.addf %225, %224 : vector<16x384xf32>
    %227 = arith.divf %225, %226 : vector<16x384xf32>
    %228 = arith.mulf %222, %227 : vector<16x384xf32>
    %c0_167 = arith.constant 0 : index
    %c0_168 = arith.constant 0 : index
    %229 = vector.load %arg12[%c0_167, %c0_168] : memref<16x384xf32, #tpu.memory_space<vmem>>, vector<16x384xf32>
    tpu.vector_store %arg12[%c0_167, %c0_168], %228 {strides = array<i32>} : memref<16x384xf32, #tpu.memory_space<vmem>>, vector<16x384xf32>,
    return
  }
  func.func @transform_0(%arg0: i32) -> (i32, i32) {
    %c0_i32 = arith.constant 0 : i32
    %c0_i32_0 = arith.constant 0 : i32
    return %c0_i32, %arg0 : i32, i32
  }
  func.func @transform_1(%arg0: i32) -> (i32, i32) {
    %c0_i32 = arith.constant 0 : i32
    %c0_i32_0 = arith.constant 0 : i32
    %c0_i32_1 = arith.constant 0 : i32
    return %c0_i32, %c0_i32_0 : i32, i32
  }
  func.func @transform_2(%arg0: i32) -> (i32, i32, i32) {
    %c0_i32 = arith.constant 0 : i32
    %c0_i32_0 = arith.constant 0 : i32
    %c0_i32_1 = arith.constant 0 : i32
    %c0_i32_2 = arith.constant 0 : i32
    return %c0_i32, %c0_i32_0, %c0_i32_1 : i32, i32, i32
  }
  func.func @transform_3(%arg0: i32) -> (i32, i32, i32) {
    %c0_i32 = arith.constant 0 : i32
    %c0_i32_0 = arith.constant 0 : i32
    %c0_i32_1 = arith.constant 0 : i32
    %c0_i32_2 = arith.constant 0 : i32
    return %c0_i32, %c0_i32_0, %c0_i32_1 : i32, i32, i32
  }
  func.func @transform_4(%arg0: i32) -> (i32, i32, i32, i32) {
    %c0_i32 = arith.constant 0 : i32
    %c0_i32_0 = arith.constant 0 : i32
    %c0_i32_1 = arith.constant 0 : i32
    %c0_i32_2 = arith.constant 0 : i32
    %c0_i32_3 = arith.constant 0 : i32
    return %c0_i32, %c0_i32_0, %c0_i32_1, %c0_i32_2 : i32, i32, i32, i32
  }
  func.func @transform_5(%arg0: i32) -> (i32, i32, i32, i32) {
    %c0_i32 = arith.constant 0 : i32
    %c0_i32_0 = arith.constant 0 : i32
    %c0_i32_1 = arith.constant 0 : i32
    %c0_i32_2 = arith.constant 0 : i32
    %c0_i32_3 = arith.constant 0 : i32
    return %c0_i32, %c0_i32_0, %c0_i32_1, %c0_i32_2 : i32, i32, i32, i32
  }
  func.func @transform_6(%arg0: i32) -> (i32, i32, i32, i32) {
    %c0_i32 = arith.constant 0 : i32
    %c0_i32_0 = arith.constant 0 : i32
    %c0_i32_1 = arith.constant 0 : i32
    %c0_i32_2 = arith.constant 0 : i32
    %c0_i32_3 = arith.constant 0 : i32
    return %c0_i32, %c0_i32_0, %c0_i32_1, %c0_i32_2 : i32, i32, i32, i32
  }
  func.func @transform_7(%arg0: i32) -> (i32, i32) {
    %c0_i32 = arith.constant 0 : i32
    %c0_i32_0 = arith.constant 0 : i32
    %c0_i32_1 = arith.constant 0 : i32
    return %c0_i32, %c0_i32_0 : i32, i32
  }
  func.func @transform_8(%arg0: i32) -> (i32, i32) {
    %c0_i32 = arith.constant 0 : i32
    %c0_i32_0 = arith.constant 0 : i32
    %c0_i32_1 = arith.constant 0 : i32
    return %c0_i32, %c0_i32_0 : i32, i32
  }
  func.func @transform_9(%arg0: i32) -> (i32, i32, i32) {
    %c0_i32 = arith.constant 0 : i32
    %c0_i32_0 = arith.constant 0 : i32
    %c0_i32_1 = arith.constant 0 : i32
    %c0_i32_2 = arith.constant 0 : i32
    return %c0_i32, %c0_i32_0, %c0_i32_1 : i32, i32, i32
  }
  func.func @transform_10(%arg0: i32) -> (i32, i32) {
    %c0_i32 = arith.constant 0 : i32
    %c0_i32_0 = arith.constant 0 : i32
    %c0_i32_1 = arith.constant 0 : i32
    return %c0_i32, %c0_i32_0 : i32, i32
  }
  func.func @transform_11(%arg0: i32) -> (i32, i32) {
    %c0_i32 = arith.constant 0 : i32
    %c0_i32_0 = arith.constant 0 : i32
    return %c0_i32, %arg0 : i32, i32
  }
}

</mosaic_0001>

<llo_original>
// kernel: c3_forward.1
$region0: #{c3_forward.1}
  #allocation0 [shape = 'u32[]', space=smem, size = 0x4, offset = 0x4, fixed_abs, tag = 'smem constant byte address 0x4 - core index']
  #allocation1 [shape = 'u32[144,128]{1,0:T(1,128)}', space=vmem, size = 0x12000, scoped, tag = 'internal scratch']
  %s0 = inlined_call_operand.vmem [shape: f32[16,768], index: 0, kind: input, shape index: {}]
  %s1 = inlined_call_operand.vmem [shape: f32[16,16], index: 1, kind: input, shape index: {}]
  %s2 = inlined_call_operand.vmem [shape: f32[2,16,1], index: 2, kind: input, shape index: {}]
  %s3 = inlined_call_operand.vmem [shape: f32[2,8,8], index: 3, kind: input, shape index: {}]
  %s4 = inlined_call_operand.vmem [shape: f32[2,2,8,1], index: 4, kind: input, shape index: {}]
  %s5 = inlined_call_operand.vmem [shape: f32[2,9,8,8], index: 5, kind: input, shape index: {}]
  %s6 = inlined_call_operand.vmem [shape: f32[2,2,8,1], index: 6, kind: input, shape index: {}]
  %s7 = inlined_call_operand.vmem [shape: f32[16,8], index: 7, kind: input, shape index: {}]
  %s8 = inlined_call_operand.vmem [shape: f32[16,8], index: 8, kind: input, shape index: {}]
  %s9 = inlined_call_operand.vmem [shape: f32[2,16,1], index: 9, kind: input, shape index: {}]
  %s10 = inlined_call_operand.vmem [shape: f32[1,384], index: 10, kind: input, shape index: {}]
  %s11 = inlined_call_operand.vmem [shape: f32[16,768], index: 11, kind: output, shape index: {}]
  %s12 = sld [smem:[#allocation0]]
  $region119: #{c3_forward.1} parent=0
    _
  %s14 = ssub.s32 1, %s12
  %s15 = scalar_select 0, %s14, %s12
  $region1: #{c3_forward.1} parent=0
    #allocation2 [shape = 'u8[49152]{0}', space=vmem, size = 0xc000, scoped, tag = 'input window, operand 0']
    #allocation3 [shape = 'u8[49152]{0}', space=vmem, size = 0xc000, scoped, tag = 'output window, operand 0']
    loop: start=0, step=1, limit=4
    $region2: #{c3_forward.1} parent=1 // loop_pre_header
      _
    $region3: #{c3_forward.1} parent=1 // loop_header
      %s17 = sphi 0, %s21
      %p18 = scmp.ge.s32.totalorder %s17, 4
      %s27 = sphi 0, %s29
      %s30 = sphi 0, %s27
      %s31 = sphi 0, %s30
      %s47 = sphi 0, %s31
      %s51 = sphi 0, %s51
      %s53 = sphi 0, %s51
      %s54 = sphi 0, %s53
      %s68 = sphi 0, %s54
      %s72 = sphi 0, %s72
      %s74 = sphi 0, %s72
      %s75 = sphi 0, %s74
      %s89 = sphi 0, %s75
      %s93 = sphi 0, %s93
      %s95 = sphi 0, %s93
      %s96 = sphi 0, %s95
      %s110 = sphi 0, %s96
      %s114 = sphi 0, %s114
      %s116 = sphi 0, %s114
      %s117 = sphi 0, %s116
      %s131 = sphi 0, %s117
      %s135 = sphi 0, %s135
      %s137 = sphi 0, %s135
      %s138 = sphi 0, %s137
      %s152 = sphi 0, %s138
      %s156 = sphi 0, %s156
      %s158 = sphi 0, %s156
      %s159 = sphi 0, %s158
      %s173 = sphi 0, %s159
      %s177 = sphi 0, %s177
      %s179 = sphi 0, %s177
      %s180 = sphi 0, %s179
      %s194 = sphi 0, %s180
      %s198 = sphi 0, %s198
      %s200 = sphi 0, %s198
      %s201 = sphi 0, %s200
      %s215 = sphi 0, %s201
      %s219 = sphi 0, %s219
      %s221 = sphi 0, %s219
      %s222 = sphi 0, %s221
      %s236 = sphi 0, %s222
      %s240 = sphi 0, %s240
      %s242 = sphi 0, %s240
      %s243 = sphi 0, %s242
      %s257 = sphi 0, %s243
      %s263 = sphi 0, %s265
      %s266 = sphi 0, %s263
      %s267 = sphi 0, %s266
      %s283 = sphi 0, %s267
    $region4: #{c3_forward.1} parent=1 // loop_header_branch
      %20 = sbr.rel (%p18) target = $region8
    $region5: #{c3_forward.1} parent=1 // loop_body
      %s22 = ssub.s32 %s17, 1
      %s23 = ssub.s32 %s17, 2
      %s24 = sadd.s32 %s17, 1
      %s25 = ssub.s32 %s17, %s24
      %p26 = scmp.eq.s32.totalorder %s25, 0
      %s28 = sadd.s32 %s27, 1
      %s29 = scalar_select %p26, %s27, %s28
      %p32 = pneg %p26
      %p33 = scmp.eq.s32.totalorder %s17, 1
      %p34 = por %p32, %p33
      %p35 = scmp.ne.s32.totalorder %s27, %s30
      %p36 = scmp.eq.s32.totalorder %s17, 0
      %p37 = por %p35, %p36
      %p38 = scmp.ne.s32.totalorder %s27, %s30
      %p39 = scmp.eq.s32.totalorder %s22, 1
      %p40 = por %p38, %p39
      %p41 = scmp.ne.s32.totalorder %s30, %s31
      %p42 = scmp.eq.s32.totalorder %s22, 0
      %p43 = por %p41, %p42
      %p44 = scmp.ne.s32.totalorder %s30, %s31
      %p45 = scmp.eq.s32.totalorder %s23, 1
      %p46 = por %p44, %p45
      %p48 = scmp.ne.s32.totalorder %s31, %s47
      %p49 = scmp.eq.s32.totalorder %s23, 0
      %p50 = por %p48, %p49
      %s52 = sadd.s32 %s51, 1
      %p55 = scmp.eq.s32.totalorder %s17, 1
      %p56 = scmp.ne.s32.totalorder %s51, %s53
      %p57 = scmp.eq.s32.totalorder %s17, 0
      %p58 = por %p56, %p57
      %p59 = scmp.ne.s32.totalorder %s51, %s53
      %p60 = scmp.eq.s32.totalorder %s22, 1
      %p61 = por %p59, %p60
      %p62 = scmp.ne.s32.totalorder %s53, %s54
      %p63 = scmp.eq.s32.totalorder %s22, 0
      %p64 = por %p62, %p63
      %p65 = scmp.ne.s32.totalorder %s53, %s54
      %p66 = scmp.eq.s32.totalorder %s23, 1
      %p67 = por %p65, %p66
      %p69 = scmp.ne.s32.totalorder %s54, %s68
      %p70 = scmp.eq.s32.totalorder %s23, 0
      %p71 = por %p69, %p70
      %s73 = sadd.s32 %s72, 1
      %p76 = scmp.eq.s32.totalorder %s17, 1
      %p77 = scmp.ne.s32.totalorder %s72, %s74
      %p78 = scmp.eq.s32.totalorder %s17, 0
      %p79 = por %p77, %p78
      %p80 = scmp.ne.s32.totalorder %s72, %s74
      %p81 = scmp.eq.s32.totalorder %s22, 1
      %p82 = por %p80, %p81
      %p83 = scmp.ne.s32.totalorder %s74, %s75
      %p84 = scmp.eq.s32.totalorder %s22, 0
      %p85 = por %p83, %p84
      %p86 = scmp.ne.s32.totalorder %s74, %s75
      %p87 = scmp.eq.s32.totalorder %s23, 1
      %p88 = por %p86, %p87
      %p90 = scmp.ne.s32.totalorder %s75, %s89
      %p91 = scmp.eq.s32.totalorder %s23, 0
      %p92 = por %p90, %p91
      %s94 = sadd.s32 %s93, 1
      %p97 = scmp.eq.s32.totalorder %s17, 1
      %p98 = scmp.ne.s32.totalorder %s93, %s95
      %p99 = scmp.eq.s32.totalorder %s17, 0
      %p100 = por %p98, %p99
      %p101 = scmp.ne.s32.totalorder %s93, %s95
      %p102 = scmp.eq.s32.totalorder %s22, 1
      %p103 = por %p101, %p102
      %p104 = scmp.ne.s32.totalorder %s95, %s96
      %p105 = scmp.eq.s32.totalorder %s22, 0
      %p106 = por %p104, %p105
      %p107 = scmp.ne.s32.totalorder %s95, %s96
      %p108 = scmp.eq.s32.totalorder %s23, 1
      %p109 = por %p107, %p108
      %p111 = scmp.ne.s32.totalorder %s96, %s110
      %p112 = scmp.eq.s32.totalorder %s23, 0
      %p113 = por %p111, %p112
      %s115 = sadd.s32 %s114, 1
      %p118 = scmp.eq.s32.totalorder %s17, 1
      %p119 = scmp.ne.s32.totalorder %s114, %s116
      %p120 = scmp.eq.s32.totalorder %s17, 0
      %p121 = por %p119, %p120
      %p122 = scmp.ne.s32.totalorder %s114, %s116
      %p123 = scmp.eq.s32.totalorder %s22, 1
      %p124 = por %p122, %p123
      %p125 = scmp.ne.s32.totalorder %s116, %s117
      %p126 = scmp.eq.s32.totalorder %s22, 0
      %p127 = por %p125, %p126
      %p128 = scmp.ne.s32.totalorder %s116, %s117
      %p129 = scmp.eq.s32.totalorder %s23, 1
      %p130 = por %p128, %p129
      %p132 = scmp.ne.s32.totalorder %s117, %s131
      %p133 = scmp.eq.s32.totalorder %s23, 0
      %p134 = por %p132, %p133
      %s136 = sadd.s32 %s135, 1
      %p139 = scmp.eq.s32.totalorder %s17, 1
      %p140 = scmp.ne.s32.totalorder %s135, %s137
      %p141 = scmp.eq.s32.totalorder %s17, 0
      %p142 = por %p140, %p141
      %p143 = scmp.ne.s32.totalorder %s135, %s137
      %p144 = scmp.eq.s32.totalorder %s22, 1
      %p145 = por %p143, %p144
      %p146 = scmp.ne.s32.totalorder %s137, %s138
      %p147 = scmp.eq.s32.totalorder %s22, 0
      %p148 = por %p146, %p147
      %p149 = scmp.ne.s32.totalorder %s137, %s138
      %p150 = scmp.eq.s32.totalorder %s23, 1
      %p151 = por %p149, %p150
      %p153 = scmp.ne.s32.totalorder %s138, %s152
      %p154 = scmp.eq.s32.totalorder %s23, 0
      %p155 = por %p153, %p154
      %s157 = sadd.s32 %s156, 1
      %p160 = scmp.eq.s32.totalorder %s17, 1
      %p161 = scmp.ne.s32.totalorder %s156, %s158
      %p162 = scmp.eq.s32.totalorder %s17, 0
      %p163 = por %p161, %p162
      %p164 = scmp.ne.s32.totalorder %s156, %s158
      %p165 = scmp.eq.s32.totalorder %s22, 1
      %p166 = por %p164, %p165
      %p167 = scmp.ne.s32.totalorder %s158, %s159
      %p168 = scmp.eq.s32.totalorder %s22, 0
      %p169 = por %p167, %p168
      %p170 = scmp.ne.s32.totalorder %s158, %s159
      %p171 = scmp.eq.s32.totalorder %s23, 1
      %p172 = por %p170, %p171
      %p174 = scmp.ne.s32.totalorder %s159, %s173
      %p175 = scmp.eq.s32.totalorder %s23, 0
      %p176 = por %p174, %p175
      %s178 = sadd.s32 %s177, 1
      %p181 = scmp.eq.s32.totalorder %s17, 1
      %p182 = scmp.ne.s32.totalorder %s177, %s179
      %p183 = scmp.eq.s32.totalorder %s17, 0
      %p184 = por %p182, %p183
      %p185 = scmp.ne.s32.totalorder %s177, %s179
      %p186 = scmp.eq.s32.totalorder %s22, 1
      %p187 = por %p185, %p186
      %p188 = scmp.ne.s32.totalorder %s179, %s180
      %p189 = scmp.eq.s32.totalorder %s22, 0
      %p190 = por %p188, %p189
      %p191 = scmp.ne.s32.totalorder %s179, %s180
      %p192 = scmp.eq.s32.totalorder %s23, 1
      %p193 = por %p191, %p192
      %p195 = scmp.ne.s32.totalorder %s180, %s194
      %p196 = scmp.eq.s32.totalorder %s23, 0
      %p197 = por %p195, %p196
      %s199 = sadd.s32 %s198, 1
      %p202 = scmp.eq.s32.totalorder %s17, 1
      %p203 = scmp.ne.s32.totalorder %s198, %s200
      %p204 = scmp.eq.s32.totalorder %s17, 0
      %p205 = por %p203, %p204
      %p206 = scmp.ne.s32.totalorder %s198, %s200
      %p207 = scmp.eq.s32.totalorder %s22, 1
      %p208 = por %p206, %p207
      %p209 = scmp.ne.s32.totalorder %s200, %s201
      %p210 = scmp.eq.s32.totalorder %s22, 0
      %p211 = por %p209, %p210
      %p212 = scmp.ne.s32.totalorder %s200, %s201
      %p213 = scmp.eq.s32.totalorder %s23, 1
      %p214 = por %p212, %p213
      %p216 = scmp.ne.s32.totalorder %s201, %s215
      %p217 = scmp.eq.s32.totalorder %s23, 0
      %p218 = por %p216, %p217
      %s220 = sadd.s32 %s219, 1
      %p223 = scmp.eq.s32.totalorder %s17, 1
      %p224 = scmp.ne.s32.totalorder %s219, %s221
      %p225 = scmp.eq.s32.totalorder %s17, 0
      %p226 = por %p224, %p225
      %p227 = scmp.ne.s32.totalorder %s219, %s221
      %p228 = scmp.eq.s32.totalorder %s22, 1
      %p229 = por %p227, %p228
      %p230 = scmp.ne.s32.totalorder %s221, %s222
      %p231 = scmp.eq.s32.totalorder %s22, 0
      %p232 = por %p230, %p231
      %p233 = scmp.ne.s32.totalorder %s221, %s222
      %p234 = scmp.eq.s32.totalorder %s23, 1
      %p235 = por %p233, %p234
      %p237 = scmp.ne.s32.totalorder %s222, %s236
      %p238 = scmp.eq.s32.totalorder %s23, 0
      %p239 = por %p237, %p238
      %s241 = sadd.s32 %s240, 1
      %p244 = scmp.eq.s32.totalorder %s17, 1
      %p245 = scmp.ne.s32.totalorder %s240, %s242
      %p246 = scmp.eq.s32.totalorder %s17, 0
      %p247 = por %p245, %p246
      %p248 = scmp.ne.s32.totalorder %s240, %s242
      %p249 = scmp.eq.s32.totalorder %s22, 1
      %p250 = por %p248, %p249
      %p251 = scmp.ne.s32.totalorder %s242, %s243
      %p252 = scmp.eq.s32.totalorder %s22, 0
      %p253 = por %p251, %p252
      %p254 = scmp.ne.s32.totalorder %s242, %s243
      %p255 = scmp.eq.s32.totalorder %s23, 1
      %p256 = por %p254, %p255
      %p258 = scmp.ne.s32.totalorder %s243, %s257
      %p259 = scmp.eq.s32.totalorder %s23, 0
      %p260 = por %p258, %p259
      %s261 = ssub.s32 %s17, %s24
      %p262 = scmp.eq.s32.totalorder %s261, 0
      %s264 = sadd.s32 %s263, 1
      %s265 = scalar_select %p262, %s263, %s264
      %p268 = pneg %p262
      %p269 = scmp.eq.s32.totalorder %s17, 1
      %p270 = por %p268, %p269
      %p271 = scmp.ne.s32.totalorder %s263, %s266
      %p272 = scmp.eq.s32.totalorder %s17, 0
      %p273 = por %p271, %p272
      %p274 = scmp.ne.s32.totalorder %s263, %s266
      %p275 = scmp.eq.s32.totalorder %s22, 1
      %p276 = por %p274, %p275
      %p277 = scmp.ne.s32.totalorder %s266, %s267
      %p278 = scmp.eq.s32.totalorder %s22, 0
      %p279 = por %p277, %p278
      %p280 = scmp.ne.s32.totalorder %s266, %s267
      %p281 = scmp.eq.s32.totalorder %s23, 1
      %p282 = por %p280, %p281
      %p284 = scmp.ne.s32.totalorder %s267, %s283
      %p285 = scmp.eq.s32.totalorder %s23, 0
      %p286 = por %p284, %p285
      %p287 = scmp.le.s32.totalorder 1, %s17
      %p288 = scmp.lt.s32.totalorder %s17, 3
      %p289 = pnand %p287, %p288
      %p290 = pneg %p289
      // Predicated region
      $region9: #{c3_forward.1} parent=5 // pred_check
        _
      $region10: #{c3_forward.1} parent=5 // pred_check_branch
        %292 = sbr.rel (%p289) target = $region12
      $region11: #{c3_forward.1} parent=5 // pred_region
        %s293 = ssub.s32 %s17, 1
        // Predicated region
        $region13: #{c3_forward.1} parent=11 // pred_check
          %p294 = pneg %p64
        $region14: #{c3_forward.1} parent=11 // pred_check_branch
          %296 = sbr.rel (%p294) target = $region16
        $region15: #{c3_forward.1} parent=11 // pred_region
          _
        $region16: #{c3_forward.1} parent=11 // pred_fallthru
          _
        // Predicated region
        $region17: #{c3_forward.1} parent=11 // pred_check
          %p297 = pneg %p85
        $region18: #{c3_forward.1} parent=11 // pred_check_branch
          %299 = sbr.rel (%p297) target = $region20
        $region19: #{c3_forward.1} parent=11 // pred_region
          _
        $region20: #{c3_forward.1} parent=11 // pred_fallthru
          _
        // Predicated region
        $region21: #{c3_forward.1} parent=11 // pred_check
          %p300 = pneg %p106
        $region22: #{c3_forward.1} parent=11 // pred_check_branch
          %302 = sbr.rel (%p300) target = $region24
        $region23: #{c3_forward.1} parent=11 // pred_region
          _
        $region24: #{c3_forward.1} parent=11 // pred_fallthru
          _
        // Predicated region
        $region25: #{c3_forward.1} parent=11 // pred_check
          %p303 = pneg %p127
        $region26: #{c3_forward.1} parent=11 // pred_check_branch
          %305 = sbr.rel (%p303) target = $region28
        $region27: #{c3_forward.1} parent=11 // pred_region
          _
        $region28: #{c3_forward.1} parent=11 // pred_fallthru
          _
        // Predicated region
        $region29: #{c3_forward.1} parent=11 // pred_check
          %p306 = pneg %p148
        $region30: #{c3_forward.1} parent=11 // pred_check_branch
          %308 = sbr.rel (%p306) target = $region32
        $region31: #{c3_forward.1} parent=11 // pred_region
          _
        $region32: #{c3_forward.1} parent=11 // pred_fallthru
          _
        // Predicated region
        $region33: #{c3_forward.1} parent=11 // pred_check
          %p309 = pneg %p169
        $region34: #{c3_forward.1} parent=11 // pred_check_branch
          %311 = sbr.rel (%p309) target = $region36
        $region35: #{c3_forward.1} parent=11 // pred_region
          _
        $region36: #{c3_forward.1} parent=11 // pred_fallthru
          _
        // Predicated region
        $region37: #{c3_forward.1} parent=11 // pred_check
          %p312 = pneg %p190
        $region38: #{c3_forward.1} parent=11 // pred_check_branch
          %314 = sbr.rel (%p312) target = $region40
        $region39: #{c3_forward.1} parent=11 // pred_region
          _
        $region40: #{c3_forward.1} parent=11 // pred_fallthru
          _
        // Predicated region
        $region41: #{c3_forward.1} parent=11 // pred_check
          %p315 = pneg %p211
        $region42: #{c3_forward.1} parent=11 // pred_check_branch
          %317 = sbr.rel (%p315) target = $region44
        $region43: #{c3_forward.1} parent=11 // pred_region
          _
        $region44: #{c3_forward.1} parent=11 // pred_fallthru
          _
        // Predicated region
        $region45: #{c3_forward.1} parent=11 // pred_check
          %p318 = pneg %p232
        $region46: #{c3_forward.1} parent=11 // pred_check_branch
          %320 = sbr.rel (%p318) target = $region48
        $region47: #{c3_forward.1} parent=11 // pred_region
          _
        $region48: #{c3_forward.1} parent=11 // pred_fallthru
          _
        // Predicated region
        $region49: #{c3_forward.1} parent=11 // pred_check
          %p321 = pneg %p253
        $region50: #{c3_forward.1} parent=11 // pred_check_branch
          %323 = sbr.rel (%p321) target = $region52
        $region51: #{c3_forward.1} parent=11 // pred_region
          _
        $region52: #{c3_forward.1} parent=11 // pred_fallthru
          _
      $region12: #{c3_forward.1} parent=5 // pred_fallthru
        _
      %p324 = scmp.lt.s32.totalorder %s17, 2
      // Predicated region
      $region53: #{c3_forward.1} parent=5 // pred_check
        %p325 = pneg %p324
      $region54: #{c3_forward.1} parent=5 // pred_check_branch
        %327 = sbr.rel (%p325) target = $region56
      $region55: #{c3_forward.1} parent=5 // pred_region
        // Predicated region
        $region57: #{c3_forward.1} parent=55 // pred_check
          %p328 = pneg %p37
        $region58: #{c3_forward.1} parent=55 // pred_check_branch
          %330 = sbr.rel (%p328) target = $region60
        $region59: #{c3_forward.1} parent=55 // pred_region
          %s331 = sand.u32 %s27, 1
          %s332 = sand.u32 %s27, 1
          %s333 = smul.addr %s332, 48
          %s334 = scalar_lea.vmem [#allocation2], %s333
          %s335 = smul.u32 3, %s17
          %s336 = smul.addr %s335, 8
          %s337 = scalar_lea.vmem %s0, %s336
          // Predicated region
          $region61: #{c3_forward.1} parent=59 // pred_check
            _
          $region62: #{c3_forward.1} parent=59 // pred_check_branch
            %339 = sbr.rel (0) target = $region64
          $region63: #{c3_forward.1} parent=59 // pred_region
            // Predicated region
            $region65: #{c3_forward.1} parent=63 // pred_check
              _
            $region66: #{c3_forward.1} parent=63 // pred_check_branch
              %341 = sbr.rel (0) target = $region68
            $region67: #{c3_forward.1} parent=63 // pred_region
              loop: start=0, step=1, limit=1
              $region69: #{c3_forward.1} parent=67 // loop_pre_header
                _
              $region70: #{c3_forward.1} parent=67 // loop_header
                %s343 = sphi 0, %s347
                %p344 = scmp.ge.s32.totalorder %s343, 1
                %s348 = sphi %s337, %s337
                %s349 = sphi %s334, %s334
              $region71: #{c3_forward.1} parent=67 // loop_header_branch
                %346 = sbr.rel (%p344) target = $region75
              $region72: #{c3_forward.1} parent=67 // loop_body
                %v350 = vld [vmem:[%s348] sm:$0xff]
                %351 = vst [vmem:[%s349] sm:$0xff] %v350
                %v352 = vld [vmem:[%s348 + $0x8] sm:$0xff]
                %353 = vst [vmem:[%s349 + $0x8] sm:$0xff] %v352
                %v354 = vld [vmem:[%s348 + $0x10] sm:$0xff]
                %355 = vst [vmem:[%s349 + $0x10] sm:$0xff] %v354
                %v356 = vld [vmem:[%s348 + $0x30] sm:$0xff]
                %357 = vst [vmem:[%s349 + $0x18] sm:$0xff] %v356
                %v358 = vld [vmem:[%s348 + $0x38] sm:$0xff]
                %359 = vst [vmem:[%s349 + $0x20] sm:$0xff] %v358
                %v360 = vld [vmem:[%s348 + $0x40] sm:$0xff]
                %361 = vst [vmem:[%s349 + $0x28] sm:$0xff] %v360
              $region73: #{c3_forward.1} parent=67 // loop_footer
                %s347 = sadd.s32 1, %s343
              $region74: #{c3_forward.1} parent=67 // loop_footer_branch
                %342 = sbr.rel target = $region70
              $region75: #{c3_forward.1} parent=67 // loop_exit
                _
            $region68: #{c3_forward.1} parent=63 // pred_fallthru
              _
            // Predicated region
            $region76: #{c3_forward.1} parent=63 // pred_check
              _
            $region77: #{c3_forward.1} parent=63 // pred_check_branch
              %363 = sbr.rel target = $region79
            $region78: #{c3_forward.1} parent=63 // pred_region
              _
            $region79: #{c3_forward.1} parent=63 // pred_fallthru
              _
          $region64: #{c3_forward.1} parent=59 // pred_fallthru
            _
          %364 = vnop
        $region60: #{c3_forward.1} parent=55 // pred_fallthru
          _
      $region56: #{c3_forward.1} parent=5 // pred_fallthru
        _
      %p365 = scmp.le.s32.totalorder 1, %s17
      %p366 = scmp.lt.s32.totalorder %s17, 3
      %p367 = pnand %p365, %p366
      %p368 = pneg %p367
      // Predicated region
      $region80: #{c3_forward.1} parent=5 // pred_check
        _
      $region81: #{c3_forward.1} parent=5 // pred_check_branch
        %370 = sbr.rel (%p367) target = $region83
      $region82: #{c3_forward.1} parent=5 // pred_region
        %s371 = ssub.s32 %s17, 1
        %s372 = sand.u32 %s30, 1
        %s373 = sand.u32 %s30, 1
        %s374 = smul.addr %s373, 48
        %s375 = scalar_lea.vmem [#allocation2], %s374
        // Predicated region
        $region84: #{c3_forward.1} parent=82 // pred_check
          %p376 = pneg %p43
        $region85: #{c3_forward.1} parent=82 // pred_check_branch
          %378 = sbr.rel (%p376) target = $region87
        $region86: #{c3_forward.1} parent=82 // pred_region
          _
        $region87: #{c3_forward.1} parent=82 // pred_fallthru
          _
        %s379 = sand.u32 %s30, 1
        %s380 = sand.u32 %s30, 1
        %s381 = smul.addr %s380, 48
        %s382 = scalar_lea.vmem [#allocation2], %s381
        %p383 = pneg %p43
        %p384 = pneg %p40
        %p385 = pneg %p64
        %p386 = pneg %p61
        %p387 = pneg %p85
        %p388 = pneg %p82
        %p389 = pneg %p106
        %p390 = pneg %p103
        %p391 = pneg %p127
        %p392 = pneg %p124
        %p393 = pneg %p148
        %p394 = pneg %p145
        %p395 = pneg %p169
        %p396 = pneg %p166
        %p397 = pneg %p190
        %p398 = pneg %p187
        %p399 = pneg %p211
        %p400 = pneg %p208
        %p401 = pneg %p232
        %p402 = pneg %p229
        %p403 = pneg %p253
        %p404 = pneg %p250
        %p405 = pneg %p279
        %p406 = pneg %p276
        %s407 = sand.u32 %s266, 1
        %s408 = sand.u32 %s266, 1
        %s409 = smul.addr %s408, 48
        %s410 = scalar_lea.vmem [#allocation3], %s409
        %s411 = smul.u32 3, %s22
        %s412 = smul.u32 3, %s22
        %v413 = vld [vmem:[%s10] sm:$0x7]
        %v414 = vld [vmem:[%s1] sm:$0xff]
        %v415 = vld [vmem:[%s1 + $0x8] sm:$0xff]
        %v416 = vld [vmem:[%s375] sm:$0xff]
        %v417 = vld [vmem:[%s375 + $0x8] sm:$0xff]
        %v418 = vld [vmem:[%s375 + $0x10] sm:$0xff]
        %v419 = vld [vmem:[%s375 + $0x18] sm:$0xff]
        %v420 = vld [vmem:[%s375 + $0x20] sm:$0xff]
        %v421 = vld [vmem:[%s375 + $0x28] sm:$0xff]
        %vm422 = vcmask 130048
        %v424 = vsel %vm422, %v414, 0
        %v427 = vsel %vm422, %v415, 0
        %429 = vmatprep.subr.mxu0 %v417
        %430 = vmatpush1.msra.mxu0 %v416
        %431 = vmatprep.subr.mxu0 %v420
        %432 = vmatpush1.msra.mxu0 %v419
        %433 = vmatprep.subr.mxu0 0.0
        %434 = vmatpush1.msra.mxu0 0.0
        %435 = vmatprep.subr.mxu0 0.0
        %436 = vmatpush1.msra.mxu0 0.0
        %437 = vmatprep.subr.mxu0 0.0
        %438 = vmatpush1.msra.mxu0 0.0
        %439 = vmatprep.subr.mxu0 0.0
        %440 = vmatpush1.msra.mxu0 0.0
        %441 = vmatprep.subr.mxu0 0.0
        %442 = vmatpush1.msra.mxu0 0.0
        %443 = vmatprep.subr.mxu0 0.0
        %444 = vmatpush1.msra.mxu0 0.0
        %445 = vmatprep.subr.mxu0 0.0
        %446 = vmatpush1.msra.mxu0 0.0
        %447 = vmatprep.subr.mxu0 0.0
        %448 = vmatpush1.msra.mxu0 0.0
        %449 = vmatprep.subr.mxu0 0.0
        %450 = vmatpush1.msra.mxu0 0.0
        %451 = vmatprep.subr.mxu0 0.0
        %452 = vmatpush1.msra.mxu0 0.0
        %453 = vmatprep.subr.mxu0 0.0
        %454 = vmatpush1.msra.mxu0 0.0
        %455 = vmatprep.subr.mxu0 0.0
        %456 = vmatpush1.msra.mxu0 0.0
        %457 = vmatprep.subr.mxu0 0.0
        %458 = vmatpush1.msra.mxu0 0.0
        %459 = vmatprep.subr.mxu0 0.0
        %460 = vmatpush1.msra.mxu0 0.0
        %461 = vmatprep.subr.mxu0 0.0
        %462 = vmatpush1.msra.mxu0 0.0
        %463 = vmatprep.subr.mxu0 0.0
        %464 = vmatpush1.msra.mxu0 0.0
        %465 = vmatprep.subr.mxu0 0.0
        %466 = vmatpush1.msra.mxu0 0.0
        %467 = vmatprep.subr.mxu0 0.0
        %468 = vmatpush1.msra.mxu0 0.0
        %469 = vmatprep.subr.mxu0 0.0
        %470 = vmatpush1.msra.mxu0 0.0
        %471 = vmatprep.subr.mxu0 0.0
        %472 = vmatpush1.msra.mxu0 0.0
        %473 = vmatprep.subr.mxu0 0.0
        %474 = vmatpush1.msra.mxu0 0.0
        %475 = vmatprep.subr.mxu0 0.0
        %476 = vmatpush1.msra.mxu0 0.0
        %477 = vmatprep.subr.mxu0 0.0
        %478 = vmatpush1.msra.mxu0 0.0
        %479 = vmatprep.subr.mxu0 0.0
        %480 = vmatpush1.msra.mxu0 0.0
        %481 = vmatprep.subr.mxu0 0.0
        %482 = vmatpush1.msra.mxu0 0.0
        %483 = vmatprep.subr.mxu0 0.0
        %484 = vmatpush1.msra.mxu0 0.0
        %485 = vmatprep.subr.mxu0 0.0
        %486 = vmatpush1.msra.mxu0 0.0
        %487 = vmatprep.subr.mxu0 0.0
        %488 = vmatpush1.msra.mxu0 0.0
        %489 = vmatprep.subr.mxu0 0.0
        %490 = vmatpush1.msra.mxu0 0.0
        %491 = vmatprep.subr.mxu0 0.0
        %492 = vmatpush1.msra.mxu0 0.0
        %493 = vmatprep.mubr.f32.mxu0 0.0
        %494 = vmatmul.mubr.f32.gmra.mrb[0].mxu0 %v424
        %v495 = vpop.f32.mrb[0].mxu0
        %v496 = vadd.f32 0.0, %v495
        %v497 = vpop.f32.mrb[0].mxu0
        %v498 = vadd.f32 0.0, %v497
        %499 = vmatprep.mubr.f32.mxu0 0.0
        %500 = vmatmul.mubr.f32.gmra.mrb[0].mxu0 %v427
        %v501 = vpop.f32.mrb[0].mxu0
        %v502 = vadd.f32 0.0, %v501
        %v503 = vpop.f32.mrb[0].mxu0
        %v504 = vadd.f32 0.0, %v503
        %505 = vdwg.mxu0
        %506 = vmatprep.subr.mxu0 0.0
        %507 = vmatpush1.msra.mxu0 %v418
        %508 = vmatprep.subr.mxu0 0.0
        %509 = vmatpush1.msra.mxu0 %v421
        %510 = vmatprep.subr.mxu0 0.0
        %511 = vmatpush1.msra.mxu0 0.0
        %512 = vmatprep.subr.mxu0 0.0
        %513 = vmatpush1.msra.mxu0 0.0
        %514 = vmatprep.subr.mxu0 0.0
        %515 = vmatpush1.msra.mxu0 0.0
        %516 = vmatprep.subr.mxu0 0.0
        %517 = vmatpush1.msra.mxu0 0.0
        %518 = vmatprep.subr.mxu0 0.0
        %519 = vmatpush1.msra.mxu0 0.0
        %520 = vmatprep.subr.mxu0 0.0
        %521 = vmatpush1.msra.mxu0 0.0
        %522 = vmatprep.subr.mxu0 0.0
        %523 = vmatpush1.msra.mxu0 0.0
        %524 = vmatprep.subr.mxu0 0.0
        %525 = vmatpush1.msra.mxu0 0.0
        %526 = vmatprep.subr.mxu0 0.0
        %527 = vmatpush1.msra.mxu0 0.0
        %528 = vmatprep.subr.mxu0 0.0
        %529 = vmatpush1.msra.mxu0 0.0
        %530 = vmatprep.subr.mxu0 0.0
        %531 = vmatpush1.msra.mxu0 0.0
        %532 = vmatprep.subr.mxu0 0.0
        %533 = vmatpush1.msra.mxu0 0.0
        %534 = vmatprep.subr.mxu0 0.0
        %535 = vmatpush1.msra.mxu0 0.0
        %536 = vmatprep.subr.mxu0 0.0
        %537 = vmatpush1.msra.mxu0 0.0
        %538 = vmatprep.subr.mxu0 0.0
        %539 = vmatpush1.msra.mxu0 0.0
        %540 = vmatprep.subr.mxu0 0.0
        %541 = vmatpush1.msra.mxu0 0.0
        %542 = vmatprep.subr.mxu0 0.0
        %543 = vmatpush1.msra.mxu0 0.0
        %544 = vmatprep.subr.mxu0 0.0
        %545 = vmatpush1.msra.mxu0 0.0
        %546 = vmatprep.subr.mxu0 0.0
        %547 = vmatpush1.msra.mxu0 0.0
        %548 = vmatprep.subr.mxu0 0.0
        %549 = vmatpush1.msra.mxu0 0.0
        %550 = vmatprep.subr.mxu0 0.0
        %551 = vmatpush1.msra.mxu0 0.0
        %552 = vmatprep.subr.mxu0 0.0
        %553 = vmatpush1.msra.mxu0 0.0
        %554 = vmatprep.subr.mxu0 0.0
        %555 = vmatpush1.msra.mxu0 0.0
        %556 = vmatprep.subr.mxu0 0.0
        %557 = vmatpush1.msra.mxu0 0.0
        %558 = vmatprep.subr.mxu0 0.0
        %559 = vmatpush1.msra.mxu0 0.0
        %560 = vmatprep.subr.mxu0 0.0
        %561 = vmatpush1.msra.mxu0 0.0
        %562 = vmatprep.subr.mxu0 0.0
        %563 = vmatpush1.msra.mxu0 0.0
        %564 = vmatprep.subr.mxu0 0.0
        %565 = vmatpush1.msra.mxu0 0.0
        %566 = vmatprep.subr.mxu0 0.0
        %567 = vmatpush1.msra.mxu0 0.0
        %568 = vmatprep.subr.mxu0 0.0
        %569 = vmatpush1.msra.mxu0 0.0
        %570 = vmatprep.mubr.f32.mxu0 0.0
        %571 = vmatmul.mubr.f32.gmra.mrb[0].mxu0 %v424
        %v572 = vpop.f32.mrb[0].mxu0
        %v573 = vadd.f32 0.0, %v572
        %v574 = vpop.f32.mrb[0].mxu0
        %575 = vmatprep.mubr.f32.mxu0 0.0
        %576 = vmatmul.mubr.f32.gmra.mrb[0].mxu0 %v427
        %v577 = vpop.f32.mrb[0].mxu0
        %v578 = vadd.f32 0.0, %v577
        %v579 = vpop.f32.mrb[0].mxu0
        %580 = vdwg.mxu0
        %v581 = vld [vmem:[%s2] sm:$0xff]
        %v582 = vld [vmem:[%s2 + $0x8] sm:$0xff]
        %584 = vset.pattern.permute.xlu0 0
        %585 = vperm.xlu0 %584, %v581
        %v586 = vpop.permute.xlu0 %585
        %589 = vset.pattern.permute.xlu0 0
        %590 = vperm.xlu0 %589, %v582
        %v591 = vpop.permute.xlu0 %590
        %v593 = vmul.f32 %v496, %v586
        %v594 = vmul.f32 %v498, %v586
        %v595 = vmul.f32 %v573, %v586
        %v596 = vmul.f32 %v502, %v591
        %v597 = vmul.f32 %v504, %v591
        %v598 = vmul.f32 %v578, %v591
        %s599 = scalar_lea.vmem %s2, 16
        %v600 = vld [vmem:[%s599] sm:$0xff]
        %v601 = vld [vmem:[%s599 + $0x8] sm:$0xff]
        %603 = vset.pattern.permute.xlu0 0
        %604 = vperm.xlu0 %603, %v600
        %v605 = vpop.permute.xlu0 %604
        %608 = vset.pattern.permute.xlu0 0
        %609 = vperm.xlu0 %608, %v601
        %v610 = vpop.permute.xlu0 %609
        %v612 = vadd.f32 %v593, %v605
        %v613 = vadd.f32 %v594, %v605
        %v614 = vadd.f32 %v595, %v605
        %v615 = vadd.f32 %v596, %v610
        %v616 = vadd.f32 %v597, %v610
        %v617 = vadd.f32 %v598, %v610
        %v618 = vxor.u32 %v612, 2147483648
        %v619 = vxor.u32 %v613, 2147483648
        %v620 = vxor.u32 %v614, 2147483648
        %v621 = vxor.u32 %v615, 2147483648
        %v622 = vxor.u32 %v616, 2147483648
        %v623 = vxor.u32 %v617, 2147483648
        %v624 = vmul.f32 %v618, 1.442695
        %v625 = vpow.pop %v624
        %v626 = vmul.f32 %v619, 1.442695
        %v627 = vpow.pop %v626
        %v628 = vmul.f32 %v620, 1.442695
        %v629 = vpow.pop %v628
        %v630 = vmul.f32 %v621, 1.442695
        %v631 = vpow.pop %v630
        %v632 = vmul.f32 %v622, 1.442695
        %v633 = vpow.pop %v632
        %v634 = vmul.f32 %v623, 1.442695
        %v635 = vpow.pop %v634
        %v636 = vadd.f32 %v625, 1.0
        %v637 = vadd.f32 %v627, 1.0
        %v638 = vadd.f32 %v629, 1.0
        %v639 = vadd.f32 %v631, 1.0
        %v640 = vadd.f32 %v633, 1.0
        %v641 = vadd.f32 %v635, 1.0
        %v642 = vrcp.pop %v636
        %v643 = vmul.f32 1.0, %v642
        %v644 = vrcp.pop %v637
        %v645 = vmul.f32 1.0, %v644
        %v646 = vrcp.pop %v638
        %v647 = vmul.f32 1.0, %v646
        %v648 = vrcp.pop %v639
        %v649 = vmul.f32 1.0, %v648
        %v650 = vrcp.pop %v640
        %v651 = vmul.f32 1.0, %v650
        %v652 = vrcp.pop %v641
        %v653 = vmul.f32 1.0, %v652
        %v654 = vmul.f32 %v612, %v643
        %v655 = vmul.f32 %v613, %v645
        %v656 = vmul.f32 %v614, %v647
        %v657 = vmul.f32 %v615, %v649
        %v658 = vmul.f32 %v616, %v651
        %v659 = vmul.f32 %v617, %v653
        %v660 = vld [vmem:[%s3] sm:$0xff]
        %vm661 = vcmask 64512
        %v663 = vsel %vm661, %v660, 0
        %665 = vmatprep.subr.mxu0 %v655
        %666 = vmatpush1.msra.mxu0 %v654
        %667 = vmatprep.subr.mxu0 0.0
        %668 = vmatpush1.msra.mxu0 0.0
        %669 = vmatprep.subr.mxu0 0.0
        %670 = vmatpush1.msra.mxu0 0.0
        %671 = vmatprep.subr.mxu0 0.0
        %672 = vmatpush1.msra.mxu0 0.0
        %673 = vmatprep.subr.mxu0 0.0
        %674 = vmatpush1.msra.mxu0 0.0
        %675 = vmatprep.subr.mxu0 0.0
        %676 = vmatpush1.msra.mxu0 0.0
        %677 = vmatprep.subr.mxu0 0.0
        %678 = vmatpush1.msra.mxu0 0.0
        %679 = vmatprep.subr.mxu0 0.0
        %680 = vmatpush1.msra.mxu0 0.0
        %681 = vmatprep.subr.mxu0 0.0
        %682 = vmatpush1.msra.mxu0 0.0
        %683 = vmatprep.subr.mxu0 0.0
        %684 = vmatpush1.msra.mxu0 0.0
        %685 = vmatprep.subr.mxu0 0.0
        %686 = vmatpush1.msra.mxu0 0.0
        %687 = vmatprep.subr.mxu0 0.0
        %688 = vmatpush1.msra.mxu0 0.0
        %689 = vmatprep.subr.mxu0 0.0
        %690 = vmatpush1.msra.mxu0 0.0
        %691 = vmatprep.subr.mxu0 0.0
        %692 = vmatpush1.msra.mxu0 0.0
        %693 = vmatprep.subr.mxu0 0.0
        %694 = vmatpush1.msra.mxu0 0.0
        %695 = vmatprep.subr.mxu0 0.0
        %696 = vmatpush1.msra.mxu0 0.0
        %697 = vmatprep.subr.mxu0 0.0
        %698 = vmatpush1.msra.mxu0 0.0
        %699 = vmatprep.subr.mxu0 0.0
        %700 = vmatpush1.msra.mxu0 0.0
        %701 = vmatprep.subr.mxu0 0.0
        %702 = vmatpush1.msra.mxu0 0.0
        %703 = vmatprep.subr.mxu0 0.0
        %704 = vmatpush1.msra.mxu0 0.0
        %705 = vmatprep.subr.mxu0 0.0
        %706 = vmatpush1.msra.mxu0 0.0
        %707 = vmatprep.subr.mxu0 0.0
        %708 = vmatpush1.msra.mxu0 0.0
        %709 = vmatprep.subr.mxu0 0.0
        %710 = vmatpush1.msra.mxu0 0.0
        %711 = vmatprep.subr.mxu0 0.0
        %712 = vmatpush1.msra.mxu0 0.0
        %713 = vmatprep.subr.mxu0 0.0
        %714 = vmatpush1.msra.mxu0 0.0
        %715 = vmatprep.subr.mxu0 0.0
        %716 = vmatpush1.msra.mxu0 0.0
        %717 = vmatprep.subr.mxu0 0.0
        %718 = vmatpush1.msra.mxu0 0.0
        %719 = vmatprep.subr.mxu0 0.0
        %720 = vmatpush1.msra.mxu0 0.0
        %721 = vmatprep.subr.mxu0 0.0
        %722 = vmatpush1.msra.mxu0 0.0
        %723 = vmatprep.subr.mxu0 0.0
        %724 = vmatpush1.msra.mxu0 0.0
        %725 = vmatprep.subr.mxu0 0.0
        %726 = vmatpush1.msra.mxu0 0.0
        %727 = vmatprep.subr.mxu0 0.0
        %728 = vmatpush1.msra.mxu0 0.0
        %729 = vmatprep.mubr.f32.mxu0 0.0
        %730 = vmatmul.mubr.f32.gmra.mrb[0].mxu0 %v663
        %v731 = vpop.f32.mrb[0].mxu0
        %v732 = vadd.f32 0.0, %v731
        %v733 = vpop.f32.mrb[0].mxu0
        %v734 = vadd.f32 0.0, %v733
        %735 = vdwg.mxu0
        %736 = vmatprep.subr.mxu0 0.0
        %737 = vmatpush1.msra.mxu0 %v656
        %738 = vmatprep.subr.mxu0 0.0
        %739 = vmatpush1.msra.mxu0 0.0
        %740 = vmatprep.subr.mxu0 0.0
        %741 = vmatpush1.msra.mxu0 0.0
        %742 = vmatprep.subr.mxu0 0.0
        %743 = vmatpush1.msra.mxu0 0.0
        %744 = vmatprep.subr.mxu0 0.0
        %745 = vmatpush1.msra.mxu0 0.0
        %746 = vmatprep.subr.mxu0 0.0
        %747 = vmatpush1.msra.mxu0 0.0
        %748 = vmatprep.subr.mxu0 0.0
        %749 = vmatpush1.msra.mxu0 0.0
        %750 = vmatprep.subr.mxu0 0.0
        %751 = vmatpush1.msra.mxu0 0.0
        %752 = vmatprep.subr.mxu0 0.0
        %753 = vmatpush1.msra.mxu0 0.0
        %754 = vmatprep.subr.mxu0 0.0
        %755 = vmatpush1.msra.mxu0 0.0
        %756 = vmatprep.subr.mxu0 0.0
        %757 = vmatpush1.msra.mxu0 0.0
        %758 = vmatprep.subr.mxu0 0.0
        %759 = vmatpush1.msra.mxu0 0.0
        %760 = vmatprep.subr.mxu0 0.0
        %761 = vmatpush1.msra.mxu0 0.0
        %762 = vmatprep.subr.mxu0 0.0
        %763 = vmatpush1.msra.mxu0 0.0
        %764 = vmatprep.subr.mxu0 0.0
        %765 = vmatpush1.msra.mxu0 0.0
        %766 = vmatprep.subr.mxu0 0.0
        %767 = vmatpush1.msra.mxu0 0.0
        %768 = vmatprep.subr.mxu0 0.0
        %769 = vmatpush1.msra.mxu0 0.0
        %770 = vmatprep.subr.mxu0 0.0
        %771 = vmatpush1.msra.mxu0 0.0
        %772 = vmatprep.subr.mxu0 0.0
        %773 = vmatpush1.msra.mxu0 0.0
        %774 = vmatprep.subr.mxu0 0.0
        %775 = vmatpush1.msra.mxu0 0.0
        %776 = vmatprep.subr.mxu0 0.0
        %777 = vmatpush1.msra.mxu0 0.0
        %778 = vmatprep.subr.mxu0 0.0
        %779 = vmatpush1.msra.mxu0 0.0
        %780 = vmatprep.subr.mxu0 0.0
        %781 = vmatpush1.msra.mxu0 0.0
        %782 = vmatprep.subr.mxu0 0.0
        %783 = vmatpush1.msra.mxu0 0.0
        %784 = vmatprep.subr.mxu0 0.0
        %785 = vmatpush1.msra.mxu0 0.0
        %786 = vmatprep.subr.mxu0 0.0
        %787 = vmatpush1.msra.mxu0 0.0
        %788 = vmatprep.subr.mxu0 0.0
        %789 = vmatpush1.msra.mxu0 0.0
        %790 = vmatprep.subr.mxu0 0.0
        %791 = vmatpush1.msra.mxu0 0.0
        %792 = vmatprep.subr.mxu0 0.0
        %793 = vmatpush1.msra.mxu0 0.0
        %794 = vmatprep.subr.mxu0 0.0
        %795 = vmatpush1.msra.mxu0 0.0
        %796 = vmatprep.subr.mxu0 0.0
        %797 = vmatpush1.msra.mxu0 0.0
        %798 = vmatprep.subr.mxu0 0.0
        %799 = vmatpush1.msra.mxu0 0.0
        %800 = vmatprep.mubr.f32.mxu0 0.0
        %801 = vmatmul.mubr.f32.gmra.mrb[0].mxu0 %v663
        %v802 = vpop.f32.mrb[0].mxu0
        %v803 = vadd.f32 0.0, %v802
        %v804 = vpop.f32.mrb[0].mxu0
        %805 = vdwg.mxu0
        %v806 = vld [vmem:[%s4] sm:$0xff]
        %808 = vset.pattern.permute.xlu0 0
        %809 = vperm.xlu0 %808, %v806
        %v810 = vpop.permute.xlu0 %809
        %v812 = vmul.f32 %v732, %v810
        %v813 = vmul.f32 %v734, %v810
        %v814 = vmul.f32 %v803, %v810
        %s815 = scalar_lea.vmem %s4, 8
        %v816 = vld [vmem:[%s815] sm:$0xff]
        %818 = vset.pattern.permute.xlu0 0
        %819 = vperm.xlu0 %818, %v816
        %v820 = vpop.permute.xlu0 %819
        %v822 = vadd.f32 %v812, %v820
        %v823 = vadd.f32 %v813, %v820
        %v824 = vadd.f32 %v814, %v820
        %v825 = vxor.u32 %v822, 2147483648
        %v826 = vxor.u32 %v823, 2147483648
        %v827 = vxor.u32 %v824, 2147483648
        %v828 = vmul.f32 %v825, 1.442695
        %v829 = vpow.pop %v828
        %v830 = vmul.f32 %v826, 1.442695
        %v831 = vpow.pop %v830
        %v832 = vmul.f32 %v827, 1.442695
        %v833 = vpow.pop %v832
        %v834 = vadd.f32 %v829, 1.0
        %v835 = vadd.f32 %v831, 1.0
        %v836 = vadd.f32 %v833, 1.0
        %v837 = vrcp.pop %v834
        %v838 = vmul.f32 1.0, %v837
        %v839 = vrcp.pop %v835
        %v840 = vmul.f32 1.0, %v839
        %v841 = vrcp.pop %v836
        %v842 = vmul.f32 1.0, %v841
        %v843 = vmul.f32 %v822, %v838
        %v844 = vmul.f32 %v823, %v840
        %v845 = vmul.f32 %v824, %v842
        %v847 = vlaneseq
        %v848 = vshrl.u32 %v847, 7
        %v849 = vsub.s32 0, %v848
        %v850 = vrot.slane %v413, %v849
        %v851 = vlaneseq
        %v852 = vshrl.u32 %v851, 7
        %v853 = vsub.s32 1, %v852
        %v854 = vrot.slane %v413, %v853
        %v855 = vlaneseq
        %v856 = vshrl.u32 %v855, 7
        %v857 = vsub.s32 2, %v856
        %v858 = vrot.slane %v413, %v857
        %v862 = vmul.f32 %v843, %v850
        %v863 = vmul.f32 %v844, %v854
        %v864 = vmul.f32 %v845, %v858
        %868 = vrot.lane.b32.xlu0 %v862, 19
        %v869 = vpop.permute.xlu0 %868
        %870 = vrot.lane.b32.xlu0 %v863, 19
        %v871 = vpop.permute.xlu0 %870
        %872 = vrot.lane.b32.xlu0 %v864, 19
        %v873 = vpop.permute.xlu0 %872
        %vm874 = vcmask 154624
        %v875 = vsel %vm874, %v869, %v871
        %v876 = vsel %vm874, %v871, %v873
        %v880 = vsel %vm874, 0.0, %v869
        %v881 = vld [vmem:[%s5] sm:$0xff]
        %882 = vrot.lane.b32.xlu0 %v862, 18
        %v883 = vpop.permute.xlu0 %882
        %884 = vrot.lane.b32.xlu0 %v863, 18
        %v885 = vpop.permute.xlu0 %884
        %886 = vrot.lane.b32.xlu0 %v864, 18
        %v887 = vpop.permute.xlu0 %886
        %vm888 = vcmask 146432
        %v889 = vsel %vm888, %v883, %v885
        %v890 = vsel %vm888, %v885, %v887
        %v894 = vsel %vm888, 0.0, %v883
        %s895 = scalar_lea.vmem %s5, 8
        %v896 = vld [vmem:[%s895] sm:$0xff]
        %v898 = vsel %vm661, %v896, 0
        %900 = vmatprep.subr.mxu0 %v889
        %901 = vmatpush1.msra.mxu0 %v894
        %902 = vmatprep.subr.mxu0 0.0
        %903 = vmatpush1.msra.mxu0 0.0
        %904 = vmatprep.subr.mxu0 0.0
        %905 = vmatpush1.msra.mxu0 0.0
        %906 = vmatprep.subr.mxu0 0.0
        %907 = vmatpush1.msra.mxu0 0.0
        %908 = vmatprep.subr.mxu0 0.0
        %909 = vmatpush1.msra.mxu0 0.0
        %910 = vmatprep.subr.mxu0 0.0
        %911 = vmatpush1.msra.mxu0 0.0
        %912 = vmatprep.subr.mxu0 0.0
        %913 = vmatpush1.msra.mxu0 0.0
        %914 = vmatprep.subr.mxu0 0.0
        %915 = vmatpush1.msra.mxu0 0.0
        %916 = vmatprep.subr.mxu0 0.0
        %917 = vmatpush1.msra.mxu0 0.0
        %918 = vmatprep.subr.mxu0 0.0
        %919 = vmatpush1.msra.mxu0 0.0
        %920 = vmatprep.subr.mxu0 0.0
        %921 = vmatpush1.msra.mxu0 0.0
        %922 = vmatprep.subr.mxu0 0.0
        %923 = vmatpush1.msra.mxu0 0.0
        %924 = vmatprep.subr.mxu0 0.0
        %925 = vmatpush1.msra.mxu0 0.0
        %926 = vmatprep.subr.mxu0 0.0
        %927 = vmatpush1.msra.mxu0 0.0
        %928 = vmatprep.subr.mxu0 0.0
        %929 = vmatpush1.msra.mxu0 0.0
        %930 = vmatprep.subr.mxu0 0.0
        %931 = vmatpush1.msra.mxu0 0.0
        %932 = vmatprep.subr.mxu0 0.0
        %933 = vmatpush1.msra.mxu0 0.0
        %934 = vmatprep.subr.mxu0 0.0
        %935 = vmatpush1.msra.mxu0 0.0
        %936 = vmatprep.subr.mxu0 0.0
        %937 = vmatpush1.msra.mxu0 0.0
        %938 = vmatprep.subr.mxu0 0.0
        %939 = vmatpush1.msra.mxu0 0.0
        %940 = vmatprep.subr.mxu0 0.0
        %941 = vmatpush1.msra.mxu0 0.0
        %942 = vmatprep.subr.mxu0 0.0
        %943 = vmatpush1.msra.mxu0 0.0
        %944 = vmatprep.subr.mxu0 0.0
        %945 = vmatpush1.msra.mxu0 0.0
        %946 = vmatprep.subr.mxu0 0.0
        %947 = vmatpush1.msra.mxu0 0.0
        %948 = vmatprep.subr.mxu0 0.0
        %949 = vmatpush1.msra.mxu0 0.0
        %950 = vmatprep.subr.mxu0 0.0
        %951 = vmatpush1.msra.mxu0 0.0
        %952 = vmatprep.subr.mxu0 0.0
        %953 = vmatpush1.msra.mxu0 0.0
        %954 = vmatprep.subr.mxu0 0.0
        %955 = vmatpush1.msra.mxu0 0.0
        %956 = vmatprep.subr.mxu0 0.0
        %957 = vmatpush1.msra.mxu0 0.0
        %958 = vmatprep.subr.mxu0 0.0
        %959 = vmatpush1.msra.mxu0 0.0
        %960 = vmatprep.subr.mxu0 0.0
        %961 = vmatpush1.msra.mxu0 0.0
        %962 = vmatprep.subr.mxu0 0.0
        %963 = vmatpush1.msra.mxu0 0.0
        %964 = vmatprep.mubr.f32.mxu0 0.0
        %965 = vmatmul.mubr.f32.gmra.mrb[0].mxu0 %v898
        %v966 = vpop.f32.mrb[0].mxu0
        %v967 = vadd.f32 0.0, %v966
        %v968 = vpop.f32.mrb[0].mxu0
        %v969 = vadd.f32 0.0, %v968
        %970 = vdwg.mxu0
        %971 = vmatprep.subr.mxu0 0.0
        %972 = vmatpush1.msra.mxu0 %v890
        %973 = vmatprep.subr.mxu0 0.0
        %974 = vmatpush1.msra.mxu0 0.0
        %975 = vmatprep.subr.mxu0 0.0
        %976 = vmatpush1.msra.mxu0 0.0
        %977 = vmatprep.subr.mxu0 0.0
        %978 = vmatpush1.msra.mxu0 0.0
        %979 = vmatprep.subr.mxu0 0.0
        %980 = vmatpush1.msra.mxu0 0.0
        %981 = vmatprep.subr.mxu0 0.0
        %982 = vmatpush1.msra.mxu0 0.0
        %983 = vmatprep.subr.mxu0 0.0
        %984 = vmatpush1.msra.mxu0 0.0
        %985 = vmatprep.subr.mxu0 0.0
        %986 = vmatpush1.msra.mxu0 0.0
        %987 = vmatprep.subr.mxu0 0.0
        %988 = vmatpush1.msra.mxu0 0.0
        %989 = vmatprep.subr.mxu0 0.0
        %990 = vmatpush1.msra.mxu0 0.0
        %991 = vmatprep.subr.mxu0 0.0
        %992 = vmatpush1.msra.mxu0 0.0
        %993 = vmatprep.subr.mxu0 0.0
        %994 = vmatpush1.msra.mxu0 0.0
        %995 = vmatprep.subr.mxu0 0.0
        %996 = vmatpush1.msra.mxu0 0.0
        %997 = vmatprep.subr.mxu0 0.0
        %998 = vmatpush1.msra.mxu0 0.0
        %999 = vmatprep.subr.mxu0 0.0
        %1000 = vmatpush1.msra.mxu0 0.0
        %1001 = vmatprep.subr.mxu0 0.0
        %1002 = vmatpush1.msra.mxu0 0.0
        %1003 = vmatprep.subr.mxu0 0.0
        %1004 = vmatpush1.msra.mxu0 0.0
        %1005 = vmatprep.subr.mxu0 0.0
        %1006 = vmatpush1.msra.mxu0 0.0
        %1007 = vmatprep.subr.mxu0 0.0
        %1008 = vmatpush1.msra.mxu0 0.0
        %1009 = vmatprep.subr.mxu0 0.0
        %1010 = vmatpush1.msra.mxu0 0.0
        %1011 = vmatprep.subr.mxu0 0.0
        %1012 = vmatpush1.msra.mxu0 0.0
        %1013 = vmatprep.subr.mxu0 0.0
        %1014 = vmatpush1.msra.mxu0 0.0
        %1015 = vmatprep.subr.mxu0 0.0
        %1016 = vmatpush1.msra.mxu0 0.0
        %1017 = vmatprep.subr.mxu0 0.0
        %1018 = vmatpush1.msra.mxu0 0.0
        %1019 = vmatprep.subr.mxu0 0.0
        %1020 = vmatpush1.msra.mxu0 0.0
        %1021 = vmatprep.subr.mxu0 0.0
        %1022 = vmatpush1.msra.mxu0 0.0
        %1023 = vmatprep.subr.mxu0 0.0
        %1024 = vmatpush1.msra.mxu0 0.0
        %1025 = vmatprep.subr.mxu0 0.0
        %1026 = vmatpush1.msra.mxu0 0.0
        %1027 = vmatprep.subr.mxu0 0.0
        %1028 = vmatpush1.msra.mxu0 0.0
        %1029 = vmatprep.subr.mxu0 0.0
        %1030 = vmatpush1.msra.mxu0 0.0
        %1031 = vmatprep.subr.mxu0 0.0
        %1032 = vmatpush1.msra.mxu0 0.0
        %1033 = vmatprep.subr.mxu0 0.0
        %1034 = vmatpush1.msra.mxu0 0.0
        %1035 = vmatprep.mubr.f32.mxu0 0.0
        %1036 = vmatmul.mubr.f32.gmra.mrb[0].mxu0 %v898
        %v1037 = vpop.f32.mrb[0].mxu0
        %v1038 = vadd.f32 0.0, %v1037
        %v1039 = vpop.f32.mrb[0].mxu0
        %1040 = vdwg.mxu0
        %v1042 = vsel %vm661, %v881, 0
        %1044 = vmatprep.subr.mxu0 %v875
        %1045 = vmatpush1.msra.mxu0 %v880
        %1046 = vmatprep.subr.mxu0 0.0
        %1047 = vmatpush1.msra.mxu0 0.0
        %1048 = vmatprep.subr.mxu0 0.0
        %1049 = vmatpush1.msra.mxu0 0.0
        %1050 = vmatprep.subr.mxu0 0.0
        %1051 = vmatpush1.msra.mxu0 0.0
        %1052 = vmatprep.subr.mxu0 0.0
        %1053 = vmatpush1.msra.mxu0 0.0
        %1054 = vmatprep.subr.mxu0 0.0
        %1055 = vmatpush1.msra.mxu0 0.0
        %1056 = vmatprep.subr.mxu0 0.0
        %1057 = vmatpush1.msra.mxu0 0.0
        %1058 = vmatprep.subr.mxu0 0.0
        %1059 = vmatpush1.msra.mxu0 0.0
        %1060 = vmatprep.subr.mxu0 0.0
        %1061 = vmatpush1.msra.mxu0 0.0
        %1062 = vmatprep.subr.mxu0 0.0
        %1063 = vmatpush1.msra.mxu0 0.0
        %1064 = vmatprep.subr.mxu0 0.0
        %1065 = vmatpush1.msra.mxu0 0.0
        %1066 = vmatprep.subr.mxu0 0.0
        %1067 = vmatpush1.msra.mxu0 0.0
        %1068 = vmatprep.subr.mxu0 0.0
        %1069 = vmatpush1.msra.mxu0 0.0
        %1070 = vmatprep.subr.mxu0 0.0
        %1071 = vmatpush1.msra.mxu0 0.0
        %1072 = vmatprep.subr.mxu0 0.0
        %1073 = vmatpush1.msra.mxu0 0.0
        %1074 = vmatprep.subr.mxu0 0.0
        %1075 = vmatpush1.msra.mxu0 0.0
        %1076 = vmatprep.subr.mxu0 0.0
        %1077 = vmatpush1.msra.mxu0 0.0
        %1078 = vmatprep.subr.mxu0 0.0
        %1079 = vmatpush1.msra.mxu0 0.0
        %1080 = vmatprep.subr.mxu0 0.0
        %1081 = vmatpush1.msra.mxu0 0.0
        %1082 = vmatprep.subr.mxu0 0.0
        %1083 = vmatpush1.msra.mxu0 0.0
        %1084 = vmatprep.subr.mxu0 0.0
        %1085 = vmatpush1.msra.mxu0 0.0
        %1086 = vmatprep.subr.mxu0 0.0
        %1087 = vmatpush1.msra.mxu0 0.0
        %1088 = vmatprep.subr.mxu0 0.0
        %1089 = vmatpush1.msra.mxu0 0.0
        %1090 = vmatprep.subr.mxu0 0.0
        %1091 = vmatpush1.msra.mxu0 0.0
        %1092 = vmatprep.subr.mxu0 0.0
        %1093 = vmatpush1.msra.mxu0 0.0
        %1094 = vmatprep.subr.mxu0 0.0
        %1095 = vmatpush1.msra.mxu0 0.0
        %1096 = vmatprep.subr.mxu0 0.0
        %1097 = vmatpush1.msra.mxu0 0.0
        %1098 = vmatprep.subr.mxu0 0.0
        %1099 = vmatpush1.msra.mxu0 0.0
        %1100 = vmatprep.subr.mxu0 0.0
        %1101 = vmatpush1.msra.mxu0 0.0
        %1102 = vmatprep.subr.mxu0 0.0
        %1103 = vmatpush1.msra.mxu0 0.0
        %1104 = vmatprep.subr.mxu0 0.0
        %1105 = vmatpush1.msra.mxu0 0.0
        %1106 = vmatprep.subr.mxu0 0.0
        %1107 = vmatpush1.msra.mxu0 0.0
        %1108 = vmatprep.mubr.f32.mxu0 0.0
        %1109 = vmatmul.mubr.f32.gmra.mrb[0].mxu0 %v1042
        %v1110 = vpop.f32.mrb[0].mxu0
        %v1111 = vadd.f32 %v967, %v1110
        %v1112 = vpop.f32.mrb[0].mxu0
        %v1113 = vadd.f32 %v969, %v1112
        %1114 = vdwg.mxu0
        %1115 = vmatprep.subr.mxu0 0.0
        %1116 = vmatpush1.msra.mxu0 %v876
        %1117 = vmatprep.subr.mxu0 0.0
        %1118 = vmatpush1.msra.mxu0 0.0
        %1119 = vmatprep.subr.mxu0 0.0
        %1120 = vmatpush1.msra.mxu0 0.0
        %1121 = vmatprep.subr.mxu0 0.0
        %1122 = vmatpush1.msra.mxu0 0.0
        %1123 = vmatprep.subr.mxu0 0.0
        %1124 = vmatpush1.msra.mxu0 0.0
        %1125 = vmatprep.subr.mxu0 0.0
        %1126 = vmatpush1.msra.mxu0 0.0
        %1127 = vmatprep.subr.mxu0 0.0
        %1128 = vmatpush1.msra.mxu0 0.0
        %1129 = vmatprep.subr.mxu0 0.0
        %1130 = vmatpush1.msra.mxu0 0.0
        %1131 = vmatprep.subr.mxu0 0.0
        %1132 = vmatpush1.msra.mxu0 0.0
        %1133 = vmatprep.subr.mxu0 0.0
        %1134 = vmatpush1.msra.mxu0 0.0
        %1135 = vmatprep.subr.mxu0 0.0
        %1136 = vmatpush1.msra.mxu0 0.0
        %1137 = vmatprep.subr.mxu0 0.0
        %1138 = vmatpush1.msra.mxu0 0.0
        %1139 = vmatprep.subr.mxu0 0.0
        %1140 = vmatpush1.msra.mxu0 0.0
        %1141 = vmatprep.subr.mxu0 0.0
        %1142 = vmatpush1.msra.mxu0 0.0
        %1143 = vmatprep.subr.mxu0 0.0
        %1144 = vmatpush1.msra.mxu0 0.0
        %1145 = vmatprep.subr.mxu0 0.0
        %1146 = vmatpush1.msra.mxu0 0.0
        %1147 = vmatprep.subr.mxu0 0.0
        %1148 = vmatpush1.msra.mxu0 0.0
        %1149 = vmatprep.subr.mxu0 0.0
        %1150 = vmatpush1.msra.mxu0 0.0
        %1151 = vmatprep.subr.mxu0 0.0
        %1152 = vmatpush1.msra.mxu0 0.0
        %1153 = vmatprep.subr.mxu0 0.0
        %1154 = vmatpush1.msra.mxu0 0.0
        %1155 = vmatprep.subr.mxu0 0.0
        %1156 = vmatpush1.msra.mxu0 0.0
        %1157 = vmatprep.subr.mxu0 0.0
        %1158 = vmatpush1.msra.mxu0 0.0
        %1159 = vmatprep.subr.mxu0 0.0
        %1160 = vmatpush1.msra.mxu0 0.0
        %1161 = vmatprep.subr.mxu0 0.0
        %1162 = vmatpush1.msra.mxu0 0.0
        %1163 = vmatprep.subr.mxu0 0.0
        %1164 = vmatpush1.msra.mxu0 0.0
        %1165 = vmatprep.subr.mxu0 0.0
        %1166 = vmatpush1.msra.mxu0 0.0
        %1167 = vmatprep.subr.mxu0 0.0
        %1168 = vmatpush1.msra.mxu0 0.0
        %1169 = vmatprep.subr.mxu0 0.0
        %1170 = vmatpush1.msra.mxu0 0.0
        %1171 = vmatprep.subr.mxu0 0.0
        %1172 = vmatpush1.msra.mxu0 0.0
        %1173 = vmatprep.subr.mxu0 0.0
        %1174 = vmatpush1.msra.mxu0 0.0
        %1175 = vmatprep.subr.mxu0 0.0
        %1176 = vmatpush1.msra.mxu0 0.0
        %1177 = vmatprep.subr.mxu0 0.0
        %1178 = vmatpush1.msra.mxu0 0.0
        %1179 = vmatprep.mubr.f32.mxu0 0.0
        %1180 = vmatmul.mubr.f32.gmra.mrb[0].mxu0 %v1042
        %v1181 = vpop.f32.mrb[0].mxu0
        %v1182 = vadd.f32 %v1038, %v1181
        %v1183 = vpop.f32.mrb[0].mxu0
        %1184 = vdwg.mxu0
        %1185 = vrot.lane.b32.xlu0 %v862, 17
        %v1186 = vpop.permute.xlu0 %1185
        %1187 = vrot.lane.b32.xlu0 %v863, 17
        %v1188 = vpop.permute.xlu0 %1187
        %1189 = vrot.lane.b32.xlu0 %v864, 17
        %v1190 = vpop.permute.xlu0 %1189
        %vm1191 = vcmask 138240
        %v1192 = vsel %vm1191, %v1186, %v1188
        %v1193 = vsel %vm1191, %v1188, %v1190
        %v1197 = vsel %vm1191, 0.0, %v1186
        %s1198 = scalar_lea.vmem %s5, 16
        %v1199 = vld [vmem:[%s1198] sm:$0xff]
        %v1201 = vsel %vm661, %v1199, 0
        %1203 = vmatprep.subr.mxu0 %v1192
        %1204 = vmatpush1.msra.mxu0 %v1197
        %1205 = vmatprep.subr.mxu0 0.0
        %1206 = vmatpush1.msra.mxu0 0.0
        %1207 = vmatprep.subr.mxu0 0.0
        %1208 = vmatpush1.msra.mxu0 0.0
        %1209 = vmatprep.subr.mxu0 0.0
        %1210 = vmatpush1.msra.mxu0 0.0
        %1211 = vmatprep.subr.mxu0 0.0
        %1212 = vmatpush1.msra.mxu0 0.0
        %1213 = vmatprep.subr.mxu0 0.0
        %1214 = vmatpush1.msra.mxu0 0.0
        %1215 = vmatprep.subr.mxu0 0.0
        %1216 = vmatpush1.msra.mxu0 0.0
        %1217 = vmatprep.subr.mxu0 0.0
        %1218 = vmatpush1.msra.mxu0 0.0
        %1219 = vmatprep.subr.mxu0 0.0
        %1220 = vmatpush1.msra.mxu0 0.0
        %1221 = vmatprep.subr.mxu0 0.0
        %1222 = vmatpush1.msra.mxu0 0.0
        %1223 = vmatprep.subr.mxu0 0.0
        %1224 = vmatpush1.msra.mxu0 0.0
        %1225 = vmatprep.subr.mxu0 0.0
        %1226 = vmatpush1.msra.mxu0 0.0
        %1227 = vmatprep.subr.mxu0 0.0
        %1228 = vmatpush1.msra.mxu0 0.0
        %1229 = vmatprep.subr.mxu0 0.0
        %1230 = vmatpush1.msra.mxu0 0.0
        %1231 = vmatprep.subr.mxu0 0.0
        %1232 = vmatpush1.msra.mxu0 0.0
        %1233 = vmatprep.subr.mxu0 0.0
        %1234 = vmatpush1.msra.mxu0 0.0
        %1235 = vmatprep.subr.mxu0 0.0
        %1236 = vmatpush1.msra.mxu0 0.0
        %1237 = vmatprep.subr.mxu0 0.0
        %1238 = vmatpush1.msra.mxu0 0.0
        %1239 = vmatprep.subr.mxu0 0.0
        %1240 = vmatpush1.msra.mxu0 0.0
        %1241 = vmatprep.subr.mxu0 0.0
        %1242 = vmatpush1.msra.mxu0 0.0
        %1243 = vmatprep.subr.mxu0 0.0
        %1244 = vmatpush1.msra.mxu0 0.0
        %1245 = vmatprep.subr.mxu0 0.0
        %1246 = vmatpush1.msra.mxu0 0.0
        %1247 = vmatprep.subr.mxu0 0.0
        %1248 = vmatpush1.msra.mxu0 0.0
        %1249 = vmatprep.subr.mxu0 0.0
        %1250 = vmatpush1.msra.mxu0 0.0
        %1251 = vmatprep.subr.mxu0 0.0
        %1252 = vmatpush1.msra.mxu0 0.0
        %1253 = vmatprep.subr.mxu0 0.0
        %1254 = vmatpush1.msra.mxu0 0.0
        %1255 = vmatprep.subr.mxu0 0.0
        %1256 = vmatpush1.msra.mxu0 0.0
        %1257 = vmatprep.subr.mxu0 0.0
        %1258 = vmatpush1.msra.mxu0 0.0
        %1259 = vmatprep.subr.mxu0 0.0
        %1260 = vmatpush1.msra.mxu0 0.0
        %1261 = vmatprep.subr.mxu0 0.0
        %1262 = vmatpush1.msra.mxu0 0.0
        %1263 = vmatprep.subr.mxu0 0.0
        %1264 = vmatpush1.msra.mxu0 0.0
        %1265 = vmatprep.subr.mxu0 0.0
        %1266 = vmatpush1.msra.mxu0 0.0
        %1267 = vmatprep.mubr.f32.mxu0 0.0
        %1268 = vmatmul.mubr.f32.gmra.mrb[0].mxu0 %v1201
        %v1269 = vpop.f32.mrb[0].mxu0
        %v1270 = vadd.f32 0.0, %v1269
        %v1271 = vpop.f32.mrb[0].mxu0
        %v1272 = vadd.f32 0.0, %v1271
        %1273 = vdwg.mxu0
        %1274 = vmatprep.subr.mxu0 0.0
        %1275 = vmatpush1.msra.mxu0 %v1193
        %1276 = vmatprep.subr.mxu0 0.0
        %1277 = vmatpush1.msra.mxu0 0.0
        %1278 = vmatprep.subr.mxu0 0.0
        %1279 = vmatpush1.msra.mxu0 0.0
        %1280 = vmatprep.subr.mxu0 0.0
        %1281 = vmatpush1.msra.mxu0 0.0
        %1282 = vmatprep.subr.mxu0 0.0
        %1283 = vmatpush1.msra.mxu0 0.0
        %1284 = vmatprep.subr.mxu0 0.0
        %1285 = vmatpush1.msra.mxu0 0.0
        %1286 = vmatprep.subr.mxu0 0.0
        %1287 = vmatpush1.msra.mxu0 0.0
        %1288 = vmatprep.subr.mxu0 0.0
        %1289 = vmatpush1.msra.mxu0 0.0
        %1290 = vmatprep.subr.mxu0 0.0
        %1291 = vmatpush1.msra.mxu0 0.0
        %1292 = vmatprep.subr.mxu0 0.0
        %1293 = vmatpush1.msra.mxu0 0.0
        %1294 = vmatprep.subr.mxu0 0.0
        %1295 = vmatpush1.msra.mxu0 0.0
        %1296 = vmatprep.subr.mxu0 0.0
        %1297 = vmatpush1.msra.mxu0 0.0
        %1298 = vmatprep.subr.mxu0 0.0
        %1299 = vmatpush1.msra.mxu0 0.0
        %1300 = vmatprep.subr.mxu0 0.0
        %1301 = vmatpush1.msra.mxu0 0.0
        %1302 = vmatprep.subr.mxu0 0.0
        %1303 = vmatpush1.msra.mxu0 0.0
        %1304 = vmatprep.subr.mxu0 0.0
        %1305 = vmatpush1.msra.mxu0 0.0
        %1306 = vmatprep.subr.mxu0 0.0
        %1307 = vmatpush1.msra.mxu0 0.0
        %1308 = vmatprep.subr.mxu0 0.0
        %1309 = vmatpush1.msra.mxu0 0.0
        %1310 = vmatprep.subr.mxu0 0.0
        %1311 = vmatpush1.msra.mxu0 0.0
        %1312 = vmatprep.subr.mxu0 0.0
        %1313 = vmatpush1.msra.mxu0 0.0
        %1314 = vmatprep.subr.mxu0 0.0
        %1315 = vmatpush1.msra.mxu0 0.0
        %1316 = vmatprep.subr.mxu0 0.0
        %1317 = vmatpush1.msra.mxu0 0.0
        %1318 = vmatprep.subr.mxu0 0.0
        %1319 = vmatpush1.msra.mxu0 0.0
        %1320 = vmatprep.subr.mxu0 0.0
        %1321 = vmatpush1.msra.mxu0 0.0
        %1322 = vmatprep.subr.mxu0 0.0
        %1323 = vmatpush1.msra.mxu0 0.0
        %1324 = vmatprep.subr.mxu0 0.0
        %1325 = vmatpush1.msra.mxu0 0.0
        %1326 = vmatprep.subr.mxu0 0.0
        %1327 = vmatpush1.msra.mxu0 0.0
        %1328 = vmatprep.subr.mxu0 0.0
        %1329 = vmatpush1.msra.mxu0 0.0
        %1330 = vmatprep.subr.mxu0 0.0
        %1331 = vmatpush1.msra.mxu0 0.0
        %1332 = vmatprep.subr.mxu0 0.0
        %1333 = vmatpush1.msra.mxu0 0.0
        %1334 = vmatprep.subr.mxu0 0.0
        %1335 = vmatpush1.msra.mxu0 0.0
        %1336 = vmatprep.subr.mxu0 0.0
        %1337 = vmatpush1.msra.mxu0 0.0
        %1338 = vmatprep.mubr.f32.mxu0 0.0
        %1339 = vmatmul.mubr.f32.gmra.mrb[0].mxu0 %v1201
        %v1340 = vpop.f32.mrb[0].mxu0
        %v1341 = vadd.f32 0.0, %v1340
        %v1342 = vpop.f32.mrb[0].mxu0
        %1343 = vdwg.mxu0
        %v1344 = vadd.f32 %v1111, %v1270
        %v1345 = vadd.f32 %v1113, %v1272
        %v1346 = vadd.f32 %v1182, %v1341
        %1347 = vrot.lane.b32.xlu0 %v862, 1
        %v1348 = vpop.permute.xlu0 %1347
        %1349 = vrot.lane.b32.xlu0 %v863, 1
        %v1350 = vpop.permute.xlu0 %1349
        %1351 = vrot.lane.b32.xlu0 %v864, 1
        %v1352 = vpop.permute.xlu0 %1351
        %vm1353 = vcmask 7168
        %v1354 = vsel %vm1353, %v1348, %v1350
        %v1355 = vsel %vm1353, %v1350, %v1352
        %v1359 = vsel %vm1353, 0.0, %v1348
        %s1360 = scalar_lea.vmem %s5, 24
        %v1361 = vld [vmem:[%s1360] sm:$0xff]
        %v1363 = vsel %vm661, %v1361, 0
        %1365 = vmatprep.subr.mxu0 %v1354
        %1366 = vmatpush1.msra.mxu0 %v1359
        %1367 = vmatprep.subr.mxu0 0.0
        %1368 = vmatpush1.msra.mxu0 0.0
        %1369 = vmatprep.subr.mxu0 0.0
        %1370 = vmatpush1.msra.mxu0 0.0
        %1371 = vmatprep.subr.mxu0 0.0
        %1372 = vmatpush1.msra.mxu0 0.0
        %1373 = vmatprep.subr.mxu0 0.0
        %1374 = vmatpush1.msra.mxu0 0.0
        %1375 = vmatprep.subr.mxu0 0.0
        %1376 = vmatpush1.msra.mxu0 0.0
        %1377 = vmatprep.subr.mxu0 0.0
        %1378 = vmatpush1.msra.mxu0 0.0
        %1379 = vmatprep.subr.mxu0 0.0
        %1380 = vmatpush1.msra.mxu0 0.0
        %1381 = vmatprep.subr.mxu0 0.0
        %1382 = vmatpush1.msra.mxu0 0.0
        %1383 = vmatprep.subr.mxu0 0.0
        %1384 = vmatpush1.msra.mxu0 0.0
        %1385 = vmatprep.subr.mxu0 0.0
        %1386 = vmatpush1.msra.mxu0 0.0
        %1387 = vmatprep.subr.mxu0 0.0
        %1388 = vmatpush1.msra.mxu0 0.0
        %1389 = vmatprep.subr.mxu0 0.0
        %1390 = vmatpush1.msra.mxu0 0.0
        %1391 = vmatprep.subr.mxu0 0.0
        %1392 = vmatpush1.msra.mxu0 0.0
        %1393 = vmatprep.subr.mxu0 0.0
        %1394 = vmatpush1.msra.mxu0 0.0
        %1395 = vmatprep.subr.mxu0 0.0
        %1396 = vmatpush1.msra.mxu0 0.0
        %1397 = vmatprep.subr.mxu0 0.0
        %1398 = vmatpush1.msra.mxu0 0.0
        %1399 = vmatprep.subr.mxu0 0.0
        %1400 = vmatpush1.msra.mxu0 0.0
        %1401 = vmatprep.subr.mxu0 0.0
        %1402 = vmatpush1.msra.mxu0 0.0
        %1403 = vmatprep.subr.mxu0 0.0
        %1404 = vmatpush1.msra.mxu0 0.0
        %1405 = vmatprep.subr.mxu0 0.0
        %1406 = vmatpush1.msra.mxu0 0.0
        %1407 = vmatprep.subr.mxu0 0.0
        %1408 = vmatpush1.msra.mxu0 0.0
        %1409 = vmatprep.subr.mxu0 0.0
        %1410 = vmatpush1.msra.mxu0 0.0
        %1411 = vmatprep.subr.mxu0 0.0
        %1412 = vmatpush1.msra.mxu0 0.0
        %1413 = vmatprep.subr.mxu0 0.0
        %1414 = vmatpush1.msra.mxu0 0.0
        %1415 = vmatprep.subr.mxu0 0.0
        %1416 = vmatpush1.msra.mxu0 0.0
        %1417 = vmatprep.subr.mxu0 0.0
        %1418 = vmatpush1.msra.mxu0 0.0
        %1419 = vmatprep.subr.mxu0 0.0
        %1420 = vmatpush1.msra.mxu0 0.0
        %1421 = vmatprep.subr.mxu0 0.0
        %1422 = vmatpush1.msra.mxu0 0.0
        %1423 = vmatprep.subr.mxu0 0.0
        %1424 = vmatpush1.msra.mxu0 0.0
        %1425 = vmatprep.subr.mxu0 0.0
        %1426 = vmatpush1.msra.mxu0 0.0
        %1427 = vmatprep.subr.mxu0 0.0
        %1428 = vmatpush1.msra.mxu0 0.0
        %1429 = vmatprep.mubr.f32.mxu0 0.0
        %1430 = vmatmul.mubr.f32.gmra.mrb[0].mxu0 %v1363
        %v1431 = vpop.f32.mrb[0].mxu0
        %v1432 = vadd.f32 0.0, %v1431
        %v1433 = vpop.f32.mrb[0].mxu0
        %v1434 = vadd.f32 0.0, %v1433
        %1435 = vdwg.mxu0
        %1436 = vmatprep.subr.mxu0 0.0
        %1437 = vmatpush1.msra.mxu0 %v1355
        %1438 = vmatprep.subr.mxu0 0.0
        %1439 = vmatpush1.msra.mxu0 0.0
        %1440 = vmatprep.subr.mxu0 0.0
        %1441 = vmatpush1.msra.mxu0 0.0
        %1442 = vmatprep.subr.mxu0 0.0
        %1443 = vmatpush1.msra.mxu0 0.0
        %1444 = vmatprep.subr.mxu0 0.0
        %1445 = vmatpush1.msra.mxu0 0.0
        %1446 = vmatprep.subr.mxu0 0.0
        %1447 = vmatpush1.msra.mxu0 0.0
        %1448 = vmatprep.subr.mxu0 0.0
        %1449 = vmatpush1.msra.mxu0 0.0
        %1450 = vmatprep.subr.mxu0 0.0
        %1451 = vmatpush1.msra.mxu0 0.0
        %1452 = vmatprep.subr.mxu0 0.0
        %1453 = vmatpush1.msra.mxu0 0.0
        %1454 = vmatprep.subr.mxu0 0.0
        %1455 = vmatpush1.msra.mxu0 0.0
        %1456 = vmatprep.subr.mxu0 0.0
        %1457 = vmatpush1.msra.mxu0 0.0
        %1458 = vmatprep.subr.mxu0 0.0
        %1459 = vmatpush1.msra.mxu0 0.0
        %1460 = vmatprep.subr.mxu0 0.0
        %1461 = vmatpush1.msra.mxu0 0.0
        %1462 = vmatprep.subr.mxu0 0.0
        %1463 = vmatpush1.msra.mxu0 0.0
        %1464 = vmatprep.subr.mxu0 0.0
        %1465 = vmatpush1.msra.mxu0 0.0
        %1466 = vmatprep.subr.mxu0 0.0
        %1467 = vmatpush1.msra.mxu0 0.0
        %1468 = vmatprep.subr.mxu0 0.0
        %1469 = vmatpush1.msra.mxu0 0.0
        %1470 = vmatprep.subr.mxu0 0.0
        %1471 = vmatpush1.msra.mxu0 0.0
        %1472 = vmatprep.subr.mxu0 0.0
        %1473 = vmatpush1.msra.mxu0 0.0
        %1474 = vmatprep.subr.mxu0 0.0
        %1475 = vmatpush1.msra.mxu0 0.0
        %1476 = vmatprep.subr.mxu0 0.0
        %1477 = vmatpush1.msra.mxu0 0.0
        %1478 = vmatprep.subr.mxu0 0.0
        %1479 = vmatpush1.msra.mxu0 0.0
        %1480 = vmatprep.subr.mxu0 0.0
        %1481 = vmatpush1.msra.mxu0 0.0
        %1482 = vmatprep.subr.mxu0 0.0
        %1483 = vmatpush1.msra.mxu0 0.0
        %1484 = vmatprep.subr.mxu0 0.0
        %1485 = vmatpush1.msra.mxu0 0.0
        %1486 = vmatprep.subr.mxu0 0.0
        %1487 = vmatpush1.msra.mxu0 0.0
        %1488 = vmatprep.subr.mxu0 0.0
        %1489 = vmatpush1.msra.mxu0 0.0
        %1490 = vmatprep.subr.mxu0 0.0
        %1491 = vmatpush1.msra.mxu0 0.0
        %1492 = vmatprep.subr.mxu0 0.0
        %1493 = vmatpush1.msra.mxu0 0.0
        %1494 = vmatprep.subr.mxu0 0.0
        %1495 = vmatpush1.msra.mxu0 0.0
        %1496 = vmatprep.subr.mxu0 0.0
        %1497 = vmatpush1.msra.mxu0 0.0
        %1498 = vmatprep.subr.mxu0 0.0
        %1499 = vmatpush1.msra.mxu0 0.0
        %1500 = vmatprep.mubr.f32.mxu0 0.0
        %1501 = vmatmul.mubr.f32.gmra.mrb[0].mxu0 %v1363
        %v1502 = vpop.f32.mrb[0].mxu0
        %v1503 = vadd.f32 0.0, %v1502
        %v1504 = vpop.f32.mrb[0].mxu0
        %1505 = vdwg.mxu0
        %v1506 = vadd.f32 %v1344, %v1432
        %v1507 = vadd.f32 %v1345, %v1434
        %v1508 = vadd.f32 %v1346, %v1503
        %s1509 = scalar_lea.vmem %s5, 32
        %v1510 = vld [vmem:[%s1509] sm:$0xff]
        %v1512 = vsel %vm661, %v1510, 0
        %1514 = vmatprep.subr.mxu0 %v863
        %1515 = vmatpush1.msra.mxu0 %v862
        %1516 = vmatprep.subr.mxu0 0.0
        %1517 = vmatpush1.msra.mxu0 0.0
        %1518 = vmatprep.subr.mxu0 0.0
        %1519 = vmatpush1.msra.mxu0 0.0
        %1520 = vmatprep.subr.mxu0 0.0
        %1521 = vmatpush1.msra.mxu0 0.0
        %1522 = vmatprep.subr.mxu0 0.0
        %1523 = vmatpush1.msra.mxu0 0.0
        %1524 = vmatprep.subr.mxu0 0.0
        %1525 = vmatpush1.msra.mxu0 0.0
        %1526 = vmatprep.subr.mxu0 0.0
        %1527 = vmatpush1.msra.mxu0 0.0
        %1528 = vmatprep.subr.mxu0 0.0
        %1529 = vmatpush1.msra.mxu0 0.0
        %1530 = vmatprep.subr.mxu0 0.0
        %1531 = vmatpush1.msra.mxu0 0.0
        %1532 = vmatprep.subr.mxu0 0.0
        %1533 = vmatpush1.msra.mxu0 0.0
        %1534 = vmatprep.subr.mxu0 0.0
        %1535 = vmatpush1.msra.mxu0 0.0
        %1536 = vmatprep.subr.mxu0 0.0
        %1537 = vmatpush1.msra.mxu0 0.0
        %1538 = vmatprep.subr.mxu0 0.0
        %1539 = vmatpush1.msra.mxu0 0.0
        %1540 = vmatprep.subr.mxu0 0.0
        %1541 = vmatpush1.msra.mxu0 0.0
        %1542 = vmatprep.subr.mxu0 0.0
        %1543 = vmatpush1.msra.mxu0 0.0
        %1544 = vmatprep.subr.mxu0 0.0
        %1545 = vmatpush1.msra.mxu0 0.0
        %1546 = vmatprep.subr.mxu0 0.0
        %1547 = vmatpush1.msra.mxu0 0.0
        %1548 = vmatprep.subr.mxu0 0.0
        %1549 = vmatpush1.msra.mxu0 0.0
        %1550 = vmatprep.subr.mxu0 0.0
        %1551 = vmatpush1.msra.mxu0 0.0
        %1552 = vmatprep.subr.mxu0 0.0
        %1553 = vmatpush1.msra.mxu0 0.0
        %1554 = vmatprep.subr.mxu0 0.0
        %1555 = vmatpush1.msra.mxu0 0.0
        %1556 = vmatprep.subr.mxu0 0.0
        %1557 = vmatpush1.msra.mxu0 0.0
        %1558 = vmatprep.subr.mxu0 0.0
        %1559 = vmatpush1.msra.mxu0 0.0
        %1560 = vmatprep.subr.mxu0 0.0
        %1561 = vmatpush1.msra.mxu0 0.0
        %1562 = vmatprep.subr.mxu0 0.0
        %1563 = vmatpush1.msra.mxu0 0.0
        %1564 = vmatprep.subr.mxu0 0.0
        %1565 = vmatpush1.msra.mxu0 0.0
        %1566 = vmatprep.subr.mxu0 0.0
        %1567 = vmatpush1.msra.mxu0 0.0
        %1568 = vmatprep.subr.mxu0 0.0
        %1569 = vmatpush1.msra.mxu0 0.0
        %1570 = vmatprep.subr.mxu0 0.0
        %1571 = vmatpush1.msra.mxu0 0.0
        %1572 = vmatprep.subr.mxu0 0.0
        %1573 = vmatpush1.msra.mxu0 0.0
        %1574 = vmatprep.subr.mxu0 0.0
        %1575 = vmatpush1.msra.mxu0 0.0
        %1576 = vmatprep.subr.mxu0 0.0
        %1577 = vmatpush1.msra.mxu0 0.0
        %1578 = vmatprep.mubr.f32.mxu0 0.0
        %1579 = vmatmul.mubr.f32.gmra.mrb[0].mxu0 %v1512
        %v1580 = vpop.f32.mrb[0].mxu0
        %v1581 = vadd.f32 0.0, %v1580
        %v1582 = vpop.f32.mrb[0].mxu0
        %v1583 = vadd.f32 0.0, %v1582
        %1584 = vdwg.mxu0
        %1585 = vmatprep.subr.mxu0 0.0
        %1586 = vmatpush1.msra.mxu0 %v864
        %1587 = vmatprep.subr.mxu0 0.0
        %1588 = vmatpush1.msra.mxu0 0.0
        %1589 = vmatprep.subr.mxu0 0.0
        %1590 = vmatpush1.msra.mxu0 0.0
        %1591 = vmatprep.subr.mxu0 0.0
        %1592 = vmatpush1.msra.mxu0 0.0
        %1593 = vmatprep.subr.mxu0 0.0
        %1594 = vmatpush1.msra.mxu0 0.0
        %1595 = vmatprep.subr.mxu0 0.0
        %1596 = vmatpush1.msra.mxu0 0.0
        %1597 = vmatprep.subr.mxu0 0.0
        %1598 = vmatpush1.msra.mxu0 0.0
        %1599 = vmatprep.subr.mxu0 0.0
        %1600 = vmatpush1.msra.mxu0 0.0
        %1601 = vmatprep.subr.mxu0 0.0
        %1602 = vmatpush1.msra.mxu0 0.0
        %1603 = vmatprep.subr.mxu0 0.0
        %1604 = vmatpush1.msra.mxu0 0.0
        %1605 = vmatprep.subr.mxu0 0.0
        %1606 = vmatpush1.msra.mxu0 0.0
        %1607 = vmatprep.subr.mxu0 0.0
        %1608 = vmatpush1.msra.mxu0 0.0
        %1609 = vmatprep.subr.mxu0 0.0
        %1610 = vmatpush1.msra.mxu0 0.0
        %1611 = vmatprep.subr.mxu0 0.0
        %1612 = vmatpush1.msra.mxu0 0.0
        %1613 = vmatprep.subr.mxu0 0.0
        %1614 = vmatpush1.msra.mxu0 0.0
        %1615 = vmatprep.subr.mxu0 0.0
        %1616 = vmatpush1.msra.mxu0 0.0
        %1617 = vmatprep.subr.mxu0 0.0
        %1618 = vmatpush1.msra.mxu0 0.0
        %1619 = vmatprep.subr.mxu0 0.0
        %1620 = vmatpush1.msra.mxu0 0.0
        %1621 = vmatprep.subr.mxu0 0.0
        %1622 = vmatpush1.msra.mxu0 0.0
        %1623 = vmatprep.subr.mxu0 0.0
        %1624 = vmatpush1.msra.mxu0 0.0
        %1625 = vmatprep.subr.mxu0 0.0
        %1626 = vmatpush1.msra.mxu0 0.0
        %1627 = vmatprep.subr.mxu0 0.0
        %1628 = vmatpush1.msra.mxu0 0.0
        %1629 = vmatprep.subr.mxu0 0.0
        %1630 = vmatpush1.msra.mxu0 0.0
        %1631 = vmatprep.subr.mxu0 0.0
        %1632 = vmatpush1.msra.mxu0 0.0
        %1633 = vmatprep.subr.mxu0 0.0
        %1634 = vmatpush1.msra.mxu0 0.0
        %1635 = vmatprep.subr.mxu0 0.0
        %1636 = vmatpush1.msra.mxu0 0.0
        %1637 = vmatprep.subr.mxu0 0.0
        %1638 = vmatpush1.msra.mxu0 0.0
        %1639 = vmatprep.subr.mxu0 0.0
        %1640 = vmatpush1.msra.mxu0 0.0
        %1641 = vmatprep.subr.mxu0 0.0
        %1642 = vmatpush1.msra.mxu0 0.0
        %1643 = vmatprep.subr.mxu0 0.0
        %1644 = vmatpush1.msra.mxu0 0.0
        %1645 = vmatprep.subr.mxu0 0.0
        %1646 = vmatpush1.msra.mxu0 0.0
        %1647 = vmatprep.subr.mxu0 0.0
        %1648 = vmatpush1.msra.mxu0 0.0
        %1649 = vmatprep.mubr.f32.mxu0 0.0
        %1650 = vmatmul.mubr.f32.gmra.mrb[0].mxu0 %v1512
        %v1651 = vpop.f32.mrb[0].mxu0
        %v1652 = vadd.f32 0.0, %v1651
        %v1653 = vpop.f32.mrb[0].mxu0
        %1654 = vdwg.mxu0
        %v1655 = vadd.f32 %v1506, %v1581
        %v1656 = vadd.f32 %v1507, %v1583
        %v1657 = vadd.f32 %v1508, %v1652
        %1658 = vrot.lane.b32.xlu0 %v862, 127
        %v1659 = vpop.permute.xlu0 %1658
        %1660 = vrot.lane.b32.xlu0 %v863, 127
        %v1661 = vpop.permute.xlu0 %1660
        %1662 = vrot.lane.b32.xlu0 %v864, 127
        %v1663 = vpop.permute.xlu0 %1662
        %vm1664 = vcmask 1039360
        %v1665 = vsel %vm1664, %v1659, %v1661
        %v1666 = vsel %vm1664, %v1661, %v1663
        %v1670 = vsel %vm1664, %v1663, 0.0
        %s1671 = scalar_lea.vmem %s5, 40
        %v1672 = vld [vmem:[%s1671] sm:$0xff]
        %v1674 = vsel %vm661, %v1672, 0
        %1676 = vmatprep.subr.mxu0 %v1666
        %1677 = vmatpush1.msra.mxu0 %v1665
        %1678 = vmatprep.subr.mxu0 0.0
        %1679 = vmatpush1.msra.mxu0 0.0
        %1680 = vmatprep.subr.mxu0 0.0
        %1681 = vmatpush1.msra.mxu0 0.0
        %1682 = vmatprep.subr.mxu0 0.0
        %1683 = vmatpush1.msra.mxu0 0.0
        %1684 = vmatprep.subr.mxu0 0.0
        %1685 = vmatpush1.msra.mxu0 0.0
        %1686 = vmatprep.subr.mxu0 0.0
        %1687 = vmatpush1.msra.mxu0 0.0
        %1688 = vmatprep.subr.mxu0 0.0
        %1689 = vmatpush1.msra.mxu0 0.0
        %1690 = vmatprep.subr.mxu0 0.0
        %1691 = vmatpush1.msra.mxu0 0.0
        %1692 = vmatprep.subr.mxu0 0.0
        %1693 = vmatpush1.msra.mxu0 0.0
        %1694 = vmatprep.subr.mxu0 0.0
        %1695 = vmatpush1.msra.mxu0 0.0
        %1696 = vmatprep.subr.mxu0 0.0
        %1697 = vmatpush1.msra.mxu0 0.0
        %1698 = vmatprep.subr.mxu0 0.0
        %1699 = vmatpush1.msra.mxu0 0.0
        %1700 = vmatprep.subr.mxu0 0.0
        %1701 = vmatpush1.msra.mxu0 0.0
        %1702 = vmatprep.subr.mxu0 0.0
        %1703 = vmatpush1.msra.mxu0 0.0
        %1704 = vmatprep.subr.mxu0 0.0
        %1705 = vmatpush1.msra.mxu0 0.0
        %1706 = vmatprep.subr.mxu0 0.0
        %1707 = vmatpush1.msra.mxu0 0.0
        %1708 = vmatprep.subr.mxu0 0.0
        %1709 = vmatpush1.msra.mxu0 0.0
        %1710 = vmatprep.subr.mxu0 0.0
        %1711 = vmatpush1.msra.mxu0 0.0
        %1712 = vmatprep.subr.mxu0 0.0
        %1713 = vmatpush1.msra.mxu0 0.0
        %1714 = vmatprep.subr.mxu0 0.0
        %1715 = vmatpush1.msra.mxu0 0.0
        %1716 = vmatprep.subr.mxu0 0.0
        %1717 = vmatpush1.msra.mxu0 0.0
        %1718 = vmatprep.subr.mxu0 0.0
        %1719 = vmatpush1.msra.mxu0 0.0
        %1720 = vmatprep.subr.mxu0 0.0
        %1721 = vmatpush1.msra.mxu0 0.0
        %1722 = vmatprep.subr.mxu0 0.0
        %1723 = vmatpush1.msra.mxu0 0.0
        %1724 = vmatprep.subr.mxu0 0.0
        %1725 = vmatpush1.msra.mxu0 0.0
        %1726 = vmatprep.subr.mxu0 0.0
        %1727 = vmatpush1.msra.mxu0 0.0
        %1728 = vmatprep.subr.mxu0 0.0
        %1729 = vmatpush1.msra.mxu0 0.0
        %1730 = vmatprep.subr.mxu0 0.0
        %1731 = vmatpush1.msra.mxu0 0.0
        %1732 = vmatprep.subr.mxu0 0.0
        %1733 = vmatpush1.msra.mxu0 0.0
        %1734 = vmatprep.subr.mxu0 0.0
        %1735 = vmatpush1.msra.mxu0 0.0
        %1736 = vmatprep.subr.mxu0 0.0
        %1737 = vmatpush1.msra.mxu0 0.0
        %1738 = vmatprep.subr.mxu0 0.0
        %1739 = vmatpush1.msra.mxu0 0.0
        %1740 = vmatprep.mubr.f32.mxu0 0.0
        %1741 = vmatmul.mubr.f32.gmra.mrb[0].mxu0 %v1674
        %v1742 = vpop.f32.mrb[0].mxu0
        %v1743 = vadd.f32 0.0, %v1742
        %v1744 = vpop.f32.mrb[0].mxu0
        %v1745 = vadd.f32 0.0, %v1744
        %1746 = vdwg.mxu0
        %1747 = vmatprep.subr.mxu0 0.0
        %1748 = vmatpush1.msra.mxu0 %v1670
        %1749 = vmatprep.subr.mxu0 0.0
        %1750 = vmatpush1.msra.mxu0 0.0
        %1751 = vmatprep.subr.mxu0 0.0
        %1752 = vmatpush1.msra.mxu0 0.0
        %1753 = vmatprep.subr.mxu0 0.0
        %1754 = vmatpush1.msra.mxu0 0.0
        %1755 = vmatprep.subr.mxu0 0.0
        %1756 = vmatpush1.msra.mxu0 0.0
        %1757 = vmatprep.subr.mxu0 0.0
        %1758 = vmatpush1.msra.mxu0 0.0
        %1759 = vmatprep.subr.mxu0 0.0
        %1760 = vmatpush1.msra.mxu0 0.0
        %1761 = vmatprep.subr.mxu0 0.0
        %1762 = vmatpush1.msra.mxu0 0.0
        %1763 = vmatprep.subr.mxu0 0.0
        %1764 = vmatpush1.msra.mxu0 0.0
        %1765 = vmatprep.subr.mxu0 0.0
        %1766 = vmatpush1.msra.mxu0 0.0
        %1767 = vmatprep.subr.mxu0 0.0
        %1768 = vmatpush1.msra.mxu0 0.0
        %1769 = vmatprep.subr.mxu0 0.0
        %1770 = vmatpush1.msra.mxu0 0.0
        %1771 = vmatprep.subr.mxu0 0.0
        %1772 = vmatpush1.msra.mxu0 0.0
        %1773 = vmatprep.subr.mxu0 0.0
        %1774 = vmatpush1.msra.mxu0 0.0
        %1775 = vmatprep.subr.mxu0 0.0
        %1776 = vmatpush1.msra.mxu0 0.0
        %1777 = vmatprep.subr.mxu0 0.0
        %1778 = vmatpush1.msra.mxu0 0.0
        %1779 = vmatprep.subr.mxu0 0.0
        %1780 = vmatpush1.msra.mxu0 0.0
        %1781 = vmatprep.subr.mxu0 0.0
        %1782 = vmatpush1.msra.mxu0 0.0
        %1783 = vmatprep.subr.mxu0 0.0
        %1784 = vmatpush1.msra.mxu0 0.0
        %1785 = vmatprep.subr.mxu0 0.0
        %1786 = vmatpush1.msra.mxu0 0.0
        %1787 = vmatprep.subr.mxu0 0.0
        %1788 = vmatpush1.msra.mxu0 0.0
        %1789 = vmatprep.subr.mxu0 0.0
        %1790 = vmatpush1.msra.mxu0 0.0
        %1791 = vmatprep.subr.mxu0 0.0
        %1792 = vmatpush1.msra.mxu0 0.0
        %1793 = vmatprep.subr.mxu0 0.0
        %1794 = vmatpush1.msra.mxu0 0.0
        %1795 = vmatprep.subr.mxu0 0.0
        %1796 = vmatpush1.msra.mxu0 0.0
        %1797 = vmatprep.subr.mxu0 0.0
        %1798 = vmatpush1.msra.mxu0 0.0
        %1799 = vmatprep.subr.mxu0 0.0
        %1800 = vmatpush1.msra.mxu0 0.0
        %1801 = vmatprep.subr.mxu0 0.0
        %1802 = vmatpush1.msra.mxu0 0.0
        %1803 = vmatprep.subr.mxu0 0.0
        %1804 = vmatpush1.msra.mxu0 0.0
        %1805 = vmatprep.subr.mxu0 0.0
        %1806 = vmatpush1.msra.mxu0 0.0
        %1807 = vmatprep.subr.mxu0 0.0
        %1808 = vmatpush1.msra.mxu0 0.0
        %1809 = vmatprep.subr.mxu0 0.0
        %1810 = vmatpush1.msra.mxu0 0.0
        %1811 = vmatprep.mubr.f32.mxu0 0.0
        %1812 = vmatmul.mubr.f32.gmra.mrb[0].mxu0 %v1674
        %v1813 = vpop.f32.mrb[0].mxu0
        %v1814 = vadd.f32 0.0, %v1813
        %v1815 = vpop.f32.mrb[0].mxu0
        %1816 = vdwg.mxu0
        %v1817 = vadd.f32 %v1655, %v1743
        %v1818 = vadd.f32 %v1656, %v1745
        %v1819 = vadd.f32 %v1657, %v1814
        %1820 = vrot.lane.b32.xlu0 %v862, 111
        %v1821 = vpop.permute.xlu0 %1820
        %1822 = vrot.lane.b32.xlu0 %v863, 111
        %v1823 = vpop.permute.xlu0 %1822
        %1824 = vrot.lane.b32.xlu0 %v864, 111
        %v1825 = vpop.permute.xlu0 %1824
        %vm1826 = vcmask 908288
        %v1827 = vsel %vm1826, %v1821, %v1823
        %v1828 = vsel %vm1826, %v1823, %v1825
        %v1832 = vsel %vm1826, %v1825, 0.0
        %s1833 = scalar_lea.vmem %s5, 48
        %v1834 = vld [vmem:[%s1833] sm:$0xff]
        %v1836 = vsel %vm661, %v1834, 0
        %1838 = vmatprep.subr.mxu0 %v1828
        %1839 = vmatpush1.msra.mxu0 %v1827
        %1840 = vmatprep.subr.mxu0 0.0
        %1841 = vmatpush1.msra.mxu0 0.0
        %1842 = vmatprep.subr.mxu0 0.0
        %1843 = vmatpush1.msra.mxu0 0.0
        %1844 = vmatprep.subr.mxu0 0.0
        %1845 = vmatpush1.msra.mxu0 0.0
        %1846 = vmatprep.subr.mxu0 0.0
        %1847 = vmatpush1.msra.mxu0 0.0
        %1848 = vmatprep.subr.mxu0 0.0
        %1849 = vmatpush1.msra.mxu0 0.0
        %1850 = vmatprep.subr.mxu0 0.0
        %1851 = vmatpush1.msra.mxu0 0.0
        %1852 = vmatprep.subr.mxu0 0.0
        %1853 = vmatpush1.msra.mxu0 0.0
        %1854 = vmatprep.subr.mxu0 0.0
        %1855 = vmatpush1.msra.mxu0 0.0
        %1856 = vmatprep.subr.mxu0 0.0
        %1857 = vmatpush1.msra.mxu0 0.0
        %1858 = vmatprep.subr.mxu0 0.0
        %1859 = vmatpush1.msra.mxu0 0.0
        %1860 = vmatprep.subr.mxu0 0.0
        %1861 = vmatpush1.msra.mxu0 0.0
        %1862 = vmatprep.subr.mxu0 0.0
        %1863 = vmatpush1.msra.mxu0 0.0
        %1864 = vmatprep.subr.mxu0 0.0
        %1865 = vmatpush1.msra.mxu0 0.0
        %1866 = vmatprep.subr.mxu0 0.0
        %1867 = vmatpush1.msra.mxu0 0.0
        %1868 = vmatprep.subr.mxu0 0.0
        %1869 = vmatpush1.msra.mxu0 0.0
        %1870 = vmatprep.subr.mxu0 0.0
        %1871 = vmatpush1.msra.mxu0 0.0
        %1872 = vmatprep.subr.mxu0 0.0
        %1873 = vmatpush1.msra.mxu0 0.0
        %1874 = vmatprep.subr.mxu0 0.0
        %1875 = vmatpush1.msra.mxu0 0.0
        %1876 = vmatprep.subr.mxu0 0.0
        %1877 = vmatpush1.msra.mxu0 0.0
        %1878 = vmatprep.subr.mxu0 0.0
        %1879 = vmatpush1.msra.mxu0 0.0
        %1880 = vmatprep.subr.mxu0 0.0
        %1881 = vmatpush1.msra.mxu0 0.0
        %1882 = vmatprep.subr.mxu0 0.0
        %1883 = vmatpush1.msra.mxu0 0.0
        %1884 = vmatprep.subr.mxu0 0.0
        %1885 = vmatpush1.msra.mxu0 0.0
        %1886 = vmatprep.subr.mxu0 0.0
        %1887 = vmatpush1.msra.mxu0 0.0
        %1888 = vmatprep.subr.mxu0 0.0
        %1889 = vmatpush1.msra.mxu0 0.0
        %1890 = vmatprep.subr.mxu0 0.0
        %1891 = vmatpush1.msra.mxu0 0.0
        %1892 = vmatprep.subr.mxu0 0.0
        %1893 = vmatpush1.msra.mxu0 0.0
        %1894 = vmatprep.subr.mxu0 0.0
        %1895 = vmatpush1.msra.mxu0 0.0
        %1896 = vmatprep.subr.mxu0 0.0
        %1897 = vmatpush1.msra.mxu0 0.0
        %1898 = vmatprep.subr.mxu0 0.0
        %1899 = vmatpush1.msra.mxu0 0.0
        %1900 = vmatprep.subr.mxu0 0.0
        %1901 = vmatpush1.msra.mxu0 0.0
        %1902 = vmatprep.mubr.f32.mxu0 0.0
        %1903 = vmatmul.mubr.f32.gmra.mrb[0].mxu0 %v1836
        %v1904 = vpop.f32.mrb[0].mxu0
        %v1905 = vadd.f32 0.0, %v1904
        %v1906 = vpop.f32.mrb[0].mxu0
        %v1907 = vadd.f32 0.0, %v1906
        %1908 = vdwg.mxu0
        %1909 = vmatprep.subr.mxu0 0.0
        %1910 = vmatpush1.msra.mxu0 %v1832
        %1911 = vmatprep.subr.mxu0 0.0
        %1912 = vmatpush1.msra.mxu0 0.0
        %1913 = vmatprep.subr.mxu0 0.0
        %1914 = vmatpush1.msra.mxu0 0.0
        %1915 = vmatprep.subr.mxu0 0.0
        %1916 = vmatpush1.msra.mxu0 0.0
        %1917 = vmatprep.subr.mxu0 0.0
        %1918 = vmatpush1.msra.mxu0 0.0
        %1919 = vmatprep.subr.mxu0 0.0
        %1920 = vmatpush1.msra.mxu0 0.0
        %1921 = vmatprep.subr.mxu0 0.0
        %1922 = vmatpush1.msra.mxu0 0.0
        %1923 = vmatprep.subr.mxu0 0.0
        %1924 = vmatpush1.msra.mxu0 0.0
        %1925 = vmatprep.subr.mxu0 0.0
        %1926 = vmatpush1.msra.mxu0 0.0
        %1927 = vmatprep.subr.mxu0 0.0
        %1928 = vmatpush1.msra.mxu0 0.0
        %1929 = vmatprep.subr.mxu0 0.0
        %1930 = vmatpush1.msra.mxu0 0.0
        %1931 = vmatprep.subr.mxu0 0.0
        %1932 = vmatpush1.msra.mxu0 0.0
        %1933 = vmatprep.subr.mxu0 0.0
        %1934 = vmatpush1.msra.mxu0 0.0
        %1935 = vmatprep.subr.mxu0 0.0
        %1936 = vmatpush1.msra.mxu0 0.0
        %1937 = vmatprep.subr.mxu0 0.0
        %1938 = vmatpush1.msra.mxu0 0.0
        %1939 = vmatprep.subr.mxu0 0.0
        %1940 = vmatpush1.msra.mxu0 0.0
        %1941 = vmatprep.subr.mxu0 0.0
        %1942 = vmatpush1.msra.mxu0 0.0
        %1943 = vmatprep.subr.mxu0 0.0
        %1944 = vmatpush1.msra.mxu0 0.0
        %1945 = vmatprep.subr.mxu0 0.0
        %1946 = vmatpush1.msra.mxu0 0.0
        %1947 = vmatprep.subr.mxu0 0.0
        %1948 = vmatpush1.msra.mxu0 0.0
        %1949 = vmatprep.subr.mxu0 0.0
        %1950 = vmatpush1.msra.mxu0 0.0
        %1951 = vmatprep.subr.mxu0 0.0
        %1952 = vmatpush1.msra.mxu0 0.0
        %1953 = vmatprep.subr.mxu0 0.0
        %1954 = vmatpush1.msra.mxu0 0.0
        %1955 = vmatprep.subr.mxu0 0.0
        %1956 = vmatpush1.msra.mxu0 0.0
        %1957 = vmatprep.subr.mxu0 0.0
        %1958 = vmatpush1.msra.mxu0 0.0
        %1959 = vmatprep.subr.mxu0 0.0
        %1960 = vmatpush1.msra.mxu0 0.0
        %1961 = vmatprep.subr.mxu0 0.0
        %1962 = vmatpush1.msra.mxu0 0.0
        %1963 = vmatprep.subr.mxu0 0.0
        %1964 = vmatpush1.msra.mxu0 0.0
        %1965 = vmatprep.subr.mxu0 0.0
        %1966 = vmatpush1.msra.mxu0 0.0
        %1967 = vmatprep.subr.mxu0 0.0
        %1968 = vmatpush1.msra.mxu0 0.0
        %1969 = vmatprep.subr.mxu0 0.0
        %1970 = vmatpush1.msra.mxu0 0.0
        %1971 = vmatprep.subr.mxu0 0.0
        %1972 = vmatpush1.msra.mxu0 0.0
        %1973 = vmatprep.mubr.f32.mxu0 0.0
        %1974 = vmatmul.mubr.f32.gmra.mrb[0].mxu0 %v1836
        %v1975 = vpop.f32.mrb[0].mxu0
        %v1976 = vadd.f32 0.0, %v1975
        %v1977 = vpop.f32.mrb[0].mxu0
        %1978 = vdwg.mxu0
        %v1979 = vadd.f32 %v1817, %v1905
        %v1980 = vadd.f32 %v1818, %v1907
        %v1981 = vadd.f32 %v1819, %v1976
        %1982 = vrot.lane.b32.xlu0 %v862, 110
        %v1983 = vpop.permute.xlu0 %1982
        %1984 = vrot.lane.b32.xlu0 %v863, 110
        %v1985 = vpop.permute.xlu0 %1984
        %1986 = vrot.lane.b32.xlu0 %v864, 110
        %v1987 = vpop.permute.xlu0 %1986
        %vm1988 = vcmask 900096
        %v1989 = vsel %vm1988, %v1983, %v1985
        %v1990 = vsel %vm1988, %v1985, %v1987
        %v1994 = vsel %vm1988, %v1987, 0.0
        %s1995 = scalar_lea.vmem %s5, 56
        %v1996 = vld [vmem:[%s1995] sm:$0xff]
        %v1998 = vsel %vm661, %v1996, 0
        %2000 = vmatprep.subr.mxu0 %v1990
        %2001 = vmatpush1.msra.mxu0 %v1989
        %2002 = vmatprep.subr.mxu0 0.0
        %2003 = vmatpush1.msra.mxu0 0.0
        %2004 = vmatprep.subr.mxu0 0.0
        %2005 = vmatpush1.msra.mxu0 0.0
        %2006 = vmatprep.subr.mxu0 0.0
        %2007 = vmatpush1.msra.mxu0 0.0
        %2008 = vmatprep.subr.mxu0 0.0
        %2009 = vmatpush1.msra.mxu0 0.0
        %2010 = vmatprep.subr.mxu0 0.0
        %2011 = vmatpush1.msra.mxu0 0.0
        %2012 = vmatprep.subr.mxu0 0.0
        %2013 = vmatpush1.msra.mxu0 0.0
        %2014 = vmatprep.subr.mxu0 0.0
        %2015 = vmatpush1.msra.mxu0 0.0
        %2016 = vmatprep.subr.mxu0 0.0
        %2017 = vmatpush1.msra.mxu0 0.0
        %2018 = vmatprep.subr.mxu0 0.0
        %2019 = vmatpush1.msra.mxu0 0.0
        %2020 = vmatprep.subr.mxu0 0.0
        %2021 = vmatpush1.msra.mxu0 0.0
        %2022 = vmatprep.subr.mxu0 0.0
        %2023 = vmatpush1.msra.mxu0 0.0
        %2024 = vmatprep.subr.mxu0 0.0
        %2025 = vmatpush1.msra.mxu0 0.0
        %2026 = vmatprep.subr.mxu0 0.0
        %2027 = vmatpush1.msra.mxu0 0.0
        %2028 = vmatprep.subr.mxu0 0.0
        %2029 = vmatpush1.msra.mxu0 0.0
        %2030 = vmatprep.subr.mxu0 0.0
        %2031 = vmatpush1.msra.mxu0 0.0
        %2032 = vmatprep.subr.mxu0 0.0
        %2033 = vmatpush1.msra.mxu0 0.0
        %2034 = vmatprep.subr.mxu0 0.0
        %2035 = vmatpush1.msra.mxu0 0.0
        %2036 = vmatprep.subr.mxu0 0.0
        %2037 = vmatpush1.msra.mxu0 0.0
        %2038 = vmatprep.subr.mxu0 0.0
        %2039 = vmatpush1.msra.mxu0 0.0
        %2040 = vmatprep.subr.mxu0 0.0
        %2041 = vmatpush1.msra.mxu0 0.0
        %2042 = vmatprep.subr.mxu0 0.0
        %2043 = vmatpush1.msra.mxu0 0.0
        %2044 = vmatprep.subr.mxu0 0.0
        %2045 = vmatpush1.msra.mxu0 0.0
        %2046 = vmatprep.subr.mxu0 0.0
        %2047 = vmatpush1.msra.mxu0 0.0
        %2048 = vmatprep.subr.mxu0 0.0
        %2049 = vmatpush1.msra.mxu0 0.0
        %2050 = vmatprep.subr.mxu0 0.0
        %2051 = vmatpush1.msra.mxu0 0.0
        %2052 = vmatprep.subr.mxu0 0.0
        %2053 = vmatpush1.msra.mxu0 0.0
        %2054 = vmatprep.subr.mxu0 0.0
        %2055 = vmatpush1.msra.mxu0 0.0
        %2056 = vmatprep.subr.mxu0 0.0
        %2057 = vmatpush1.msra.mxu0 0.0
        %2058 = vmatprep.subr.mxu0 0.0
        %2059 = vmatpush1.msra.mxu0 0.0
        %2060 = vmatprep.subr.mxu0 0.0
        %2061 = vmatpush1.msra.mxu0 0.0
        %2062 = vmatprep.subr.mxu0 0.0
        %2063 = vmatpush1.msra.mxu0 0.0
        %2064 = vmatprep.mubr.f32.mxu0 0.0
        %2065 = vmatmul.mubr.f32.gmra.mrb[0].mxu0 %v1998
        %v2066 = vpop.f32.mrb[0].mxu0
        %v2067 = vadd.f32 0.0, %v2066
        %v2068 = vpop.f32.mrb[0].mxu0
        %v2069 = vadd.f32 0.0, %v2068
        %2070 = vdwg.mxu0
        %2071 = vmatprep.subr.mxu0 0.0
        %2072 = vmatpush1.msra.mxu0 %v1994
        %2073 = vmatprep.subr.mxu0 0.0
        %2074 = vmatpush1.msra.mxu0 0.0
        %2075 = vmatprep.subr.mxu0 0.0
        %2076 = vmatpush1.msra.mxu0 0.0
        %2077 = vmatprep.subr.mxu0 0.0
        %2078 = vmatpush1.msra.mxu0 0.0
        %2079 = vmatprep.subr.mxu0 0.0
        %2080 = vmatpush1.msra.mxu0 0.0
        %2081 = vmatprep.subr.mxu0 0.0
        %2082 = vmatpush1.msra.mxu0 0.0
        %2083 = vmatprep.subr.mxu0 0.0
        %2084 = vmatpush1.msra.mxu0 0.0
        %2085 = vmatprep.subr.mxu0 0.0
        %2086 = vmatpush1.msra.mxu0 0.0
        %2087 = vmatprep.subr.mxu0 0.0
        %2088 = vmatpush1.msra.mxu0 0.0
        %2089 = vmatprep.subr.mxu0 0.0
        %2090 = vmatpush1.msra.mxu0 0.0
        %2091 = vmatprep.subr.mxu0 0.0
        %2092 = vmatpush1.msra.mxu0 0.0
        %2093 = vmatprep.subr.mxu0 0.0
        %2094 = vmatpush1.msra.mxu0 0.0
        %2095 = vmatprep.subr.mxu0 0.0
        %2096 = vmatpush1.msra.mxu0 0.0
        %2097 = vmatprep.subr.mxu0 0.0
        %2098 = vmatpush1.msra.mxu0 0.0
        %2099 = vmatprep.subr.mxu0 0.0
        %2100 = vmatpush1.msra.mxu0 0.0
        %2101 = vmatprep.subr.mxu0 0.0
        %2102 = vmatpush1.msra.mxu0 0.0
        %2103 = vmatprep.subr.mxu0 0.0
        %2104 = vmatpush1.msra.mxu0 0.0
        %2105 = vmatprep.subr.mxu0 0.0
        %2106 = vmatpush1.msra.mxu0 0.0
        %2107 = vmatprep.subr.mxu0 0.0
        %2108 = vmatpush1.msra.mxu0 0.0
        %2109 = vmatprep.subr.mxu0 0.0
        %2110 = vmatpush1.msra.mxu0 0.0
        %2111 = vmatprep.subr.mxu0 0.0
        %2112 = vmatpush1.msra.mxu0 0.0
        %2113 = vmatprep.subr.mxu0 0.0
        %2114 = vmatpush1.msra.mxu0 0.0
        %2115 = vmatprep.subr.mxu0 0.0
        %2116 = vmatpush1.msra.mxu0 0.0
        %2117 = vmatprep.subr.mxu0 0.0
        %2118 = vmatpush1.msra.mxu0 0.0
        %2119 = vmatprep.subr.mxu0 0.0
        %2120 = vmatpush1.msra.mxu0 0.0
        %2121 = vmatprep.subr.mxu0 0.0
        %2122 = vmatpush1.msra.mxu0 0.0
        %2123 = vmatprep.subr.mxu0 0.0
        %2124 = vmatpush1.msra.mxu0 0.0
        %2125 = vmatprep.subr.mxu0 0.0
        %2126 = vmatpush1.msra.mxu0 0.0
        %2127 = vmatprep.subr.mxu0 0.0
        %2128 = vmatpush1.msra.mxu0 0.0
        %2129 = vmatprep.subr.mxu0 0.0
        %2130 = vmatpush1.msra.mxu0 0.0
        %2131 = vmatprep.subr.mxu0 0.0
        %2132 = vmatpush1.msra.mxu0 0.0
        %2133 = vmatprep.subr.mxu0 0.0
        %2134 = vmatpush1.msra.mxu0 0.0
        %2135 = vmatprep.mubr.f32.mxu0 0.0
        %2136 = vmatmul.mubr.f32.gmra.mrb[0].mxu0 %v1998
        %v2137 = vpop.f32.mrb[0].mxu0
        %v2138 = vadd.f32 0.0, %v2137
        %v2139 = vpop.f32.mrb[0].mxu0
        %2140 = vdwg.mxu0
        %v2141 = vadd.f32 %v1979, %v2067
        %v2142 = vadd.f32 %v1980, %v2069
        %v2143 = vadd.f32 %v1981, %v2138
        %2144 = vrot.lane.b32.xlu0 %v862, 109
        %v2145 = vpop.permute.xlu0 %2144
        %2146 = vrot.lane.b32.xlu0 %v863, 109
        %v2147 = vpop.permute.xlu0 %2146
        %2148 = vrot.lane.b32.xlu0 %v864, 109
        %v2149 = vpop.permute.xlu0 %2148
        %vm2150 = vcmask 891904
        %v2151 = vsel %vm2150, %v2145, %v2147
        %v2152 = vsel %vm2150, %v2147, %v2149
        %v2156 = vsel %vm2150, %v2149, 0.0
        %s2157 = scalar_lea.vmem %s5, 64
        %v2158 = vld [vmem:[%s2157] sm:$0xff]
        %v2160 = vsel %vm661, %v2158, 0
        %2162 = vmatprep.subr.mxu0 %v2152
        %2163 = vmatpush1.msra.mxu0 %v2151
        %2164 = vmatprep.subr.mxu0 0.0
        %2165 = vmatpush1.msra.mxu0 0.0
        %2166 = vmatprep.subr.mxu0 0.0
        %2167 = vmatpush1.msra.mxu0 0.0
        %2168 = vmatprep.subr.mxu0 0.0
        %2169 = vmatpush1.msra.mxu0 0.0
        %2170 = vmatprep.subr.mxu0 0.0
        %2171 = vmatpush1.msra.mxu0 0.0
        %2172 = vmatprep.subr.mxu0 0.0
        %2173 = vmatpush1.msra.mxu0 0.0
        %2174 = vmatprep.subr.mxu0 0.0
        %2175 = vmatpush1.msra.mxu0 0.0
        %2176 = vmatprep.subr.mxu0 0.0
        %2177 = vmatpush1.msra.mxu0 0.0
        %2178 = vmatprep.subr.mxu0 0.0
        %2179 = vmatpush1.msra.mxu0 0.0
        %2180 = vmatprep.subr.mxu0 0.0
        %2181 = vmatpush1.msra.mxu0 0.0
        %2182 = vmatprep.subr.mxu0 0.0
        %2183 = vmatpush1.msra.mxu0 0.0
        %2184 = vmatprep.subr.mxu0 0.0
        %2185 = vmatpush1.msra.mxu0 0.0
        %2186 = vmatprep.subr.mxu0 0.0
        %2187 = vmatpush1.msra.mxu0 0.0
        %2188 = vmatprep.subr.mxu0 0.0
        %2189 = vmatpush1.msra.mxu0 0.0
        %2190 = vmatprep.subr.mxu0 0.0
        %2191 = vmatpush1.msra.mxu0 0.0
        %2192 = vmatprep.subr.mxu0 0.0
        %2193 = vmatpush1.msra.mxu0 0.0
        %2194 = vmatprep.subr.mxu0 0.0
        %2195 = vmatpush1.msra.mxu0 0.0
        %2196 = vmatprep.subr.mxu0 0.0
        %2197 = vmatpush1.msra.mxu0 0.0
        %2198 = vmatprep.subr.mxu0 0.0
        %2199 = vmatpush1.msra.mxu0 0.0
        %2200 = vmatprep.subr.mxu0 0.0
        %2201 = vmatpush1.msra.mxu0 0.0
        %2202 = vmatprep.subr.mxu0 0.0
        %2203 = vmatpush1.msra.mxu0 0.0
        %2204 = vmatprep.subr.mxu0 0.0
        %2205 = vmatpush1.msra.mxu0 0.0
        %2206 = vmatprep.subr.mxu0 0.0
        %2207 = vmatpush1.msra.mxu0 0.0
        %2208 = vmatprep.subr.mxu0 0.0
        %2209 = vmatpush1.msra.mxu0 0.0
        %2210 = vmatprep.subr.mxu0 0.0
        %2211 = vmatpush1.msra.mxu0 0.0
        %2212 = vmatprep.subr.mxu0 0.0
        %2213 = vmatpush1.msra.mxu0 0.0
        %2214 = vmatprep.subr.mxu0 0.0
        %2215 = vmatpush1.msra.mxu0 0.0
        %2216 = vmatprep.subr.mxu0 0.0
        %2217 = vmatpush1.msra.mxu0 0.0
        %2218 = vmatprep.subr.mxu0 0.0
        %2219 = vmatpush1.msra.mxu0 0.0
        %2220 = vmatprep.subr.mxu0 0.0
        %2221 = vmatpush1.msra.mxu0 0.0
        %2222 = vmatprep.subr.mxu0 0.0
        %2223 = vmatpush1.msra.mxu0 0.0
        %2224 = vmatprep.subr.mxu0 0.0
        %2225 = vmatpush1.msra.mxu0 0.0
        %2226 = vmatprep.mubr.f32.mxu0 0.0
        %2227 = vmatmul.mubr.f32.gmra.mrb[0].mxu0 %v2160
        %v2228 = vpop.f32.mrb[0].mxu0
        %v2229 = vadd.f32 0.0, %v2228
        %v2230 = vpop.f32.mrb[0].mxu0
        %v2231 = vadd.f32 0.0, %v2230
        %2232 = vdwg.mxu0
        %2233 = vmatprep.subr.mxu0 0.0
        %2234 = vmatpush1.msra.mxu0 %v2156
        %2235 = vmatprep.subr.mxu0 0.0
        %2236 = vmatpush1.msra.mxu0 0.0
        %2237 = vmatprep.subr.mxu0 0.0
        %2238 = vmatpush1.msra.mxu0 0.0
        %2239 = vmatprep.subr.mxu0 0.0
        %2240 = vmatpush1.msra.mxu0 0.0
        %2241 = vmatprep.subr.mxu0 0.0
        %2242 = vmatpush1.msra.mxu0 0.0
        %2243 = vmatprep.subr.mxu0 0.0
        %2244 = vmatpush1.msra.mxu0 0.0
        %2245 = vmatprep.subr.mxu0 0.0
        %2246 = vmatpush1.msra.mxu0 0.0
        %2247 = vmatprep.subr.mxu0 0.0
        %2248 = vmatpush1.msra.mxu0 0.0
        %2249 = vmatprep.subr.mxu0 0.0
        %2250 = vmatpush1.msra.mxu0 0.0
        %2251 = vmatprep.subr.mxu0 0.0
        %2252 = vmatpush1.msra.mxu0 0.0
        %2253 = vmatprep.subr.mxu0 0.0
        %2254 = vmatpush1.msra.mxu0 0.0
        %2255 = vmatprep.subr.mxu0 0.0
        %2256 = vmatpush1.msra.mxu0 0.0
        %2257 = vmatprep.subr.mxu0 0.0
        %2258 = vmatpush1.msra.mxu0 0.0
        %2259 = vmatprep.subr.mxu0 0.0
        %2260 = vmatpush1.msra.mxu0 0.0
        %2261 = vmatprep.subr.mxu0 0.0
        %2262 = vmatpush1.msra.mxu0 0.0
        %2263 = vmatprep.subr.mxu0 0.0
        %2264 = vmatpush1.msra.mxu0 0.0
        %2265 = vmatprep.subr.mxu0 0.0
        %2266 = vmatpush1.msra.mxu0 0.0
        %2267 = vmatprep.subr.mxu0 0.0
        %2268 = vmatpush1.msra.mxu0 0.0
        %2269 = vmatprep.subr.mxu0 0.0
        %2270 = vmatpush1.msra.mxu0 0.0
        %2271 = vmatprep.subr.mxu0 0.0
        %2272 = vmatpush1.msra.mxu0 0.0
        %2273 = vmatprep.subr.mxu0 0.0
        %2274 = vmatpush1.msra.mxu0 0.0
        %2275 = vmatprep.subr.mxu0 0.0
        %2276 = vmatpush1.msra.mxu0 0.0
        %2277 = vmatprep.subr.mxu0 0.0
        %2278 = vmatpush1.msra.mxu0 0.0
        %2279 = vmatprep.subr.mxu0 0.0
        %2280 = vmatpush1.msra.mxu0 0.0
        %2281 = vmatprep.subr.mxu0 0.0
        %2282 = vmatpush1.msra.mxu0 0.0
        %2283 = vmatprep.subr.mxu0 0.0
        %2284 = vmatpush1.msra.mxu0 0.0
        %2285 = vmatprep.subr.mxu0 0.0
        %2286 = vmatpush1.msra.mxu0 0.0
        %2287 = vmatprep.subr.mxu0 0.0
        %2288 = vmatpush1.msra.mxu0 0.0
        %2289 = vmatprep.subr.mxu0 0.0
        %2290 = vmatpush1.msra.mxu0 0.0
        %2291 = vmatprep.subr.mxu0 0.0
        %2292 = vmatpush1.msra.mxu0 0.0
        %2293 = vmatprep.subr.mxu0 0.0
        %2294 = vmatpush1.msra.mxu0 0.0
        %2295 = vmatprep.subr.mxu0 0.0
        %2296 = vmatpush1.msra.mxu0 0.0
        %2297 = vmatprep.mubr.f32.mxu0 0.0
        %2298 = vmatmul.mubr.f32.gmra.mrb[0].mxu0 %v2160
        %v2299 = vpop.f32.mrb[0].mxu0
        %v2300 = vadd.f32 0.0, %v2299
        %v2301 = vpop.f32.mrb[0].mxu0
        %2302 = vdwg.mxu0
        %v2303 = vadd.f32 %v2141, %v2229
        %v2304 = vadd.f32 %v2142, %v2231
        %v2305 = vadd.f32 %v2143, %v2300
        %v2306 = vld [vmem:[%s6] sm:$0xff]
        %2308 = vset.pattern.permute.xlu0 0
        %2309 = vperm.xlu0 %2308, %v2306
        %v2310 = vpop.permute.xlu0 %2309
        %v2312 = vmul.f32 %v2303, %v2310
        %v2313 = vmul.f32 %v2304, %v2310
        %v2314 = vmul.f32 %v2305, %v2310
        %s2315 = scalar_lea.vmem %s6, 8
        %v2316 = vld [vmem:[%s2315] sm:$0xff]
        %2318 = vset.pattern.permute.xlu0 0
        %2319 = vperm.xlu0 %2318, %v2316
        %v2320 = vpop.permute.xlu0 %2319
        %v2322 = vadd.f32 %v2312, %v2320
        %v2323 = vadd.f32 %v2313, %v2320
        %v2324 = vadd.f32 %v2314, %v2320
        %v2325 = vxor.u32 %v2322, 2147483648
        %v2326 = vxor.u32 %v2323, 2147483648
        %v2327 = vxor.u32 %v2324, 2147483648
        %v2328 = vmul.f32 %v2325, 1.442695
        %v2329 = vpow.pop %v2328
        %v2330 = vmul.f32 %v2326, 1.442695
        %v2331 = vpow.pop %v2330
        %v2332 = vmul.f32 %v2327, 1.442695
        %v2333 = vpow.pop %v2332
        %v2334 = vadd.f32 %v2329, 1.0
        %v2335 = vadd.f32 %v2331, 1.0
        %v2336 = vadd.f32 %v2333, 1.0
        %v2337 = vrcp.pop %v2334
        %v2338 = vmul.f32 1.0, %v2337
        %v2339 = vrcp.pop %v2335
        %v2340 = vmul.f32 1.0, %v2339
        %v2341 = vrcp.pop %v2336
        %v2342 = vmul.f32 1.0, %v2341
        %v2343 = vmul.f32 %v2322, %v2338
        %v2344 = vmul.f32 %v2323, %v2340
        %v2345 = vmul.f32 %v2324, %v2342
        %v2346 = vadd.f32 %v2343, %v654
        %v2347 = vadd.f32 %v2344, %v655
        %v2348 = vadd.f32 %v2345, %v656
        %v2349 = vmul.f32 %v2346, %v850
        %v2350 = vmul.f32 %v2347, %v854
        %v2351 = vmul.f32 %v2348, %v858
        %s2352 = scalar_lea.vmem %s3, 8
        %v2353 = vld [vmem:[%s2352] sm:$0xff]
        %v2355 = vsel %vm661, %v2353, 0
        %2357 = vmatprep.subr.mxu0 %v2350
        %2358 = vmatpush1.msra.mxu0 %v2349
        %2359 = vmatprep.subr.mxu0 0.0
        %2360 = vmatpush1.msra.mxu0 0.0
        %2361 = vmatprep.subr.mxu0 0.0
        %2362 = vmatpush1.msra.mxu0 0.0
        %2363 = vmatprep.subr.mxu0 0.0
        %2364 = vmatpush1.msra.mxu0 0.0
        %2365 = vmatprep.subr.mxu0 0.0
        %2366 = vmatpush1.msra.mxu0 0.0
        %2367 = vmatprep.subr.mxu0 0.0
        %2368 = vmatpush1.msra.mxu0 0.0
        %2369 = vmatprep.subr.mxu0 0.0
        %2370 = vmatpush1.msra.mxu0 0.0
        %2371 = vmatprep.subr.mxu0 0.0
        %2372 = vmatpush1.msra.mxu0 0.0
        %2373 = vmatprep.subr.mxu0 0.0
        %2374 = vmatpush1.msra.mxu0 0.0
        %2375 = vmatprep.subr.mxu0 0.0
        %2376 = vmatpush1.msra.mxu0 0.0
        %2377 = vmatprep.subr.mxu0 0.0
        %2378 = vmatpush1.msra.mxu0 0.0
        %2379 = vmatprep.subr.mxu0 0.0
        %2380 = vmatpush1.msra.mxu0 0.0
        %2381 = vmatprep.subr.mxu0 0.0
        %2382 = vmatpush1.msra.mxu0 0.0
        %2383 = vmatprep.subr.mxu0 0.0
        %2384 = vmatpush1.msra.mxu0 0.0
        %2385 = vmatprep.subr.mxu0 0.0
        %2386 = vmatpush1.msra.mxu0 0.0
        %2387 = vmatprep.subr.mxu0 0.0
        %2388 = vmatpush1.msra.mxu0 0.0
        %2389 = vmatprep.subr.mxu0 0.0
        %2390 = vmatpush1.msra.mxu0 0.0
        %2391 = vmatprep.subr.mxu0 0.0
        %2392 = vmatpush1.msra.mxu0 0.0
        %2393 = vmatprep.subr.mxu0 0.0
        %2394 = vmatpush1.msra.mxu0 0.0
        %2395 = vmatprep.subr.mxu0 0.0
        %2396 = vmatpush1.msra.mxu0 0.0
        %2397 = vmatprep.subr.mxu0 0.0
        %2398 = vmatpush1.msra.mxu0 0.0
        %2399 = vmatprep.subr.mxu0 0.0
        %2400 = vmatpush1.msra.mxu0 0.0
        %2401 = vmatprep.subr.mxu0 0.0
        %2402 = vmatpush1.msra.mxu0 0.0
        %2403 = vmatprep.subr.mxu0 0.0
        %2404 = vmatpush1.msra.mxu0 0.0
        %2405 = vmatprep.subr.mxu0 0.0
        %2406 = vmatpush1.msra.mxu0 0.0
        %2407 = vmatprep.subr.mxu0 0.0
        %2408 = vmatpush1.msra.mxu0 0.0
        %2409 = vmatprep.subr.mxu0 0.0
        %2410 = vmatpush1.msra.mxu0 0.0
        %2411 = vmatprep.subr.mxu0 0.0
        %2412 = vmatpush1.msra.mxu0 0.0
        %2413 = vmatprep.subr.mxu0 0.0
        %2414 = vmatpush1.msra.mxu0 0.0
        %2415 = vmatprep.subr.mxu0 0.0
        %2416 = vmatpush1.msra.mxu0 0.0
        %2417 = vmatprep.subr.mxu0 0.0
        %2418 = vmatpush1.msra.mxu0 0.0
        %2419 = vmatprep.subr.mxu0 0.0
        %2420 = vmatpush1.msra.mxu0 0.0
        %2421 = vmatprep.mubr.f32.mxu0 0.0
        %2422 = vmatmul.mubr.f32.gmra.mrb[0].mxu0 %v2355
        %v2423 = vpop.f32.mrb[0].mxu0
        %v2424 = vadd.f32 0.0, %v2423
        %v2425 = vpop.f32.mrb[0].mxu0
        %v2426 = vadd.f32 0.0, %v2425
        %2427 = vdwg.mxu0
        %2428 = vmatprep.subr.mxu0 0.0
        %2429 = vmatpush1.msra.mxu0 %v2351
        %2430 = vmatprep.subr.mxu0 0.0
        %2431 = vmatpush1.msra.mxu0 0.0
        %2432 = vmatprep.subr.mxu0 0.0
        %2433 = vmatpush1.msra.mxu0 0.0
        %2434 = vmatprep.subr.mxu0 0.0
        %2435 = vmatpush1.msra.mxu0 0.0
        %2436 = vmatprep.subr.mxu0 0.0
        %2437 = vmatpush1.msra.mxu0 0.0
        %2438 = vmatprep.subr.mxu0 0.0
        %2439 = vmatpush1.msra.mxu0 0.0
        %2440 = vmatprep.subr.mxu0 0.0
        %2441 = vmatpush1.msra.mxu0 0.0
        %2442 = vmatprep.subr.mxu0 0.0
        %2443 = vmatpush1.msra.mxu0 0.0
        %2444 = vmatprep.subr.mxu0 0.0
        %2445 = vmatpush1.msra.mxu0 0.0
        %2446 = vmatprep.subr.mxu0 0.0
        %2447 = vmatpush1.msra.mxu0 0.0
        %2448 = vmatprep.subr.mxu0 0.0
        %2449 = vmatpush1.msra.mxu0 0.0
        %2450 = vmatprep.subr.mxu0 0.0
        %2451 = vmatpush1.msra.mxu0 0.0
        %2452 = vmatprep.subr.mxu0 0.0
        %2453 = vmatpush1.msra.mxu0 0.0
        %2454 = vmatprep.subr.mxu0 0.0
        %2455 = vmatpush1.msra.mxu0 0.0
        %2456 = vmatprep.subr.mxu0 0.0
        %2457 = vmatpush1.msra.mxu0 0.0
        %2458 = vmatprep.subr.mxu0 0.0
        %2459 = vmatpush1.msra.mxu0 0.0
        %2460 = vmatprep.subr.mxu0 0.0
        %2461 = vmatpush1.msra.mxu0 0.0
        %2462 = vmatprep.subr.mxu0 0.0
        %2463 = vmatpush1.msra.mxu0 0.0
        %2464 = vmatprep.subr.mxu0 0.0
        %2465 = vmatpush1.msra.mxu0 0.0
        %2466 = vmatprep.subr.mxu0 0.0
        %2467 = vmatpush1.msra.mxu0 0.0
        %2468 = vmatprep.subr.mxu0 0.0
        %2469 = vmatpush1.msra.mxu0 0.0
        %2470 = vmatprep.subr.mxu0 0.0
        %2471 = vmatpush1.msra.mxu0 0.0
        %2472 = vmatprep.subr.mxu0 0.0
        %2473 = vmatpush1.msra.mxu0 0.0
        %2474 = vmatprep.subr.mxu0 0.0
        %2475 = vmatpush1.msra.mxu0 0.0
        %2476 = vmatprep.subr.mxu0 0.0
        %2477 = vmatpush1.msra.mxu0 0.0
        %2478 = vmatprep.subr.mxu0 0.0
        %2479 = vmatpush1.msra.mxu0 0.0
        %2480 = vmatprep.subr.mxu0 0.0
        %2481 = vmatpush1.msra.mxu0 0.0
        %2482 = vmatprep.subr.mxu0 0.0
        %2483 = vmatpush1.msra.mxu0 0.0
        %2484 = vmatprep.subr.mxu0 0.0
        %2485 = vmatpush1.msra.mxu0 0.0
        %2486 = vmatprep.subr.mxu0 0.0
        %2487 = vmatpush1.msra.mxu0 0.0
        %2488 = vmatprep.subr.mxu0 0.0
        %2489 = vmatpush1.msra.mxu0 0.0
        %2490 = vmatprep.subr.mxu0 0.0
        %2491 = vmatpush1.msra.mxu0 0.0
        %2492 = vmatprep.mubr.f32.mxu0 0.0
        %2493 = vmatmul.mubr.f32.gmra.mrb[0].mxu0 %v2355
        %v2494 = vpop.f32.mrb[0].mxu0
        %v2495 = vadd.f32 0.0, %v2494
        %v2496 = vpop.f32.mrb[0].mxu0
        %2497 = vdwg.mxu0
        %s2498 = scalar_lea.vmem %s4, 16
        %v2499 = vld [vmem:[%s2498] sm:$0xff]
        %2501 = vset.pattern.permute.xlu0 0
        %2502 = vperm.xlu0 %2501, %v2499
        %v2503 = vpop.permute.xlu0 %2502
        %v2505 = vmul.f32 %v2424, %v2503
        %v2506 = vmul.f32 %v2426, %v2503
        %v2507 = vmul.f32 %v2495, %v2503
        %s2508 = scalar_lea.vmem %s4, 24
        %v2509 = vld [vmem:[%s2508] sm:$0xff]
        %2511 = vset.pattern.permute.xlu0 0
        %2512 = vperm.xlu0 %2511, %v2509
        %v2513 = vpop.permute.xlu0 %2512
        %v2515 = vadd.f32 %v2505, %v2513
        %v2516 = vadd.f32 %v2506, %v2513
        %v2517 = vadd.f32 %v2507, %v2513
        %v2518 = vxor.u32 %v2515, 2147483648
        %v2519 = vxor.u32 %v2516, 2147483648
        %v2520 = vxor.u32 %v2517, 2147483648
        %v2521 = vmul.f32 %v2518, 1.442695
        %v2522 = vpow.pop %v2521
        %v2523 = vmul.f32 %v2519, 1.442695
        %v2524 = vpow.pop %v2523
        %v2525 = vmul.f32 %v2520, 1.442695
        %v2526 = vpow.pop %v2525
        %v2527 = vadd.f32 %v2522, 1.0
        %v2528 = vadd.f32 %v2524, 1.0
        %v2529 = vadd.f32 %v2526, 1.0
        %v2530 = vrcp.pop %v2527
        %v2531 = vmul.f32 1.0, %v2530
        %v2532 = vrcp.pop %v2528
        %v2533 = vmul.f32 1.0, %v2532
        %v2534 = vrcp.pop %v2529
        %v2535 = vmul.f32 1.0, %v2534
        %v2536 = vmul.f32 %v2515, %v2531
        %v2537 = vmul.f32 %v2516, %v2533
        %v2538 = vmul.f32 %v2517, %v2535
        %v2539 = vmul.f32 %v2536, %v850
        %v2540 = vmul.f32 %v2537, %v854
        %v2541 = vmul.f32 %v2538, %v858
        %2545 = vrot.lane.b32.xlu0 %v2539, 19
        %v2546 = vpop.permute.xlu0 %2545
        %2547 = vrot.lane.b32.xlu0 %v2540, 19
        %v2548 = vpop.permute.xlu0 %2547
        %2549 = vrot.lane.b32.xlu0 %v2541, 19
        %v2550 = vpop.permute.xlu0 %2549
        %v2551 = vsel %vm874, %v2546, %v2548
        %v2552 = vsel %vm874, %v2548, %v2550
        %v2556 = vsel %vm874, 0.0, %v2546
        %s2557 = scalar_lea.vmem %s5, 72
        %v2558 = vld [vmem:[%s2557] sm:$0xff]
        %2559 = vrot.lane.b32.xlu0 %v2539, 18
        %v2560 = vpop.permute.xlu0 %2559
        %2561 = vrot.lane.b32.xlu0 %v2540, 18
        %v2562 = vpop.permute.xlu0 %2561
        %2563 = vrot.lane.b32.xlu0 %v2541, 18
        %v2564 = vpop.permute.xlu0 %2563
        %v2565 = vsel %vm888, %v2560, %v2562
        %v2566 = vsel %vm888, %v2562, %v2564
        %v2570 = vsel %vm888, 0.0, %v2560
        %s2571 = scalar_lea.vmem %s5, 80
        %v2572 = vld [vmem:[%s2571] sm:$0xff]
        %v2574 = vsel %vm661, %v2572, 0
        %2576 = vmatprep.subr.mxu0 %v2565
        %2577 = vmatpush1.msra.mxu0 %v2570
        %2578 = vmatprep.subr.mxu0 0.0
        %2579 = vmatpush1.msra.mxu0 0.0
        %2580 = vmatprep.subr.mxu0 0.0
        %2581 = vmatpush1.msra.mxu0 0.0
        %2582 = vmatprep.subr.mxu0 0.0
        %2583 = vmatpush1.msra.mxu0 0.0
        %2584 = vmatprep.subr.mxu0 0.0
        %2585 = vmatpush1.msra.mxu0 0.0
        %2586 = vmatprep.subr.mxu0 0.0
        %2587 = vmatpush1.msra.mxu0 0.0
        %2588 = vmatprep.subr.mxu0 0.0
        %2589 = vmatpush1.msra.mxu0 0.0
        %2590 = vmatprep.subr.mxu0 0.0
        %2591 = vmatpush1.msra.mxu0 0.0
        %2592 = vmatprep.subr.mxu0 0.0
        %2593 = vmatpush1.msra.mxu0 0.0
        %2594 = vmatprep.subr.mxu0 0.0
        %2595 = vmatpush1.msra.mxu0 0.0
        %2596 = vmatprep.subr.mxu0 0.0
        %2597 = vmatpush1.msra.mxu0 0.0
        %2598 = vmatprep.subr.mxu0 0.0
        %2599 = vmatpush1.msra.mxu0 0.0
        %2600 = vmatprep.subr.mxu0 0.0
        %2601 = vmatpush1.msra.mxu0 0.0
        %2602 = vmatprep.subr.mxu0 0.0
        %2603 = vmatpush1.msra.mxu0 0.0
        %2604 = vmatprep.subr.mxu0 0.0
        %2605 = vmatpush1.msra.mxu0 0.0
        %2606 = vmatprep.subr.mxu0 0.0
        %2607 = vmatpush1.msra.mxu0 0.0
        %2608 = vmatprep.subr.mxu0 0.0
        %2609 = vmatpush1.msra.mxu0 0.0
        %2610 = vmatprep.subr.mxu0 0.0
        %2611 = vmatpush1.msra.mxu0 0.0
        %2612 = vmatprep.subr.mxu0 0.0
        %2613 = vmatpush1.msra.mxu0 0.0
        %2614 = vmatprep.subr.mxu0 0.0
        %2615 = vmatpush1.msra.mxu0 0.0
        %2616 = vmatprep.subr.mxu0 0.0
        %2617 = vmatpush1.msra.mxu0 0.0
        %2618 = vmatprep.subr.mxu0 0.0
        %2619 = vmatpush1.msra.mxu0 0.0
        %2620 = vmatprep.subr.mxu0 0.0
        %2621 = vmatpush1.msra.mxu0 0.0
        %2622 = vmatprep.subr.mxu0 0.0
        %2623 = vmatpush1.msra.mxu0 0.0
        %2624 = vmatprep.subr.mxu0 0.0
        %2625 = vmatpush1.msra.mxu0 0.0
        %2626 = vmatprep.subr.mxu0 0.0
        %2627 = vmatpush1.msra.mxu0 0.0
        %2628 = vmatprep.subr.mxu0 0.0
        %2629 = vmatpush1.msra.mxu0 0.0
        %2630 = vmatprep.subr.mxu0 0.0
        %2631 = vmatpush1.msra.mxu0 0.0
        %2632 = vmatprep.subr.mxu0 0.0
        %2633 = vmatpush1.msra.mxu0 0.0
        %2634 = vmatprep.subr.mxu0 0.0
        %2635 = vmatpush1.msra.mxu0 0.0
        %2636 = vmatprep.subr.mxu0 0.0
        %2637 = vmatpush1.msra.mxu0 0.0
        %2638 = vmatprep.subr.mxu0 0.0
        %2639 = vmatpush1.msra.mxu0 0.0
        %2640 = vmatprep.mubr.f32.mxu0 0.0
        %2641 = vmatmul.mubr.f32.gmra.mrb[0].mxu0 %v2574
        %v2642 = vpop.f32.mrb[0].mxu0
        %v2643 = vadd.f32 0.0, %v2642
        %v2644 = vpop.f32.mrb[0].mxu0
        %v2645 = vadd.f32 0.0, %v2644
        %2646 = vdwg.mxu0
        %2647 = vmatprep.subr.mxu0 0.0
        %2648 = vmatpush1.msra.mxu0 %v2566
        %2649 = vmatprep.subr.mxu0 0.0
        %2650 = vmatpush1.msra.mxu0 0.0
        %2651 = vmatprep.subr.mxu0 0.0
        %2652 = vmatpush1.msra.mxu0 0.0
        %2653 = vmatprep.subr.mxu0 0.0
        %2654 = vmatpush1.msra.mxu0 0.0
        %2655 = vmatprep.subr.mxu0 0.0
        %2656 = vmatpush1.msra.mxu0 0.0
        %2657 = vmatprep.subr.mxu0 0.0
        %2658 = vmatpush1.msra.mxu0 0.0
        %2659 = vmatprep.subr.mxu0 0.0
        %2660 = vmatpush1.msra.mxu0 0.0
        %2661 = vmatprep.subr.mxu0 0.0
        %2662 = vmatpush1.msra.mxu0 0.0
        %2663 = vmatprep.subr.mxu0 0.0
        %2664 = vmatpush1.msra.mxu0 0.0
        %2665 = vmatprep.subr.mxu0 0.0
        %2666 = vmatpush1.msra.mxu0 0.0
        %2667 = vmatprep.subr.mxu0 0.0
        %2668 = vmatpush1.msra.mxu0 0.0
        %2669 = vmatprep.subr.mxu0 0.0
        %2670 = vmatpush1.msra.mxu0 0.0
        %2671 = vmatprep.subr.mxu0 0.0
        %2672 = vmatpush1.msra.mxu0 0.0
        %2673 = vmatprep.subr.mxu0 0.0
        %2674 = vmatpush1.msra.mxu0 0.0
        %2675 = vmatprep.subr.mxu0 0.0
        %2676 = vmatpush1.msra.mxu0 0.0
        %2677 = vmatprep.subr.mxu0 0.0
        %2678 = vmatpush1.msra.mxu0 0.0
        %2679 = vmatprep.subr.mxu0 0.0
        %2680 = vmatpush1.msra.mxu0 0.0
        %2681 = vmatprep.subr.mxu0 0.0
        %2682 = vmatpush1.msra.mxu0 0.0
        %2683 = vmatprep.subr.mxu0 0.0
        %2684 = vmatpush1.msra.mxu0 0.0
        %2685 = vmatprep.subr.mxu0 0.0
        %2686 = vmatpush1.msra.mxu0 0.0
        %2687 = vmatprep.subr.mxu0 0.0
        %2688 = vmatpush1.msra.mxu0 0.0
        %2689 = vmatprep.subr.mxu0 0.0
        %2690 = vmatpush1.msra.mxu0 0.0
        %2691 = vmatprep.subr.mxu0 0.0
        %2692 = vmatpush1.msra.mxu0 0.0
        %2693 = vmatprep.subr.mxu0 0.0
        %2694 = vmatpush1.msra.mxu0 0.0
        %2695 = vmatprep.subr.mxu0 0.0
        %2696 = vmatpush1.msra.mxu0 0.0
        %2697 = vmatprep.subr.mxu0 0.0
        %2698 = vmatpush1.msra.mxu0 0.0
        %2699 = vmatprep.subr.mxu0 0.0
        %2700 = vmatpush1.msra.mxu0 0.0
        %2701 = vmatprep.subr.mxu0 0.0
        %2702 = vmatpush1.msra.mxu0 0.0
        %2703 = vmatprep.subr.mxu0 0.0
        %2704 = vmatpush1.msra.mxu0 0.0
        %2705 = vmatprep.subr.mxu0 0.0
        %2706 = vmatpush1.msra.mxu0 0.0
        %2707 = vmatprep.subr.mxu0 0.0
        %2708 = vmatpush1.msra.mxu0 0.0
        %2709 = vmatprep.subr.mxu0 0.0
        %2710 = vmatpush1.msra.mxu0 0.0
        %2711 = vmatprep.mubr.f32.mxu0 0.0
        %2712 = vmatmul.mubr.f32.gmra.mrb[0].mxu0 %v2574
        %v2713 = vpop.f32.mrb[0].mxu0
        %v2714 = vadd.f32 0.0, %v2713
        %v2715 = vpop.f32.mrb[0].mxu0
        %2716 = vdwg.mxu0
        %v2718 = vsel %vm661, %v2558, 0
        %2720 = vmatprep.subr.mxu0 %v2551
        %2721 = vmatpush1.msra.mxu0 %v2556
        %2722 = vmatprep.subr.mxu0 0.0
        %2723 = vmatpush1.msra.mxu0 0.0
        %2724 = vmatprep.subr.mxu0 0.0
        %2725 = vmatpush1.msra.mxu0 0.0
        %2726 = vmatprep.subr.mxu0 0.0
        %2727 = vmatpush1.msra.mxu0 0.0
        %2728 = vmatprep.subr.mxu0 0.0
        %2729 = vmatpush1.msra.mxu0 0.0
        %2730 = vmatprep.subr.mxu0 0.0
        %2731 = vmatpush1.msra.mxu0 0.0
        %2732 = vmatprep.subr.mxu0 0.0
        %2733 = vmatpush1.msra.mxu0 0.0
        %2734 = vmatprep.subr.mxu0 0.0
        %2735 = vmatpush1.msra.mxu0 0.0
        %2736 = vmatprep.subr.mxu0 0.0
        %2737 = vmatpush1.msra.mxu0 0.0
        %2738 = vmatprep.subr.mxu0 0.0
        %2739 = vmatpush1.msra.mxu0 0.0
        %2740 = vmatprep.subr.mxu0 0.0
        %2741 = vmatpush1.msra.mxu0 0.0
        %2742 = vmatprep.subr.mxu0 0.0
        %2743 = vmatpush1.msra.mxu0 0.0
        %2744 = vmatprep.subr.mxu0 0.0
        %2745 = vmatpush1.msra.mxu0 0.0
        %2746 = vmatprep.subr.mxu0 0.0
        %2747 = vmatpush1.msra.mxu0 0.0
        %2748 = vmatprep.subr.mxu0 0.0
        %2749 = vmatpush1.msra.mxu0 0.0
        %2750 = vmatprep.subr.mxu0 0.0
        %2751 = vmatpush1.msra.mxu0 0.0
        %2752 = vmatprep.subr.mxu0 0.0
        %2753 = vmatpush1.msra.mxu0 0.0
        %2754 = vmatprep.subr.mxu0 0.0
        %2755 = vmatpush1.msra.mxu0 0.0
        %2756 = vmatprep.subr.mxu0 0.0
        %2757 = vmatpush1.msra.mxu0 0.0
        %2758 = vmatprep.subr.mxu0 0.0
        %2759 = vmatpush1.msra.mxu0 0.0
        %2760 = vmatprep.subr.mxu0 0.0
        %2761 = vmatpush1.msra.mxu0 0.0
        %2762 = vmatprep.subr.mxu0 0.0
        %2763 = vmatpush1.msra.mxu0 0.0
        %2764 = vmatprep.subr.mxu0 0.0
        %2765 = vmatpush1.msra.mxu0 0.0
        %2766 = vmatprep.subr.mxu0 0.0
        %2767 = vmatpush1.msra.mxu0 0.0
        %2768 = vmatprep.subr.mxu0 0.0
        %2769 = vmatpush1.msra.mxu0 0.0
        %2770 = vmatprep.subr.mxu0 0.0
        %2771 = vmatpush1.msra.mxu0 0.0
        %2772 = vmatprep.subr.mxu0 0.0
        %2773 = vmatpush1.msra.mxu0 0.0
        %2774 = vmatprep.subr.mxu0 0.0
        %2775 = vmatpush1.msra.mxu0 0.0
        %2776 = vmatprep.subr.mxu0 0.0
        %2777 = vmatpush1.msra.mxu0 0.0
        %2778 = vmatprep.subr.mxu0 0.0
        %2779 = vmatpush1.msra.mxu0 0.0
        %2780 = vmatprep.subr.mxu0 0.0
        %2781 = vmatpush1.msra.mxu0 0.0
        %2782 = vmatprep.subr.mxu0 0.0
        %2783 = vmatpush1.msra.mxu0 0.0
        %2784 = vmatprep.mubr.f32.mxu0 0.0
        %2785 = vmatmul.mubr.f32.gmra.mrb[0].mxu0 %v2718
        %v2786 = vpop.f32.mrb[0].mxu0
        %v2787 = vadd.f32 %v2643, %v2786
        %v2788 = vpop.f32.mrb[0].mxu0
        %v2789 = vadd.f32 %v2645, %v2788
        %2790 = vdwg.mxu0
        %2791 = vmatprep.subr.mxu0 0.0
        %2792 = vmatpush1.msra.mxu0 %v2552
        %2793 = vmatprep.subr.mxu0 0.0
        %2794 = vmatpush1.msra.mxu0 0.0
        %2795 = vmatprep.subr.mxu0 0.0
        %2796 = vmatpush1.msra.mxu0 0.0
        %2797 = vmatprep.subr.mxu0 0.0
        %2798 = vmatpush1.msra.mxu0 0.0
        %2799 = vmatprep.subr.mxu0 0.0
        %2800 = vmatpush1.msra.mxu0 0.0
        %2801 = vmatprep.subr.mxu0 0.0
        %2802 = vmatpush1.msra.mxu0 0.0
        %2803 = vmatprep.subr.mxu0 0.0
        %2804 = vmatpush1.msra.mxu0 0.0
        %2805 = vmatprep.subr.mxu0 0.0
        %2806 = vmatpush1.msra.mxu0 0.0
        %2807 = vmatprep.subr.mxu0 0.0
        %2808 = vmatpush1.msra.mxu0 0.0
        %2809 = vmatprep.subr.mxu0 0.0
        %2810 = vmatpush1.msra.mxu0 0.0
        %2811 = vmatprep.subr.mxu0 0.0
        %2812 = vmatpush1.msra.mxu0 0.0
        %2813 = vmatprep.subr.mxu0 0.0
        %2814 = vmatpush1.msra.mxu0 0.0
        %2815 = vmatprep.subr.mxu0 0.0
        %2816 = vmatpush1.msra.mxu0 0.0
        %2817 = vmatprep.subr.mxu0 0.0
        %2818 = vmatpush1.msra.mxu0 0.0
        %2819 = vmatprep.subr.mxu0 0.0
        %2820 = vmatpush1.msra.mxu0 0.0
        %2821 = vmatprep.subr.mxu0 0.0
        %2822 = vmatpush1.msra.mxu0 0.0
        %2823 = vmatprep.subr.mxu0 0.0
        %2824 = vmatpush1.msra.mxu0 0.0
        %2825 = vmatprep.subr.mxu0 0.0
        %2826 = vmatpush1.msra.mxu0 0.0
        %2827 = vmatprep.subr.mxu0 0.0
        %2828 = vmatpush1.msra.mxu0 0.0
        %2829 = vmatprep.subr.mxu0 0.0
        %2830 = vmatpush1.msra.mxu0 0.0
        %2831 = vmatprep.subr.mxu0 0.0
        %2832 = vmatpush1.msra.mxu0 0.0
        %2833 = vmatprep.subr.mxu0 0.0
        %2834 = vmatpush1.msra.mxu0 0.0
        %2835 = vmatprep.subr.mxu0 0.0
        %2836 = vmatpush1.msra.mxu0 0.0
        %2837 = vmatprep.subr.mxu0 0.0
        %2838 = vmatpush1.msra.mxu0 0.0
        %2839 = vmatprep.subr.mxu0 0.0
        %2840 = vmatpush1.msra.mxu0 0.0
        %2841 = vmatprep.subr.mxu0 0.0
        %2842 = vmatpush1.msra.mxu0 0.0
        %2843 = vmatprep.subr.mxu0 0.0
        %2844 = vmatpush1.msra.mxu0 0.0
        %2845 = vmatprep.subr.mxu0 0.0
        %2846 = vmatpush1.msra.mxu0 0.0
        %2847 = vmatprep.subr.mxu0 0.0
        %2848 = vmatpush1.msra.mxu0 0.0
        %2849 = vmatprep.subr.mxu0 0.0
        %2850 = vmatpush1.msra.mxu0 0.0
        %2851 = vmatprep.subr.mxu0 0.0
        %2852 = vmatpush1.msra.mxu0 0.0
        %2853 = vmatprep.subr.mxu0 0.0
        %2854 = vmatpush1.msra.mxu0 0.0
        %2855 = vmatprep.mubr.f32.mxu0 0.0
        %2856 = vmatmul.mubr.f32.gmra.mrb[0].mxu0 %v2718
        %v2857 = vpop.f32.mrb[0].mxu0
        %v2858 = vadd.f32 %v2714, %v2857
        %v2859 = vpop.f32.mrb[0].mxu0
        %2860 = vdwg.mxu0
        %2861 = vrot.lane.b32.xlu0 %v2539, 17
        %v2862 = vpop.permute.xlu0 %2861
        %2863 = vrot.lane.b32.xlu0 %v2540, 17
        %v2864 = vpop.permute.xlu0 %2863
        %2865 = vrot.lane.b32.xlu0 %v2541, 17
        %v2866 = vpop.permute.xlu0 %2865
        %v2867 = vsel %vm1191, %v2862, %v2864
        %v2868 = vsel %vm1191, %v2864, %v2866
        %v2872 = vsel %vm1191, 0.0, %v2862
        %s2873 = scalar_lea.vmem %s5, 88
        %v2874 = vld [vmem:[%s2873] sm:$0xff]
        %v2876 = vsel %vm661, %v2874, 0
        %2878 = vmatprep.subr.mxu0 %v2867
        %2879 = vmatpush1.msra.mxu0 %v2872
        %2880 = vmatprep.subr.mxu0 0.0
        %2881 = vmatpush1.msra.mxu0 0.0
        %2882 = vmatprep.subr.mxu0 0.0
        %2883 = vmatpush1.msra.mxu0 0.0
        %2884 = vmatprep.subr.mxu0 0.0
        %2885 = vmatpush1.msra.mxu0 0.0
        %2886 = vmatprep.subr.mxu0 0.0
        %2887 = vmatpush1.msra.mxu0 0.0
        %2888 = vmatprep.subr.mxu0 0.0
        %2889 = vmatpush1.msra.mxu0 0.0
        %2890 = vmatprep.subr.mxu0 0.0
        %2891 = vmatpush1.msra.mxu0 0.0
        %2892 = vmatprep.subr.mxu0 0.0
        %2893 = vmatpush1.msra.mxu0 0.0
        %2894 = vmatprep.subr.mxu0 0.0
        %2895 = vmatpush1.msra.mxu0 0.0
        %2896 = vmatprep.subr.mxu0 0.0
        %2897 = vmatpush1.msra.mxu0 0.0
        %2898 = vmatprep.subr.mxu0 0.0
        %2899 = vmatpush1.msra.mxu0 0.0
        %2900 = vmatprep.subr.mxu0 0.0
        %2901 = vmatpush1.msra.mxu0 0.0
        %2902 = vmatprep.subr.mxu0 0.0
        %2903 = vmatpush1.msra.mxu0 0.0
        %2904 = vmatprep.subr.mxu0 0.0
        %2905 = vmatpush1.msra.mxu0 0.0
        %2906 = vmatprep.subr.mxu0 0.0
        %2907 = vmatpush1.msra.mxu0 0.0
        %2908 = vmatprep.subr.mxu0 0.0
        %2909 = vmatpush1.msra.mxu0 0.0
        %2910 = vmatprep.subr.mxu0 0.0
        %2911 = vmatpush1.msra.mxu0 0.0
        %2912 = vmatprep.subr.mxu0 0.0
        %2913 = vmatpush1.msra.mxu0 0.0
        %2914 = vmatprep.subr.mxu0 0.0
        %2915 = vmatpush1.msra.mxu0 0.0
        %2916 = vmatprep.subr.mxu0 0.0
        %2917 = vmatpush1.msra.mxu0 0.0
        %2918 = vmatprep.subr.mxu0 0.0
        %2919 = vmatpush1.msra.mxu0 0.0
        %2920 = vmatprep.subr.mxu0 0.0
        %2921 = vmatpush1.msra.mxu0 0.0
        %2922 = vmatprep.subr.mxu0 0.0
        %2923 = vmatpush1.msra.mxu0 0.0
        %2924 = vmatprep.subr.mxu0 0.0
        %2925 = vmatpush1.msra.mxu0 0.0
        %2926 = vmatprep.subr.mxu0 0.0
        %2927 = vmatpush1.msra.mxu0 0.0
        %2928 = vmatprep.subr.mxu0 0.0
        %2929 = vmatpush1.msra.mxu0 0.0
        %2930 = vmatprep.subr.mxu0 0.0
        %2931 = vmatpush1.msra.mxu0 0.0
        %2932 = vmatprep.subr.mxu0 0.0
        %2933 = vmatpush1.msra.mxu0 0.0
        %2934 = vmatprep.subr.mxu0 0.0
        %2935 = vmatpush1.msra.mxu0 0.0
        %2936 = vmatprep.subr.mxu0 0.0
        %2937 = vmatpush1.msra.mxu0 0.0
        %2938 = vmatprep.subr.mxu0 0.0
        %2939 = vmatpush1.msra.mxu0 0.0
        %2940 = vmatprep.subr.mxu0 0.0
        %2941 = vmatpush1.msra.mxu0 0.0
        %2942 = vmatprep.mubr.f32.mxu0 0.0
        %2943 = vmatmul.mubr.f32.gmra.mrb[0].mxu0 %v2876
        %v2944 = vpop.f32.mrb[0].mxu0
        %v2945 = vadd.f32 0.0, %v2944
        %v2946 = vpop.f32.mrb[0].mxu0
        %v2947 = vadd.f32 0.0, %v2946
        %2948 = vdwg.mxu0
        %2949 = vmatprep.subr.mxu0 0.0
        %2950 = vmatpush1.msra.mxu0 %v2868
        %2951 = vmatprep.subr.mxu0 0.0
        %2952 = vmatpush1.msra.mxu0 0.0
        %2953 = vmatprep.subr.mxu0 0.0
        %2954 = vmatpush1.msra.mxu0 0.0
        %2955 = vmatprep.subr.mxu0 0.0
        %2956 = vmatpush1.msra.mxu0 0.0
        %2957 = vmatprep.subr.mxu0 0.0
        %2958 = vmatpush1.msra.mxu0 0.0
        %2959 = vmatprep.subr.mxu0 0.0
        %2960 = vmatpush1.msra.mxu0 0.0
        %2961 = vmatprep.subr.mxu0 0.0
        %2962 = vmatpush1.msra.mxu0 0.0
        %2963 = vmatprep.subr.mxu0 0.0
        %2964 = vmatpush1.msra.mxu0 0.0
        %2965 = vmatprep.subr.mxu0 0.0
        %2966 = vmatpush1.msra.mxu0 0.0
        %2967 = vmatprep.subr.mxu0 0.0
        %2968 = vmatpush1.msra.mxu0 0.0
        %2969 = vmatprep.subr.mxu0 0.0
        %2970 = vmatpush1.msra.mxu0 0.0
        %2971 = vmatprep.subr.mxu0 0.0
        %2972 = vmatpush1.msra.mxu0 0.0
        %2973 = vmatprep.subr.mxu0 0.0
        %2974 = vmatpush1.msra.mxu0 0.0
        %2975 = vmatprep.subr.mxu0 0.0
        %2976 = vmatpush1.msra.mxu0 0.0
        %2977 = vmatprep.subr.mxu0 0.0
        %2978 = vmatpush1.msra.mxu0 0.0
        %2979 = vmatprep.subr.mxu0 0.0
        %2980 = vmatpush1.msra.mxu0 0.0
        %2981 = vmatprep.subr.mxu0 0.0
        %2982 = vmatpush1.msra.mxu0 0.0
        %2983 = vmatprep.subr.mxu0 0.0
        %2984 = vmatpush1.msra.mxu0 0.0
        %2985 = vmatprep.subr.mxu0 0.0
        %2986 = vmatpush1.msra.mxu0 0.0
        %2987 = vmatprep.subr.mxu0 0.0
        %2988 = vmatpush1.msra.mxu0 0.0
        %2989 = vmatprep.subr.mxu0 0.0
        %2990 = vmatpush1.msra.mxu0 0.0
        %2991 = vmatprep.subr.mxu0 0.0
        %2992 = vmatpush1.msra.mxu0 0.0
        %2993 = vmatprep.subr.mxu0 0.0
        %2994 = vmatpush1.msra.mxu0 0.0
        %2995 = vmatprep.subr.mxu0 0.0
        %2996 = vmatpush1.msra.mxu0 0.0
        %2997 = vmatprep.subr.mxu0 0.0
        %2998 = vmatpush1.msra.mxu0 0.0
        %2999 = vmatprep.subr.mxu0 0.0
        %3000 = vmatpush1.msra.mxu0 0.0
        %3001 = vmatprep.subr.mxu0 0.0
        %3002 = vmatpush1.msra.mxu0 0.0
        %3003 = vmatprep.subr.mxu0 0.0
        %3004 = vmatpush1.msra.mxu0 0.0
        %3005 = vmatprep.subr.mxu0 0.0
        %3006 = vmatpush1.msra.mxu0 0.0
        %3007 = vmatprep.subr.mxu0 0.0
        %3008 = vmatpush1.msra.mxu0 0.0
        %3009 = vmatprep.subr.mxu0 0.0
        %3010 = vmatpush1.msra.mxu0 0.0
        %3011 = vmatprep.subr.mxu0 0.0
        %3012 = vmatpush1.msra.mxu0 0.0
        %3013 = vmatprep.mubr.f32.mxu0 0.0
        %3014 = vmatmul.mubr.f32.gmra.mrb[0].mxu0 %v2876
        %v3015 = vpop.f32.mrb[0].mxu0
        %v3016 = vadd.f32 0.0, %v3015
        %v3017 = vpop.f32.mrb[0].mxu0
        %3018 = vdwg.mxu0
        %v3019 = vadd.f32 %v2787, %v2945
        %v3020 = vadd.f32 %v2789, %v2947
        %v3021 = vadd.f32 %v2858, %v3016
        %3022 = vrot.lane.b32.xlu0 %v2539, 1
        %v3023 = vpop.permute.xlu0 %3022
        %3024 = vrot.lane.b32.xlu0 %v2540, 1
        %v3025 = vpop.permute.xlu0 %3024
        %3026 = vrot.lane.b32.xlu0 %v2541, 1
        %v3027 = vpop.permute.xlu0 %3026
        %v3028 = vsel %vm1353, %v3023, %v3025
        %v3029 = vsel %vm1353, %v3025, %v3027
        %v3033 = vsel %vm1353, 0.0, %v3023
        %s3034 = scalar_lea.vmem %s5, 96
        %v3035 = vld [vmem:[%s3034] sm:$0xff]
        %v3037 = vsel %vm661, %v3035, 0
        %3039 = vmatprep.subr.mxu0 %v3028
        %3040 = vmatpush1.msra.mxu0 %v3033
        %3041 = vmatprep.subr.mxu0 0.0
        %3042 = vmatpush1.msra.mxu0 0.0
        %3043 = vmatprep.subr.mxu0 0.0
        %3044 = vmatpush1.msra.mxu0 0.0
        %3045 = vmatprep.subr.mxu0 0.0
        %3046 = vmatpush1.msra.mxu0 0.0
        %3047 = vmatprep.subr.mxu0 0.0
        %3048 = vmatpush1.msra.mxu0 0.0
        %3049 = vmatprep.subr.mxu0 0.0
        %3050 = vmatpush1.msra.mxu0 0.0
        %3051 = vmatprep.subr.mxu0 0.0
        %3052 = vmatpush1.msra.mxu0 0.0
        %3053 = vmatprep.subr.mxu0 0.0
        %3054 = vmatpush1.msra.mxu0 0.0
        %3055 = vmatprep.subr.mxu0 0.0
        %3056 = vmatpush1.msra.mxu0 0.0
        %3057 = vmatprep.subr.mxu0 0.0
        %3058 = vmatpush1.msra.mxu0 0.0
        %3059 = vmatprep.subr.mxu0 0.0
        %3060 = vmatpush1.msra.mxu0 0.0
        %3061 = vmatprep.subr.mxu0 0.0
        %3062 = vmatpush1.msra.mxu0 0.0
        %3063 = vmatprep.subr.mxu0 0.0
        %3064 = vmatpush1.msra.mxu0 0.0
        %3065 = vmatprep.subr.mxu0 0.0
        %3066 = vmatpush1.msra.mxu0 0.0
        %3067 = vmatprep.subr.mxu0 0.0
        %3068 = vmatpush1.msra.mxu0 0.0
        %3069 = vmatprep.subr.mxu0 0.0
        %3070 = vmatpush1.msra.mxu0 0.0
        %3071 = vmatprep.subr.mxu0 0.0
        %3072 = vmatpush1.msra.mxu0 0.0
        %3073 = vmatprep.subr.mxu0 0.0
        %3074 = vmatpush1.msra.mxu0 0.0
        %3075 = vmatprep.subr.mxu0 0.0
        %3076 = vmatpush1.msra.mxu0 0.0
        %3077 = vmatprep.subr.mxu0 0.0
        %3078 = vmatpush1.msra.mxu0 0.0
        %3079 = vmatprep.subr.mxu0 0.0
        %3080 = vmatpush1.msra.mxu0 0.0
        %3081 = vmatprep.subr.mxu0 0.0
        %3082 = vmatpush1.msra.mxu0 0.0
        %3083 = vmatprep.subr.mxu0 0.0
        %3084 = vmatpush1.msra.mxu0 0.0
        %3085 = vmatprep.subr.mxu0 0.0
        %3086 = vmatpush1.msra.mxu0 0.0
        %3087 = vmatprep.subr.mxu0 0.0
        %3088 = vmatpush1.msra.mxu0 0.0
        %3089 = vmatprep.subr.mxu0 0.0
        %3090 = vmatpush1.msra.mxu0 0.0
        %3091 = vmatprep.subr.mxu0 0.0
        %3092 = vmatpush1.msra.mxu0 0.0
        %3093 = vmatprep.subr.mxu0 0.0
        %3094 = vmatpush1.msra.mxu0 0.0
        %3095 = vmatprep.subr.mxu0 0.0
        %3096 = vmatpush1.msra.mxu0 0.0
        %3097 = vmatprep.subr.mxu0 0.0
        %3098 = vmatpush1.msra.mxu0 0.0
        %3099 = vmatprep.subr.mxu0 0.0
        %3100 = vmatpush1.msra.mxu0 0.0
        %3101 = vmatprep.subr.mxu0 0.0
        %3102 = vmatpush1.msra.mxu0 0.0
        %3103 = vmatprep.mubr.f32.mxu0 0.0
        %3104 = vmatmul.mubr.f32.gmra.mrb[0].mxu0 %v3037
        %v3105 = vpop.f32.mrb[0].mxu0
        %v3106 = vadd.f32 0.0, %v3105
        %v3107 = vpop.f32.mrb[0].mxu0
        %v3108 = vadd.f32 0.0, %v3107
        %3109 = vdwg.mxu0
        %3110 = vmatprep.subr.mxu0 0.0
        %3111 = vmatpush1.msra.mxu0 %v3029
        %3112 = vmatprep.subr.mxu0 0.0
        %3113 = vmatpush1.msra.mxu0 0.0
        %3114 = vmatprep.subr.mxu0 0.0
        %3115 = vmatpush1.msra.mxu0 0.0
        %3116 = vmatprep.subr.mxu0 0.0
        %3117 = vmatpush1.msra.mxu0 0.0
        %3118 = vmatprep.subr.mxu0 0.0
        %3119 = vmatpush1.msra.mxu0 0.0
        %3120 = vmatprep.subr.mxu0 0.0
        %3121 = vmatpush1.msra.mxu0 0.0
        %3122 = vmatprep.subr.mxu0 0.0
        %3123 = vmatpush1.msra.mxu0 0.0
        %3124 = vmatprep.subr.mxu0 0.0
        %3125 = vmatpush1.msra.mxu0 0.0
        %3126 = vmatprep.subr.mxu0 0.0
        %3127 = vmatpush1.msra.mxu0 0.0
        %3128 = vmatprep.subr.mxu0 0.0
        %3129 = vmatpush1.msra.mxu0 0.0
        %3130 = vmatprep.subr.mxu0 0.0
        %3131 = vmatpush1.msra.mxu0 0.0
        %3132 = vmatprep.subr.mxu0 0.0
        %3133 = vmatpush1.msra.mxu0 0.0
        %3134 = vmatprep.subr.mxu0 0.0
        %3135 = vmatpush1.msra.mxu0 0.0
        %3136 = vmatprep.subr.mxu0 0.0
        %3137 = vmatpush1.msra.mxu0 0.0
        %3138 = vmatprep.subr.mxu0 0.0
        %3139 = vmatpush1.msra.mxu0 0.0
        %3140 = vmatprep.subr.mxu0 0.0
        %3141 = vmatpush1.msra.mxu0 0.0
        %3142 = vmatprep.subr.mxu0 0.0
        %3143 = vmatpush1.msra.mxu0 0.0
        %3144 = vmatprep.subr.mxu0 0.0
        %3145 = vmatpush1.msra.mxu0 0.0
        %3146 = vmatprep.subr.mxu0 0.0
        %3147 = vmatpush1.msra.mxu0 0.0
        %3148 = vmatprep.subr.mxu0 0.0
        %3149 = vmatpush1.msra.mxu0 0.0
        %3150 = vmatprep.subr.mxu0 0.0
        %3151 = vmatpush1.msra.mxu0 0.0
        %3152 = vmatprep.subr.mxu0 0.0
        %3153 = vmatpush1.msra.mxu0 0.0
        %3154 = vmatprep.subr.mxu0 0.0
        %3155 = vmatpush1.msra.mxu0 0.0
        %3156 = vmatprep.subr.mxu0 0.0
        %3157 = vmatpush1.msra.mxu0 0.0
        %3158 = vmatprep.subr.mxu0 0.0
        %3159 = vmatpush1.msra.mxu0 0.0
        %3160 = vmatprep.subr.mxu0 0.0
        %3161 = vmatpush1.msra.mxu0 0.0
        %3162 = vmatprep.subr.mxu0 0.0
        %3163 = vmatpush1.msra.mxu0 0.0
        %3164 = vmatprep.subr.mxu0 0.0
        %3165 = vmatpush1.msra.mxu0 0.0
        %3166 = vmatprep.subr.mxu0 0.0
        %3167 = vmatpush1.msra.mxu0 0.0
        %3168 = vmatprep.subr.mxu0 0.0
        %3169 = vmatpush1.msra.mxu0 0.0
        %3170 = vmatprep.subr.mxu0 0.0
        %3171 = vmatpush1.msra.mxu0 0.0
        %3172 = vmatprep.subr.mxu0 0.0
        %3173 = vmatpush1.msra.mxu0 0.0
        %3174 = vmatprep.mubr.f32.mxu0 0.0
        %3175 = vmatmul.mubr.f32.gmra.mrb[0].mxu0 %v3037
        %v3176 = vpop.f32.mrb[0].mxu0
        %v3177 = vadd.f32 0.0, %v3176
        %v3178 = vpop.f32.mrb[0].mxu0
        %3179 = vdwg.mxu0
        %v3180 = vadd.f32 %v3019, %v3106
        %v3181 = vadd.f32 %v3020, %v3108
        %v3182 = vadd.f32 %v3021, %v3177
        %s3183 = scalar_lea.vmem %s5, 104
        %v3184 = vld [vmem:[%s3183] sm:$0xff]
        %v3186 = vsel %vm661, %v3184, 0
        %3188 = vmatprep.subr.mxu0 %v2540
        %3189 = vmatpush1.msra.mxu0 %v2539
        %3190 = vmatprep.subr.mxu0 0.0
        %3191 = vmatpush1.msra.mxu0 0.0
        %3192 = vmatprep.subr.mxu0 0.0
        %3193 = vmatpush1.msra.mxu0 0.0
        %3194 = vmatprep.subr.mxu0 0.0
        %3195 = vmatpush1.msra.mxu0 0.0
        %3196 = vmatprep.subr.mxu0 0.0
        %3197 = vmatpush1.msra.mxu0 0.0
        %3198 = vmatprep.subr.mxu0 0.0
        %3199 = vmatpush1.msra.mxu0 0.0
        %3200 = vmatprep.subr.mxu0 0.0
        %3201 = vmatpush1.msra.mxu0 0.0
        %3202 = vmatprep.subr.mxu0 0.0
        %3203 = vmatpush1.msra.mxu0 0.0
        %3204 = vmatprep.subr.mxu0 0.0
        %3205 = vmatpush1.msra.mxu0 0.0
        %3206 = vmatprep.subr.mxu0 0.0
        %3207 = vmatpush1.msra.mxu0 0.0
        %3208 = vmatprep.subr.mxu0 0.0
        %3209 = vmatpush1.msra.mxu0 0.0
        %3210 = vmatprep.subr.mxu0 0.0
        %3211 = vmatpush1.msra.mxu0 0.0
        %3212 = vmatprep.subr.mxu0 0.0
        %3213 = vmatpush1.msra.mxu0 0.0
        %3214 = vmatprep.subr.mxu0 0.0
        %3215 = vmatpush1.msra.mxu0 0.0
        %3216 = vmatprep.subr.mxu0 0.0
        %3217 = vmatpush1.msra.mxu0 0.0
        %3218 = vmatprep.subr.mxu0 0.0
        %3219 = vmatpush1.msra.mxu0 0.0
        %3220 = vmatprep.subr.mxu0 0.0
        %3221 = vmatpush1.msra.mxu0 0.0
        %3222 = vmatprep.subr.mxu0 0.0
        %3223 = vmatpush1.msra.mxu0 0.0
        %3224 = vmatprep.subr.mxu0 0.0
        %3225 = vmatpush1.msra.mxu0 0.0
        %3226 = vmatprep.subr.mxu0 0.0
        %3227 = vmatpush1.msra.mxu0 0.0
        %3228 = vmatprep.subr.mxu0 0.0
        %3229 = vmatpush1.msra.mxu0 0.0
        %3230 = vmatprep.subr.mxu0 0.0
        %3231 = vmatpush1.msra.mxu0 0.0
        %3232 = vmatprep.subr.mxu0 0.0
        %3233 = vmatpush1.msra.mxu0 0.0
        %3234 = vmatprep.subr.mxu0 0.0
        %3235 = vmatpush1.msra.mxu0 0.0
        %3236 = vmatprep.subr.mxu0 0.0
        %3237 = vmatpush1.msra.mxu0 0.0
        %3238 = vmatprep.subr.mxu0 0.0
        %3239 = vmatpush1.msra.mxu0 0.0
        %3240 = vmatprep.subr.mxu0 0.0
        %3241 = vmatpush1.msra.mxu0 0.0
        %3242 = vmatprep.subr.mxu0 0.0
        %3243 = vmatpush1.msra.mxu0 0.0
        %3244 = vmatprep.subr.mxu0 0.0
        %3245 = vmatpush1.msra.mxu0 0.0
        %3246 = vmatprep.subr.mxu0 0.0
        %3247 = vmatpush1.msra.mxu0 0.0
        %3248 = vmatprep.subr.mxu0 0.0
        %3249 = vmatpush1.msra.mxu0 0.0
        %3250 = vmatprep.subr.mxu0 0.0
        %3251 = vmatpush1.msra.mxu0 0.0
        %3252 = vmatprep.mubr.f32.mxu0 0.0
        %3253 = vmatmul.mubr.f32.gmra.mrb[0].mxu0 %v3186
        %v3254 = vpop.f32.mrb[0].mxu0
        %v3255 = vadd.f32 0.0, %v3254
        %v3256 = vpop.f32.mrb[0].mxu0
        %v3257 = vadd.f32 0.0, %v3256
        %3258 = vdwg.mxu0
        %3259 = vmatprep.subr.mxu0 0.0
        %3260 = vmatpush1.msra.mxu0 %v2541
        %3261 = vmatprep.subr.mxu0 0.0
        %3262 = vmatpush1.msra.mxu0 0.0
        %3263 = vmatprep.subr.mxu0 0.0
        %3264 = vmatpush1.msra.mxu0 0.0
        %3265 = vmatprep.subr.mxu0 0.0
        %3266 = vmatpush1.msra.mxu0 0.0
        %3267 = vmatprep.subr.mxu0 0.0
        %3268 = vmatpush1.msra.mxu0 0.0
        %3269 = vmatprep.subr.mxu0 0.0
        %3270 = vmatpush1.msra.mxu0 0.0
        %3271 = vmatprep.subr.mxu0 0.0
        %3272 = vmatpush1.msra.mxu0 0.0
        %3273 = vmatprep.subr.mxu0 0.0
        %3274 = vmatpush1.msra.mxu0 0.0
        %3275 = vmatprep.subr.mxu0 0.0
        %3276 = vmatpush1.msra.mxu0 0.0
        %3277 = vmatprep.subr.mxu0 0.0
        %3278 = vmatpush1.msra.mxu0 0.0
        %3279 = vmatprep.subr.mxu0 0.0
        %3280 = vmatpush1.msra.mxu0 0.0
        %3281 = vmatprep.subr.mxu0 0.0
        %3282 = vmatpush1.msra.mxu0 0.0
        %3283 = vmatprep.subr.mxu0 0.0
        %3284 = vmatpush1.msra.mxu0 0.0
        %3285 = vmatprep.subr.mxu0 0.0
        %3286 = vmatpush1.msra.mxu0 0.0
        %3287 = vmatprep.subr.mxu0 0.0
        %3288 = vmatpush1.msra.mxu0 0.0
        %3289 = vmatprep.subr.mxu0 0.0
        %3290 = vmatpush1.msra.mxu0 0.0
        %3291 = vmatprep.subr.mxu0 0.0
        %3292 = vmatpush1.msra.mxu0 0.0
        %3293 = vmatprep.subr.mxu0 0.0
        %3294 = vmatpush1.msra.mxu0 0.0
        %3295 = vmatprep.subr.mxu0 0.0
        %3296 = vmatpush1.msra.mxu0 0.0
        %3297 = vmatprep.subr.mxu0 0.0
        %3298 = vmatpush1.msra.mxu0 0.0
        %3299 = vmatprep.subr.mxu0 0.0
        %3300 = vmatpush1.msra.mxu0 0.0
        %3301 = vmatprep.subr.mxu0 0.0
        %3302 = vmatpush1.msra.mxu0 0.0
        %3303 = vmatprep.subr.mxu0 0.0
        %3304 = vmatpush1.msra.mxu0 0.0
        %3305 = vmatprep.subr.mxu0 0.0
        %3306 = vmatpush1.msra.mxu0 0.0
        %3307 = vmatprep.subr.mxu0 0.0
        %3308 = vmatpush1.msra.mxu0 0.0
        %3309 = vmatprep.subr.mxu0 0.0
        %3310 = vmatpush1.msra.mxu0 0.0
        %3311 = vmatprep.subr.mxu0 0.0
        %3312 = vmatpush1.msra.mxu0 0.0
        %3313 = vmatprep.subr.mxu0 0.0
        %3314 = vmatpush1.msra.mxu0 0.0
        %3315 = vmatprep.subr.mxu0 0.0
        %3316 = vmatpush1.msra.mxu0 0.0
        %3317 = vmatprep.subr.mxu0 0.0
        %3318 = vmatpush1.msra.mxu0 0.0
        %3319 = vmatprep.subr.mxu0 0.0
        %3320 = vmatpush1.msra.mxu0 0.0
        %3321 = vmatprep.subr.mxu0 0.0
        %3322 = vmatpush1.msra.mxu0 0.0
        %3323 = vmatprep.mubr.f32.mxu0 0.0
        %3324 = vmatmul.mubr.f32.gmra.mrb[0].mxu0 %v3186
        %v3325 = vpop.f32.mrb[0].mxu0
        %v3326 = vadd.f32 0.0, %v3325
        %v3327 = vpop.f32.mrb[0].mxu0
        %3328 = vdwg.mxu0
        %v3329 = vadd.f32 %v3180, %v3255
        %v3330 = vadd.f32 %v3181, %v3257
        %v3331 = vadd.f32 %v3182, %v3326
        %3332 = vrot.lane.b32.xlu0 %v2539, 127
        %v3333 = vpop.permute.xlu0 %3332
        %3334 = vrot.lane.b32.xlu0 %v2540, 127
        %v3335 = vpop.permute.xlu0 %3334
        %3336 = vrot.lane.b32.xlu0 %v2541, 127
        %v3337 = vpop.permute.xlu0 %3336
        %v3338 = vsel %vm1664, %v3333, %v3335
        %v3339 = vsel %vm1664, %v3335, %v3337
        %v3343 = vsel %vm1664, %v3337, 0.0
        %s3344 = scalar_lea.vmem %s5, 112
        %v3345 = vld [vmem:[%s3344] sm:$0xff]
        %v3347 = vsel %vm661, %v3345, 0
        %3349 = vmatprep.subr.mxu0 %v3339
        %3350 = vmatpush1.msra.mxu0 %v3338
        %3351 = vmatprep.subr.mxu0 0.0
        %3352 = vmatpush1.msra.mxu0 0.0
        %3353 = vmatprep.subr.mxu0 0.0
        %3354 = vmatpush1.msra.mxu0 0.0
        %3355 = vmatprep.subr.mxu0 0.0
        %3356 = vmatpush1.msra.mxu0 0.0
        %3357 = vmatprep.subr.mxu0 0.0
        %3358 = vmatpush1.msra.mxu0 0.0
        %3359 = vmatprep.subr.mxu0 0.0
        %3360 = vmatpush1.msra.mxu0 0.0
        %3361 = vmatprep.subr.mxu0 0.0
        %3362 = vmatpush1.msra.mxu0 0.0
        %3363 = vmatprep.subr.mxu0 0.0
        %3364 = vmatpush1.msra.mxu0 0.0
        %3365 = vmatprep.subr.mxu0 0.0
        %3366 = vmatpush1.msra.mxu0 0.0
        %3367 = vmatprep.subr.mxu0 0.0
        %3368 = vmatpush1.msra.mxu0 0.0
        %3369 = vmatprep.subr.mxu0 0.0
        %3370 = vmatpush1.msra.mxu0 0.0
        %3371 = vmatprep.subr.mxu0 0.0
        %3372 = vmatpush1.msra.mxu0 0.0
        %3373 = vmatprep.subr.mxu0 0.0
        %3374 = vmatpush1.msra.mxu0 0.0
        %3375 = vmatprep.subr.mxu0 0.0
        %3376 = vmatpush1.msra.mxu0 0.0
        %3377 = vmatprep.subr.mxu0 0.0
        %3378 = vmatpush1.msra.mxu0 0.0
        %3379 = vmatprep.subr.mxu0 0.0
        %3380 = vmatpush1.msra.mxu0 0.0
        %3381 = vmatprep.subr.mxu0 0.0
        %3382 = vmatpush1.msra.mxu0 0.0
        %3383 = vmatprep.subr.mxu0 0.0
        %3384 = vmatpush1.msra.mxu0 0.0
        %3385 = vmatprep.subr.mxu0 0.0
        %3386 = vmatpush1.msra.mxu0 0.0
        %3387 = vmatprep.subr.mxu0 0.0
        %3388 = vmatpush1.msra.mxu0 0.0
        %3389 = vmatprep.subr.mxu0 0.0
        %3390 = vmatpush1.msra.mxu0 0.0
        %3391 = vmatprep.subr.mxu0 0.0
        %3392 = vmatpush1.msra.mxu0 0.0
        %3393 = vmatprep.subr.mxu0 0.0
        %3394 = vmatpush1.msra.mxu0 0.0
        %3395 = vmatprep.subr.mxu0 0.0
        %3396 = vmatpush1.msra.mxu0 0.0
        %3397 = vmatprep.subr.mxu0 0.0
        %3398 = vmatpush1.msra.mxu0 0.0
        %3399 = vmatprep.subr.mxu0 0.0
        %3400 = vmatpush1.msra.mxu0 0.0
        %3401 = vmatprep.subr.mxu0 0.0
        %3402 = vmatpush1.msra.mxu0 0.0
        %3403 = vmatprep.subr.mxu0 0.0
        %3404 = vmatpush1.msra.mxu0 0.0
        %3405 = vmatprep.subr.mxu0 0.0
        %3406 = vmatpush1.msra.mxu0 0.0
        %3407 = vmatprep.subr.mxu0 0.0
        %3408 = vmatpush1.msra.mxu0 0.0
        %3409 = vmatprep.subr.mxu0 0.0
        %3410 = vmatpush1.msra.mxu0 0.0
        %3411 = vmatprep.subr.mxu0 0.0
        %3412 = vmatpush1.msra.mxu0 0.0
        %3413 = vmatprep.mubr.f32.mxu0 0.0
        %3414 = vmatmul.mubr.f32.gmra.mrb[0].mxu0 %v3347
        %v3415 = vpop.f32.mrb[0].mxu0
        %v3416 = vadd.f32 0.0, %v3415
        %v3417 = vpop.f32.mrb[0].mxu0
        %v3418 = vadd.f32 0.0, %v3417
        %3419 = vdwg.mxu0
        %3420 = vmatprep.subr.mxu0 0.0
        %3421 = vmatpush1.msra.mxu0 %v3343
        %3422 = vmatprep.subr.mxu0 0.0
        %3423 = vmatpush1.msra.mxu0 0.0
        %3424 = vmatprep.subr.mxu0 0.0
        %3425 = vmatpush1.msra.mxu0 0.0
        %3426 = vmatprep.subr.mxu0 0.0
        %3427 = vmatpush1.msra.mxu0 0.0
        %3428 = vmatprep.subr.mxu0 0.0
        %3429 = vmatpush1.msra.mxu0 0.0
        %3430 = vmatprep.subr.mxu0 0.0
        %3431 = vmatpush1.msra.mxu0 0.0
        %3432 = vmatprep.subr.mxu0 0.0
        %3433 = vmatpush1.msra.mxu0 0.0
        %3434 = vmatprep.subr.mxu0 0.0
        %3435 = vmatpush1.msra.mxu0 0.0
        %3436 = vmatprep.subr.mxu0 0.0
        %3437 = vmatpush1.msra.mxu0 0.0
        %3438 = vmatprep.subr.mxu0 0.0
        %3439 = vmatpush1.msra.mxu0 0.0
        %3440 = vmatprep.subr.mxu0 0.0
        %3441 = vmatpush1.msra.mxu0 0.0
        %3442 = vmatprep.subr.mxu0 0.0
        %3443 = vmatpush1.msra.mxu0 0.0
        %3444 = vmatprep.subr.mxu0 0.0
        %3445 = vmatpush1.msra.mxu0 0.0
        %3446 = vmatprep.subr.mxu0 0.0
        %3447 = vmatpush1.msra.mxu0 0.0
        %3448 = vmatprep.subr.mxu0 0.0
        %3449 = vmatpush1.msra.mxu0 0.0
        %3450 = vmatprep.subr.mxu0 0.0
        %3451 = vmatpush1.msra.mxu0 0.0
        %3452 = vmatprep.subr.mxu0 0.0
        %3453 = vmatpush1.msra.mxu0 0.0
        %3454 = vmatprep.subr.mxu0 0.0
        %3455 = vmatpush1.msra.mxu0 0.0
        %3456 = vmatprep.subr.mxu0 0.0
        %3457 = vmatpush1.msra.mxu0 0.0
        %3458 = vmatprep.subr.mxu0 0.0
        %3459 = vmatpush1.msra.mxu0 0.0
        %3460 = vmatprep.subr.mxu0 0.0
        %3461 = vmatpush1.msra.mxu0 0.0
        %3462 = vmatprep.subr.mxu0 0.0
        %3463 = vmatpush1.msra.mxu0 0.0
        %3464 = vmatprep.subr.mxu0 0.0
        %3465 = vmatpush1.msra.mxu0 0.0
        %3466 = vmatprep.subr.mxu0 0.0
        %3467 = vmatpush1.msra.mxu0 0.0
        %3468 = vmatprep.subr.mxu0 0.0
        %3469 = vmatpush1.msra.mxu0 0.0
        %3470 = vmatprep.subr.mxu0 0.0
        %3471 = vmatpush1.msra.mxu0 0.0
        %3472 = vmatprep.subr.mxu0 0.0
        %3473 = vmatpush1.msra.mxu0 0.0
        %3474 = vmatprep.subr.mxu0 0.0
        %3475 = vmatpush1.msra.mxu0 0.0
        %3476 = vmatprep.subr.mxu0 0.0
        %3477 = vmatpush1.msra.mxu0 0.0
        %3478 = vmatprep.subr.mxu0 0.0
        %3479 = vmatpush1.msra.mxu0 0.0
        %3480 = vmatprep.subr.mxu0 0.0
        %3481 = vmatpush1.msra.mxu0 0.0
        %3482 = vmatprep.subr.mxu0 0.0
        %3483 = vmatpush1.msra.mxu0 0.0
        %3484 = vmatprep.mubr.f32.mxu0 0.0
        %3485 = vmatmul.mubr.f32.gmra.mrb[0].mxu0 %v3347
        %v3486 = vpop.f32.mrb[0].mxu0
        %v3487 = vadd.f32 0.0, %v3486
        %v3488 = vpop.f32.mrb[0].mxu0
        %3489 = vdwg.mxu0
        %v3490 = vadd.f32 %v3329, %v3416
        %v3491 = vadd.f32 %v3330, %v3418
        %v3492 = vadd.f32 %v3331, %v3487
        %3493 = vrot.lane.b32.xlu0 %v2539, 111
        %v3494 = vpop.permute.xlu0 %3493
        %3495 = vrot.lane.b32.xlu0 %v2540, 111
        %v3496 = vpop.permute.xlu0 %3495
        %3497 = vrot.lane.b32.xlu0 %v2541, 111
        %v3498 = vpop.permute.xlu0 %3497
        %v3499 = vsel %vm1826, %v3494, %v3496
        %v3500 = vsel %vm1826, %v3496, %v3498
        %v3504 = vsel %vm1826, %v3498, 0.0
        %s3505 = scalar_lea.vmem %s5, 120
        %v3506 = vld [vmem:[%s3505] sm:$0xff]
        %v3508 = vsel %vm661, %v3506, 0
        %3510 = vmatprep.subr.mxu0 %v3500
        %3511 = vmatpush1.msra.mxu0 %v3499
        %3512 = vmatprep.subr.mxu0 0.0
        %3513 = vmatpush1.msra.mxu0 0.0
        %3514 = vmatprep.subr.mxu0 0.0
        %3515 = vmatpush1.msra.mxu0 0.0
        %3516 = vmatprep.subr.mxu0 0.0
        %3517 = vmatpush1.msra.mxu0 0.0
        %3518 = vmatprep.subr.mxu0 0.0
        %3519 = vmatpush1.msra.mxu0 0.0
        %3520 = vmatprep.subr.mxu0 0.0
        %3521 = vmatpush1.msra.mxu0 0.0
        %3522 = vmatprep.subr.mxu0 0.0
        %3523 = vmatpush1.msra.mxu0 0.0
        %3524 = vmatprep.subr.mxu0 0.0
        %3525 = vmatpush1.msra.mxu0 0.0
        %3526 = vmatprep.subr.mxu0 0.0
        %3527 = vmatpush1.msra.mxu0 0.0
        %3528 = vmatprep.subr.mxu0 0.0
        %3529 = vmatpush1.msra.mxu0 0.0
        %3530 = vmatprep.subr.mxu0 0.0
        %3531 = vmatpush1.msra.mxu0 0.0
        %3532 = vmatprep.subr.mxu0 0.0
        %3533 = vmatpush1.msra.mxu0 0.0
        %3534 = vmatprep.subr.mxu0 0.0
        %3535 = vmatpush1.msra.mxu0 0.0
        %3536 = vmatprep.subr.mxu0 0.0
        %3537 = vmatpush1.msra.mxu0 0.0
        %3538 = vmatprep.subr.mxu0 0.0
        %3539 = vmatpush1.msra.mxu0 0.0
        %3540 = vmatprep.subr.mxu0 0.0
        %3541 = vmatpush1.msra.mxu0 0.0
        %3542 = vmatprep.subr.mxu0 0.0
        %3543 = vmatpush1.msra.mxu0 0.0
        %3544 = vmatprep.subr.mxu0 0.0
        %3545 = vmatpush1.msra.mxu0 0.0
        %3546 = vmatprep.subr.mxu0 0.0
        %3547 = vmatpush1.msra.mxu0 0.0
        %3548 = vmatprep.subr.mxu0 0.0
        %3549 = vmatpush1.msra.mxu0 0.0
        %3550 = vmatprep.subr.mxu0 0.0
        %3551 = vmatpush1.msra.mxu0 0.0
        %3552 = vmatprep.subr.mxu0 0.0
        %3553 = vmatpush1.msra.mxu0 0.0
        %3554 = vmatprep.subr.mxu0 0.0
        %3555 = vmatpush1.msra.mxu0 0.0
        %3556 = vmatprep.subr.mxu0 0.0
        %3557 = vmatpush1.msra.mxu0 0.0
        %3558 = vmatprep.subr.mxu0 0.0
        %3559 = vmatpush1.msra.mxu0 0.0
        %3560 = vmatprep.subr.mxu0 0.0
        %3561 = vmatpush1.msra.mxu0 0.0
        %3562 = vmatprep.subr.mxu0 0.0
        %3563 = vmatpush1.msra.mxu0 0.0
        %3564 = vmatprep.subr.mxu0 0.0
        %3565 = vmatpush1.msra.mxu0 0.0
        %3566 = vmatprep.subr.mxu0 0.0
        %3567 = vmatpush1.msra.mxu0 0.0
        %3568 = vmatprep.subr.mxu0 0.0
        %3569 = vmatpush1.msra.mxu0 0.0
        %3570 = vmatprep.subr.mxu0 0.0
        %3571 = vmatpush1.msra.mxu0 0.0
        %3572 = vmatprep.subr.mxu0 0.0
        %3573 = vmatpush1.msra.mxu0 0.0
        %3574 = vmatprep.mubr.f32.mxu0 0.0
        %3575 = vmatmul.mubr.f32.gmra.mrb[0].mxu0 %v3508
        %v3576 = vpop.f32.mrb[0].mxu0
        %v3577 = vadd.f32 0.0, %v3576
        %v3578 = vpop.f32.mrb[0].mxu0
        %v3579 = vadd.f32 0.0, %v3578
        %3580 = vdwg.mxu0
        %3581 = vmatprep.subr.mxu0 0.0
        %3582 = vmatpush1.msra.mxu0 %v3504
        %3583 = vmatprep.subr.mxu0 0.0
        %3584 = vmatpush1.msra.mxu0 0.0
        %3585 = vmatprep.subr.mxu0 0.0
        %3586 = vmatpush1.msra.mxu0 0.0
        %3587 = vmatprep.subr.mxu0 0.0
        %3588 = vmatpush1.msra.mxu0 0.0
        %3589 = vmatprep.subr.mxu0 0.0
        %3590 = vmatpush1.msra.mxu0 0.0
        %3591 = vmatprep.subr.mxu0 0.0
        %3592 = vmatpush1.msra.mxu0 0.0
        %3593 = vmatprep.subr.mxu0 0.0
        %3594 = vmatpush1.msra.mxu0 0.0
        %3595 = vmatprep.subr.mxu0 0.0
        %3596 = vmatpush1.msra.mxu0 0.0
        %3597 = vmatprep.subr.mxu0 0.0
        %3598 = vmatpush1.msra.mxu0 0.0
        %3599 = vmatprep.subr.mxu0 0.0
        %3600 = vmatpush1.msra.mxu0 0.0
        %3601 = vmatprep.subr.mxu0 0.0
        %3602 = vmatpush1.msra.mxu0 0.0
        %3603 = vmatprep.subr.mxu0 0.0
        %3604 = vmatpush1.msra.mxu0 0.0
        %3605 = vmatprep.subr.mxu0 0.0
        %3606 = vmatpush1.msra.mxu0 0.0
        %3607 = vmatprep.subr.mxu0 0.0
        %3608 = vmatpush1.msra.mxu0 0.0
        %3609 = vmatprep.subr.mxu0 0.0
        %3610 = vmatpush1.msra.mxu0 0.0
        %3611 = vmatprep.subr.mxu0 0.0
        %3612 = vmatpush1.msra.mxu0 0.0
        %3613 = vmatprep.subr.mxu0 0.0
        %3614 = vmatpush1.msra.mxu0 0.0
        %3615 = vmatprep.subr.mxu0 0.0
        %3616 = vmatpush1.msra.mxu0 0.0
        %3617 = vmatprep.subr.mxu0 0.0
        %3618 = vmatpush1.msra.mxu0 0.0
        %3619 = vmatprep.subr.mxu0 0.0
        %3620 = vmatpush1.msra.mxu0 0.0
        %3621 = vmatprep.subr.mxu0 0.0
        %3622 = vmatpush1.msra.mxu0 0.0
        %3623 = vmatprep.subr.mxu0 0.0
        %3624 = vmatpush1.msra.mxu0 0.0
        %3625 = vmatprep.subr.mxu0 0.0
        %3626 = vmatpush1.msra.mxu0 0.0
        %3627 = vmatprep.subr.mxu0 0.0
        %3628 = vmatpush1.msra.mxu0 0.0
        %3629 = vmatprep.subr.mxu0 0.0
        %3630 = vmatpush1.msra.mxu0 0.0
        %3631 = vmatprep.subr.mxu0 0.0
        %3632 = vmatpush1.msra.mxu0 0.0
        %3633 = vmatprep.subr.mxu0 0.0
        %3634 = vmatpush1.msra.mxu0 0.0
        %3635 = vmatprep.subr.mxu0 0.0
        %3636 = vmatpush1.msra.mxu0 0.0
        %3637 = vmatprep.subr.mxu0 0.0
        %3638 = vmatpush1.msra.mxu0 0.0
        %3639 = vmatprep.subr.mxu0 0.0
        %3640 = vmatpush1.msra.mxu0 0.0
        %3641 = vmatprep.subr.mxu0 0.0
        %3642 = vmatpush1.msra.mxu0 0.0
        %3643 = vmatprep.subr.mxu0 0.0
        %3644 = vmatpush1.msra.mxu0 0.0
        %3645 = vmatprep.mubr.f32.mxu0 0.0
        %3646 = vmatmul.mubr.f32.gmra.mrb[0].mxu0 %v3508
        %v3647 = vpop.f32.mrb[0].mxu0
        %v3648 = vadd.f32 0.0, %v3647
        %v3649 = vpop.f32.mrb[0].mxu0
        %3650 = vdwg.mxu0
        %v3651 = vadd.f32 %v3490, %v3577
        %v3652 = vadd.f32 %v3491, %v3579
        %v3653 = vadd.f32 %v3492, %v3648
        %3654 = vrot.lane.b32.xlu0 %v2539, 110
        %v3655 = vpop.permute.xlu0 %3654
        %3656 = vrot.lane.b32.xlu0 %v2540, 110
        %v3657 = vpop.permute.xlu0 %3656
        %3658 = vrot.lane.b32.xlu0 %v2541, 110
        %v3659 = vpop.permute.xlu0 %3658
        %v3660 = vsel %vm1988, %v3655, %v3657
        %v3661 = vsel %vm1988, %v3657, %v3659
        %v3665 = vsel %vm1988, %v3659, 0.0
        %s3666 = scalar_lea.vmem %s5, 128
        %v3667 = vld [vmem:[%s3666] sm:$0xff]
        %v3669 = vsel %vm661, %v3667, 0
        %3671 = vmatprep.subr.mxu0 %v3661
        %3672 = vmatpush1.msra.mxu0 %v3660
        %3673 = vmatprep.subr.mxu0 0.0
        %3674 = vmatpush1.msra.mxu0 0.0
        %3675 = vmatprep.subr.mxu0 0.0
        %3676 = vmatpush1.msra.mxu0 0.0
        %3677 = vmatprep.subr.mxu0 0.0
        %3678 = vmatpush1.msra.mxu0 0.0
        %3679 = vmatprep.subr.mxu0 0.0
        %3680 = vmatpush1.msra.mxu0 0.0
        %3681 = vmatprep.subr.mxu0 0.0
        %3682 = vmatpush1.msra.mxu0 0.0
        %3683 = vmatprep.subr.mxu0 0.0
        %3684 = vmatpush1.msra.mxu0 0.0
        %3685 = vmatprep.subr.mxu0 0.0
        %3686 = vmatpush1.msra.mxu0 0.0
        %3687 = vmatprep.subr.mxu0 0.0
        %3688 = vmatpush1.msra.mxu0 0.0
        %3689 = vmatprep.subr.mxu0 0.0
        %3690 = vmatpush1.msra.mxu0 0.0
        %3691 = vmatprep.subr.mxu0 0.0
        %3692 = vmatpush1.msra.mxu0 0.0
        %3693 = vmatprep.subr.mxu0 0.0
        %3694 = vmatpush1.msra.mxu0 0.0
        %3695 = vmatprep.subr.mxu0 0.0
        %3696 = vmatpush1.msra.mxu0 0.0
        %3697 = vmatprep.subr.mxu0 0.0
        %3698 = vmatpush1.msra.mxu0 0.0
        %3699 = vmatprep.subr.mxu0 0.0
        %3700 = vmatpush1.msra.mxu0 0.0
        %3701 = vmatprep.subr.mxu0 0.0
        %3702 = vmatpush1.msra.mxu0 0.0
        %3703 = vmatprep.subr.mxu0 0.0
        %3704 = vmatpush1.msra.mxu0 0.0
        %3705 = vmatprep.subr.mxu0 0.0
        %3706 = vmatpush1.msra.mxu0 0.0
        %3707 = vmatprep.subr.mxu0 0.0
        %3708 = vmatpush1.msra.mxu0 0.0
        %3709 = vmatprep.subr.mxu0 0.0
        %3710 = vmatpush1.msra.mxu0 0.0
        %3711 = vmatprep.subr.mxu0 0.0
        %3712 = vmatpush1.msra.mxu0 0.0
        %3713 = vmatprep.subr.mxu0 0.0
        %3714 = vmatpush1.msra.mxu0 0.0
        %3715 = vmatprep.subr.mxu0 0.0
        %3716 = vmatpush1.msra.mxu0 0.0
        %3717 = vmatprep.subr.mxu0 0.0
        %3718 = vmatpush1.msra.mxu0 0.0
        %3719 = vmatprep.subr.mxu0 0.0
        %3720 = vmatpush1.msra.mxu0 0.0
        %3721 = vmatprep.subr.mxu0 0.0
        %3722 = vmatpush1.msra.mxu0 0.0
        %3723 = vmatprep.subr.mxu0 0.0
        %3724 = vmatpush1.msra.mxu0 0.0
        %3725 = vmatprep.subr.mxu0 0.0
        %3726 = vmatpush1.msra.mxu0 0.0
        %3727 = vmatprep.subr.mxu0 0.0
        %3728 = vmatpush1.msra.mxu0 0.0
        %3729 = vmatprep.subr.mxu0 0.0
        %3730 = vmatpush1.msra.mxu0 0.0
        %3731 = vmatprep.subr.mxu0 0.0
        %3732 = vmatpush1.msra.mxu0 0.0
        %3733 = vmatprep.subr.mxu0 0.0
        %3734 = vmatpush1.msra.mxu0 0.0
        %3735 = vmatprep.mubr.f32.mxu0 0.0
        %3736 = vmatmul.mubr.f32.gmra.mrb[0].mxu0 %v3669
        %v3737 = vpop.f32.mrb[0].mxu0
        %v3738 = vadd.f32 0.0, %v3737
        %v3739 = vpop.f32.mrb[0].mxu0
        %v3740 = vadd.f32 0.0, %v3739
        %3741 = vdwg.mxu0
        %3742 = vmatprep.subr.mxu0 0.0
        %3743 = vmatpush1.msra.mxu0 %v3665
        %3744 = vmatprep.subr.mxu0 0.0
        %3745 = vmatpush1.msra.mxu0 0.0
        %3746 = vmatprep.subr.mxu0 0.0
        %3747 = vmatpush1.msra.mxu0 0.0
        %3748 = vmatprep.subr.mxu0 0.0
        %3749 = vmatpush1.msra.mxu0 0.0
        %3750 = vmatprep.subr.mxu0 0.0
        %3751 = vmatpush1.msra.mxu0 0.0
        %3752 = vmatprep.subr.mxu0 0.0
        %3753 = vmatpush1.msra.mxu0 0.0
        %3754 = vmatprep.subr.mxu0 0.0
        %3755 = vmatpush1.msra.mxu0 0.0
        %3756 = vmatprep.subr.mxu0 0.0
        %3757 = vmatpush1.msra.mxu0 0.0
        %3758 = vmatprep.subr.mxu0 0.0
        %3759 = vmatpush1.msra.mxu0 0.0
        %3760 = vmatprep.subr.mxu0 0.0
        %3761 = vmatpush1.msra.mxu0 0.0
        %3762 = vmatprep.subr.mxu0 0.0
        %3763 = vmatpush1.msra.mxu0 0.0
        %3764 = vmatprep.subr.mxu0 0.0
        %3765 = vmatpush1.msra.mxu0 0.0
        %3766 = vmatprep.subr.mxu0 0.0
        %3767 = vmatpush1.msra.mxu0 0.0
        %3768 = vmatprep.subr.mxu0 0.0
        %3769 = vmatpush1.msra.mxu0 0.0
        %3770 = vmatprep.subr.mxu0 0.0
        %3771 = vmatpush1.msra.mxu0 0.0
        %3772 = vmatprep.subr.mxu0 0.0
        %3773 = vmatpush1.msra.mxu0 0.0
        %3774 = vmatprep.subr.mxu0 0.0
        %3775 = vmatpush1.msra.mxu0 0.0
        %3776 = vmatprep.subr.mxu0 0.0
        %3777 = vmatpush1.msra.mxu0 0.0
        %3778 = vmatprep.subr.mxu0 0.0
        %3779 = vmatpush1.msra.mxu0 0.0
        %3780 = vmatprep.subr.mxu0 0.0
        %3781 = vmatpush1.msra.mxu0 0.0
        %3782 = vmatprep.subr.mxu0 0.0
        %3783 = vmatpush1.msra.mxu0 0.0
        %3784 = vmatprep.subr.mxu0 0.0
        %3785 = vmatpush1.msra.mxu0 0.0
        %3786 = vmatprep.subr.mxu0 0.0
        %3787 = vmatpush1.msra.mxu0 0.0
        %3788 = vmatprep.subr.mxu0 0.0
        %3789 = vmatpush1.msra.mxu0 0.0
        %3790 = vmatprep.subr.mxu0 0.0
        %3791 = vmatpush1.msra.mxu0 0.0
        %3792 = vmatprep.subr.mxu0 0.0
        %3793 = vmatpush1.msra.mxu0 0.0
        %3794 = vmatprep.subr.mxu0 0.0
        %3795 = vmatpush1.msra.mxu0 0.0
        %3796 = vmatprep.subr.mxu0 0.0
        %3797 = vmatpush1.msra.mxu0 0.0
        %3798 = vmatprep.subr.mxu0 0.0
        %3799 = vmatpush1.msra.mxu0 0.0
        %3800 = vmatprep.subr.mxu0 0.0
        %3801 = vmatpush1.msra.mxu0 0.0
        %3802 = vmatprep.subr.mxu0 0.0
        %3803 = vmatpush1.msra.mxu0 0.0
        %3804 = vmatprep.subr.mxu0 0.0
        %3805 = vmatpush1.msra.mxu0 0.0
        %3806 = vmatprep.mubr.f32.mxu0 0.0
        %3807 = vmatmul.mubr.f32.gmra.mrb[0].mxu0 %v3669
        %v3808 = vpop.f32.mrb[0].mxu0
        %v3809 = vadd.f32 0.0, %v3808
        %v3810 = vpop.f32.mrb[0].mxu0
        %3811 = vdwg.mxu0
        %v3812 = vadd.f32 %v3651, %v3738
        %v3813 = vadd.f32 %v3652, %v3740
        %v3814 = vadd.f32 %v3653, %v3809
        %3815 = vrot.lane.b32.xlu0 %v2539, 109
        %v3816 = vpop.permute.xlu0 %3815
        %3817 = vrot.lane.b32.xlu0 %v2540, 109
        %v3818 = vpop.permute.xlu0 %3817
        %3819 = vrot.lane.b32.xlu0 %v2541, 109
        %v3820 = vpop.permute.xlu0 %3819
        %v3821 = vsel %vm2150, %v3816, %v3818
        %v3822 = vsel %vm2150, %v3818, %v3820
        %v3826 = vsel %vm2150, %v3820, 0.0
        %s3827 = scalar_lea.vmem %s5, 136
        %v3828 = vld [vmem:[%s3827] sm:$0xff]
        %v3830 = vsel %vm661, %v3828, 0
        %3832 = vmatprep.subr.mxu0 %v3822
        %3833 = vmatpush1.msra.mxu0 %v3821
        %3834 = vmatprep.subr.mxu0 0.0
        %3835 = vmatpush1.msra.mxu0 0.0
        %3836 = vmatprep.subr.mxu0 0.0
        %3837 = vmatpush1.msra.mxu0 0.0
        %3838 = vmatprep.subr.mxu0 0.0
        %3839 = vmatpush1.msra.mxu0 0.0
        %3840 = vmatprep.subr.mxu0 0.0
        %3841 = vmatpush1.msra.mxu0 0.0
        %3842 = vmatprep.subr.mxu0 0.0
        %3843 = vmatpush1.msra.mxu0 0.0
        %3844 = vmatprep.subr.mxu0 0.0
        %3845 = vmatpush1.msra.mxu0 0.0
        %3846 = vmatprep.subr.mxu0 0.0
        %3847 = vmatpush1.msra.mxu0 0.0
        %3848 = vmatprep.subr.mxu0 0.0
        %3849 = vmatpush1.msra.mxu0 0.0
        %3850 = vmatprep.subr.mxu0 0.0
        %3851 = vmatpush1.msra.mxu0 0.0
        %3852 = vmatprep.subr.mxu0 0.0
        %3853 = vmatpush1.msra.mxu0 0.0
        %3854 = vmatprep.subr.mxu0 0.0
        %3855 = vmatpush1.msra.mxu0 0.0
        %3856 = vmatprep.subr.mxu0 0.0
        %3857 = vmatpush1.msra.mxu0 0.0
        %3858 = vmatprep.subr.mxu0 0.0
        %3859 = vmatpush1.msra.mxu0 0.0
        %3860 = vmatprep.subr.mxu0 0.0
        %3861 = vmatpush1.msra.mxu0 0.0
        %3862 = vmatprep.subr.mxu0 0.0
        %3863 = vmatpush1.msra.mxu0 0.0
        %3864 = vmatprep.subr.mxu0 0.0
        %3865 = vmatpush1.msra.mxu0 0.0
        %3866 = vmatprep.subr.mxu0 0.0
        %3867 = vmatpush1.msra.mxu0 0.0
        %3868 = vmatprep.subr.mxu0 0.0
        %3869 = vmatpush1.msra.mxu0 0.0
        %3870 = vmatprep.subr.mxu0 0.0
        %3871 = vmatpush1.msra.mxu0 0.0
        %3872 = vmatprep.subr.mxu0 0.0
        %3873 = vmatpush1.msra.mxu0 0.0
        %3874 = vmatprep.subr.mxu0 0.0
        %3875 = vmatpush1.msra.mxu0 0.0
        %3876 = vmatprep.subr.mxu0 0.0
        %3877 = vmatpush1.msra.mxu0 0.0
        %3878 = vmatprep.subr.mxu0 0.0
        %3879 = vmatpush1.msra.mxu0 0.0
        %3880 = vmatprep.subr.mxu0 0.0
        %3881 = vmatpush1.msra.mxu0 0.0
        %3882 = vmatprep.subr.mxu0 0.0
        %3883 = vmatpush1.msra.mxu0 0.0
        %3884 = vmatprep.subr.mxu0 0.0
        %3885 = vmatpush1.msra.mxu0 0.0
        %3886 = vmatprep.subr.mxu0 0.0
        %3887 = vmatpush1.msra.mxu0 0.0
        %3888 = vmatprep.subr.mxu0 0.0
        %3889 = vmatpush1.msra.mxu0 0.0
        %3890 = vmatprep.subr.mxu0 0.0
        %3891 = vmatpush1.msra.mxu0 0.0
        %3892 = vmatprep.subr.mxu0 0.0
        %3893 = vmatpush1.msra.mxu0 0.0
        %3894 = vmatprep.subr.mxu0 0.0
        %3895 = vmatpush1.msra.mxu0 0.0
        %3896 = vmatprep.mubr.f32.mxu0 0.0
        %3897 = vmatmul.mubr.f32.gmra.mrb[0].mxu0 %v3830
        %v3898 = vpop.f32.mrb[0].mxu0
        %v3899 = vadd.f32 0.0, %v3898
        %v3900 = vpop.f32.mrb[0].mxu0
        %v3901 = vadd.f32 0.0, %v3900
        %3902 = vdwg.mxu0
        %3903 = vmatprep.subr.mxu0 0.0
        %3904 = vmatpush1.msra.mxu0 %v3826
        %3905 = vmatprep.subr.mxu0 0.0
        %3906 = vmatpush1.msra.mxu0 0.0
        %3907 = vmatprep.subr.mxu0 0.0
        %3908 = vmatpush1.msra.mxu0 0.0
        %3909 = vmatprep.subr.mxu0 0.0
        %3910 = vmatpush1.msra.mxu0 0.0
        %3911 = vmatprep.subr.mxu0 0.0
        %3912 = vmatpush1.msra.mxu0 0.0
        %3913 = vmatprep.subr.mxu0 0.0
        %3914 = vmatpush1.msra.mxu0 0.0
        %3915 = vmatprep.subr.mxu0 0.0
        %3916 = vmatpush1.msra.mxu0 0.0
        %3917 = vmatprep.subr.mxu0 0.0
        %3918 = vmatpush1.msra.mxu0 0.0
        %3919 = vmatprep.subr.mxu0 0.0
        %3920 = vmatpush1.msra.mxu0 0.0
        %3921 = vmatprep.subr.mxu0 0.0
        %3922 = vmatpush1.msra.mxu0 0.0
        %3923 = vmatprep.subr.mxu0 0.0
        %3924 = vmatpush1.msra.mxu0 0.0
        %3925 = vmatprep.subr.mxu0 0.0
        %3926 = vmatpush1.msra.mxu0 0.0
        %3927 = vmatprep.subr.mxu0 0.0
        %3928 = vmatpush1.msra.mxu0 0.0
        %3929 = vmatprep.subr.mxu0 0.0
        %3930 = vmatpush1.msra.mxu0 0.0
        %3931 = vmatprep.subr.mxu0 0.0
        %3932 = vmatpush1.msra.mxu0 0.0
        %3933 = vmatprep.subr.mxu0 0.0
        %3934 = vmatpush1.msra.mxu0 0.0
        %3935 = vmatprep.subr.mxu0 0.0
        %3936 = vmatpush1.msra.mxu0 0.0
        %3937 = vmatprep.subr.mxu0 0.0
        %3938 = vmatpush1.msra.mxu0 0.0
        %3939 = vmatprep.subr.mxu0 0.0
        %3940 = vmatpush1.msra.mxu0 0.0
        %3941 = vmatprep.subr.mxu0 0.0
        %3942 = vmatpush1.msra.mxu0 0.0
        %3943 = vmatprep.subr.mxu0 0.0
        %3944 = vmatpush1.msra.mxu0 0.0
        %3945 = vmatprep.subr.mxu0 0.0
        %3946 = vmatpush1.msra.mxu0 0.0
        %3947 = vmatprep.subr.mxu0 0.0
        %3948 = vmatpush1.msra.mxu0 0.0
        %3949 = vmatprep.subr.mxu0 0.0
        %3950 = vmatpush1.msra.mxu0 0.0
        %3951 = vmatprep.subr.mxu0 0.0
        %3952 = vmatpush1.msra.mxu0 0.0
        %3953 = vmatprep.subr.mxu0 0.0
        %3954 = vmatpush1.msra.mxu0 0.0
        %3955 = vmatprep.subr.mxu0 0.0
        %3956 = vmatpush1.msra.mxu0 0.0
        %3957 = vmatprep.subr.mxu0 0.0
        %3958 = vmatpush1.msra.mxu0 0.0
        %3959 = vmatprep.subr.mxu0 0.0
        %3960 = vmatpush1.msra.mxu0 0.0
        %3961 = vmatprep.subr.mxu0 0.0
        %3962 = vmatpush1.msra.mxu0 0.0
        %3963 = vmatprep.subr.mxu0 0.0
        %3964 = vmatpush1.msra.mxu0 0.0
        %3965 = vmatprep.subr.mxu0 0.0
        %3966 = vmatpush1.msra.mxu0 0.0
        %3967 = vmatprep.mubr.f32.mxu0 0.0
        %3968 = vmatmul.mubr.f32.gmra.mrb[0].mxu0 %v3830
        %v3969 = vpop.f32.mrb[0].mxu0
        %v3970 = vadd.f32 0.0, %v3969
        %v3971 = vpop.f32.mrb[0].mxu0
        %3972 = vdwg.mxu0
        %v3973 = vadd.f32 %v3812, %v3899
        %v3974 = vadd.f32 %v3813, %v3901
        %v3975 = vadd.f32 %v3814, %v3970
        %s3976 = scalar_lea.vmem %s6, 16
        %v3977 = vld [vmem:[%s3976] sm:$0xff]
        %3979 = vset.pattern.permute.xlu0 0
        %3980 = vperm.xlu0 %3979, %v3977
        %v3981 = vpop.permute.xlu0 %3980
        %v3983 = vmul.f32 %v3973, %v3981
        %v3984 = vmul.f32 %v3974, %v3981
        %v3985 = vmul.f32 %v3975, %v3981
        %s3986 = scalar_lea.vmem %s6, 24
        %v3987 = vld [vmem:[%s3986] sm:$0xff]
        %3989 = vset.pattern.permute.xlu0 0
        %3990 = vperm.xlu0 %3989, %v3987
        %v3991 = vpop.permute.xlu0 %3990
        %v3993 = vadd.f32 %v3983, %v3991
        %v3994 = vadd.f32 %v3984, %v3991
        %v3995 = vadd.f32 %v3985, %v3991
        %v3996 = vxor.u32 %v3993, 2147483648
        %v3997 = vxor.u32 %v3994, 2147483648
        %v3998 = vxor.u32 %v3995, 2147483648
        %v3999 = vmul.f32 %v3996, 1.442695
        %v4000 = vpow.pop %v3999
        %v4001 = vmul.f32 %v3997, 1.442695
        %v4002 = vpow.pop %v4001
        %v4003 = vmul.f32 %v3998, 1.442695
        %v4004 = vpow.pop %v4003
        %v4005 = vadd.f32 %v4000, 1.0
        %v4006 = vadd.f32 %v4002, 1.0
        %v4007 = vadd.f32 %v4004, 1.0
        %v4008 = vrcp.pop %v4005
        %v4009 = vmul.f32 1.0, %v4008
        %v4010 = vrcp.pop %v4006
        %v4011 = vmul.f32 1.0, %v4010
        %v4012 = vrcp.pop %v4007
        %v4013 = vmul.f32 1.0, %v4012
        %v4014 = vmul.f32 %v3993, %v4009
        %v4015 = vmul.f32 %v3994, %v4011
        %v4016 = vmul.f32 %v3995, %v4013
        %v4017 = vadd.f32 %v4014, %v2349
        %v4018 = vadd.f32 %v4015, %v2350
        %v4019 = vadd.f32 %v4016, %v2351
        %v4020 = vmul.f32 %v4017, %v850
        %v4021 = vmul.f32 %v4018, %v854
        %v4022 = vmul.f32 %v4019, %v858
        %v4023 = vld [vmem:[%s7] sm:$0xff]
        %v4024 = vld [vmem:[%s7 + $0x8] sm:$0xff]
        %v4025 = vld [vmem:[%s8] sm:$0xff]
        %v4026 = vld [vmem:[%s8 + $0x8] sm:$0xff]
        %v4028 = vsel %vm661, %v4025, 0
        %v4031 = vsel %vm661, %v4026, 0
        %4033 = vmatprep.subr.mxu0 %v658
        %4034 = vmatpush1.msra.mxu0 %v657
        %4035 = vmatprep.subr.mxu0 0.0
        %4036 = vmatpush1.msra.mxu0 0.0
        %4037 = vmatprep.subr.mxu0 0.0
        %4038 = vmatpush1.msra.mxu0 0.0
        %4039 = vmatprep.subr.mxu0 0.0
        %4040 = vmatpush1.msra.mxu0 0.0
        %4041 = vmatprep.subr.mxu0 0.0
        %4042 = vmatpush1.msra.mxu0 0.0
        %4043 = vmatprep.subr.mxu0 0.0
        %4044 = vmatpush1.msra.mxu0 0.0
        %4045 = vmatprep.subr.mxu0 0.0
        %4046 = vmatpush1.msra.mxu0 0.0
        %4047 = vmatprep.subr.mxu0 0.0
        %4048 = vmatpush1.msra.mxu0 0.0
        %4049 = vmatprep.subr.mxu0 0.0
        %4050 = vmatpush1.msra.mxu0 0.0
        %4051 = vmatprep.subr.mxu0 0.0
        %4052 = vmatpush1.msra.mxu0 0.0
        %4053 = vmatprep.subr.mxu0 0.0
        %4054 = vmatpush1.msra.mxu0 0.0
        %4055 = vmatprep.subr.mxu0 0.0
        %4056 = vmatpush1.msra.mxu0 0.0
        %4057 = vmatprep.subr.mxu0 0.0
        %4058 = vmatpush1.msra.mxu0 0.0
        %4059 = vmatprep.subr.mxu0 0.0
        %4060 = vmatpush1.msra.mxu0 0.0
        %4061 = vmatprep.subr.mxu0 0.0
        %4062 = vmatpush1.msra.mxu0 0.0
        %4063 = vmatprep.subr.mxu0 0.0
        %4064 = vmatpush1.msra.mxu0 0.0
        %4065 = vmatprep.subr.mxu0 0.0
        %4066 = vmatpush1.msra.mxu0 0.0
        %4067 = vmatprep.subr.mxu0 0.0
        %4068 = vmatpush1.msra.mxu0 0.0
        %4069 = vmatprep.subr.mxu0 0.0
        %4070 = vmatpush1.msra.mxu0 0.0
        %4071 = vmatprep.subr.mxu0 0.0
        %4072 = vmatpush1.msra.mxu0 0.0
        %4073 = vmatprep.subr.mxu0 0.0
        %4074 = vmatpush1.msra.mxu0 0.0
        %4075 = vmatprep.subr.mxu0 0.0
        %4076 = vmatpush1.msra.mxu0 0.0
        %4077 = vmatprep.subr.mxu0 0.0
        %4078 = vmatpush1.msra.mxu0 0.0
        %4079 = vmatprep.subr.mxu0 0.0
        %4080 = vmatpush1.msra.mxu0 0.0
        %4081 = vmatprep.subr.mxu0 0.0
        %4082 = vmatpush1.msra.mxu0 0.0
        %4083 = vmatprep.subr.mxu0 0.0
        %4084 = vmatpush1.msra.mxu0 0.0
        %4085 = vmatprep.subr.mxu0 0.0
        %4086 = vmatpush1.msra.mxu0 0.0
        %4087 = vmatprep.subr.mxu0 0.0
        %4088 = vmatpush1.msra.mxu0 0.0
        %4089 = vmatprep.subr.mxu0 0.0
        %4090 = vmatpush1.msra.mxu0 0.0
        %4091 = vmatprep.subr.mxu0 0.0
        %4092 = vmatpush1.msra.mxu0 0.0
        %4093 = vmatprep.subr.mxu0 0.0
        %4094 = vmatpush1.msra.mxu0 0.0
        %4095 = vmatprep.subr.mxu0 0.0
        %4096 = vmatpush1.msra.mxu0 0.0
        %4097 = vmatprep.mubr.f32.mxu0 0.0
        %4098 = vmatmul.mubr.f32.gmra.mrb[0].mxu0 %v4028
        %v4099 = vpop.f32.mrb[0].mxu0
        %v4100 = vadd.f32 0.0, %v4099
        %v4101 = vpop.f32.mrb[0].mxu0
        %v4102 = vadd.f32 0.0, %v4101
        %4103 = vmatprep.mubr.f32.mxu0 0.0
        %4104 = vmatmul.mubr.f32.gmra.mrb[0].mxu0 %v4031
        %v4105 = vpop.f32.mrb[0].mxu0
        %v4106 = vadd.f32 0.0, %v4105
        %v4107 = vpop.f32.mrb[0].mxu0
        %v4108 = vadd.f32 0.0, %v4107
        %4109 = vdwg.mxu0
        %4110 = vmatprep.subr.mxu0 0.0
        %4111 = vmatpush1.msra.mxu0 %v659
        %4112 = vmatprep.subr.mxu0 0.0
        %4113 = vmatpush1.msra.mxu0 0.0
        %4114 = vmatprep.subr.mxu0 0.0
        %4115 = vmatpush1.msra.mxu0 0.0
        %4116 = vmatprep.subr.mxu0 0.0
        %4117 = vmatpush1.msra.mxu0 0.0
        %4118 = vmatprep.subr.mxu0 0.0
        %4119 = vmatpush1.msra.mxu0 0.0
        %4120 = vmatprep.subr.mxu0 0.0
        %4121 = vmatpush1.msra.mxu0 0.0
        %4122 = vmatprep.subr.mxu0 0.0
        %4123 = vmatpush1.msra.mxu0 0.0
        %4124 = vmatprep.subr.mxu0 0.0
        %4125 = vmatpush1.msra.mxu0 0.0
        %4126 = vmatprep.subr.mxu0 0.0
        %4127 = vmatpush1.msra.mxu0 0.0
        %4128 = vmatprep.subr.mxu0 0.0
        %4129 = vmatpush1.msra.mxu0 0.0
        %4130 = vmatprep.subr.mxu0 0.0
        %4131 = vmatpush1.msra.mxu0 0.0
        %4132 = vmatprep.subr.mxu0 0.0
        %4133 = vmatpush1.msra.mxu0 0.0
        %4134 = vmatprep.subr.mxu0 0.0
        %4135 = vmatpush1.msra.mxu0 0.0
        %4136 = vmatprep.subr.mxu0 0.0
        %4137 = vmatpush1.msra.mxu0 0.0
        %4138 = vmatprep.subr.mxu0 0.0
        %4139 = vmatpush1.msra.mxu0 0.0
        %4140 = vmatprep.subr.mxu0 0.0
        %4141 = vmatpush1.msra.mxu0 0.0
        %4142 = vmatprep.subr.mxu0 0.0
        %4143 = vmatpush1.msra.mxu0 0.0
        %4144 = vmatprep.subr.mxu0 0.0
        %4145 = vmatpush1.msra.mxu0 0.0
        %4146 = vmatprep.subr.mxu0 0.0
        %4147 = vmatpush1.msra.mxu0 0.0
        %4148 = vmatprep.subr.mxu0 0.0
        %4149 = vmatpush1.msra.mxu0 0.0
        %4150 = vmatprep.subr.mxu0 0.0
        %4151 = vmatpush1.msra.mxu0 0.0
        %4152 = vmatprep.subr.mxu0 0.0
        %4153 = vmatpush1.msra.mxu0 0.0
        %4154 = vmatprep.subr.mxu0 0.0
        %4155 = vmatpush1.msra.mxu0 0.0
        %4156 = vmatprep.subr.mxu0 0.0
        %4157 = vmatpush1.msra.mxu0 0.0
        %4158 = vmatprep.subr.mxu0 0.0
        %4159 = vmatpush1.msra.mxu0 0.0
        %4160 = vmatprep.subr.mxu0 0.0
        %4161 = vmatpush1.msra.mxu0 0.0
        %4162 = vmatprep.subr.mxu0 0.0
        %4163 = vmatpush1.msra.mxu0 0.0
        %4164 = vmatprep.subr.mxu0 0.0
        %4165 = vmatpush1.msra.mxu0 0.0
        %4166 = vmatprep.subr.mxu0 0.0
        %4167 = vmatpush1.msra.mxu0 0.0
        %4168 = vmatprep.subr.mxu0 0.0
        %4169 = vmatpush1.msra.mxu0 0.0
        %4170 = vmatprep.subr.mxu0 0.0
        %4171 = vmatpush1.msra.mxu0 0.0
        %4172 = vmatprep.subr.mxu0 0.0
        %4173 = vmatpush1.msra.mxu0 0.0
        %4174 = vmatprep.mubr.f32.mxu0 0.0
        %4175 = vmatmul.mubr.f32.gmra.mrb[0].mxu0 %v4028
        %v4176 = vpop.f32.mrb[0].mxu0
        %v4177 = vadd.f32 0.0, %v4176
        %v4178 = vpop.f32.mrb[0].mxu0
        %4179 = vmatprep.mubr.f32.mxu0 0.0
        %4180 = vmatmul.mubr.f32.gmra.mrb[0].mxu0 %v4031
        %v4181 = vpop.f32.mrb[0].mxu0
        %v4182 = vadd.f32 0.0, %v4181
        %v4183 = vpop.f32.mrb[0].mxu0
        %4184 = vdwg.mxu0
        %v4186 = vsel %vm661, %v4023, 0
        %v4189 = vsel %vm661, %v4024, 0
        %4191 = vmatprep.subr.mxu0 %v4021
        %4192 = vmatpush1.msra.mxu0 %v4020
        %4193 = vmatprep.subr.mxu0 0.0
        %4194 = vmatpush1.msra.mxu0 0.0
        %4195 = vmatprep.subr.mxu0 0.0
        %4196 = vmatpush1.msra.mxu0 0.0
        %4197 = vmatprep.subr.mxu0 0.0
        %4198 = vmatpush1.msra.mxu0 0.0
        %4199 = vmatprep.subr.mxu0 0.0
        %4200 = vmatpush1.msra.mxu0 0.0
        %4201 = vmatprep.subr.mxu0 0.0
        %4202 = vmatpush1.msra.mxu0 0.0
        %4203 = vmatprep.subr.mxu0 0.0
        %4204 = vmatpush1.msra.mxu0 0.0
        %4205 = vmatprep.subr.mxu0 0.0
        %4206 = vmatpush1.msra.mxu0 0.0
        %4207 = vmatprep.subr.mxu0 0.0
        %4208 = vmatpush1.msra.mxu0 0.0
        %4209 = vmatprep.subr.mxu0 0.0
        %4210 = vmatpush1.msra.mxu0 0.0
        %4211 = vmatprep.subr.mxu0 0.0
        %4212 = vmatpush1.msra.mxu0 0.0
        %4213 = vmatprep.subr.mxu0 0.0
        %4214 = vmatpush1.msra.mxu0 0.0
        %4215 = vmatprep.subr.mxu0 0.0
        %4216 = vmatpush1.msra.mxu0 0.0
        %4217 = vmatprep.subr.mxu0 0.0
        %4218 = vmatpush1.msra.mxu0 0.0
        %4219 = vmatprep.subr.mxu0 0.0
        %4220 = vmatpush1.msra.mxu0 0.0
        %4221 = vmatprep.subr.mxu0 0.0
        %4222 = vmatpush1.msra.mxu0 0.0
        %4223 = vmatprep.subr.mxu0 0.0
        %4224 = vmatpush1.msra.mxu0 0.0
        %4225 = vmatprep.subr.mxu0 0.0
        %4226 = vmatpush1.msra.mxu0 0.0
        %4227 = vmatprep.subr.mxu0 0.0
        %4228 = vmatpush1.msra.mxu0 0.0
        %4229 = vmatprep.subr.mxu0 0.0
        %4230 = vmatpush1.msra.mxu0 0.0
        %4231 = vmatprep.subr.mxu0 0.0
        %4232 = vmatpush1.msra.mxu0 0.0
        %4233 = vmatprep.subr.mxu0 0.0
        %4234 = vmatpush1.msra.mxu0 0.0
        %4235 = vmatprep.subr.mxu0 0.0
        %4236 = vmatpush1.msra.mxu0 0.0
        %4237 = vmatprep.subr.mxu0 0.0
        %4238 = vmatpush1.msra.mxu0 0.0
        %4239 = vmatprep.subr.mxu0 0.0
        %4240 = vmatpush1.msra.mxu0 0.0
        %4241 = vmatprep.subr.mxu0 0.0
        %4242 = vmatpush1.msra.mxu0 0.0
        %4243 = vmatprep.subr.mxu0 0.0
        %4244 = vmatpush1.msra.mxu0 0.0
        %4245 = vmatprep.subr.mxu0 0.0
        %4246 = vmatpush1.msra.mxu0 0.0
        %4247 = vmatprep.subr.mxu0 0.0
        %4248 = vmatpush1.msra.mxu0 0.0
        %4249 = vmatprep.subr.mxu0 0.0
        %4250 = vmatpush1.msra.mxu0 0.0
        %4251 = vmatprep.subr.mxu0 0.0
        %4252 = vmatpush1.msra.mxu0 0.0
        %4253 = vmatprep.subr.mxu0 0.0
        %4254 = vmatpush1.msra.mxu0 0.0
        %4255 = vmatprep.mubr.f32.mxu0 0.0
        %4256 = vmatmul.mubr.f32.gmra.mrb[0].mxu0 %v4186
        %v4257 = vpop.f32.mrb[0].mxu0
        %v4258 = vadd.f32 %v4100, %v4257
        %v4259 = vpop.f32.mrb[0].mxu0
        %v4260 = vadd.f32 %v4102, %v4259
        %4261 = vmatprep.mubr.f32.mxu0 0.0
        %4262 = vmatmul.mubr.f32.gmra.mrb[0].mxu0 %v4189
        %v4263 = vpop.f32.mrb[0].mxu0
        %v4264 = vadd.f32 %v4106, %v4263
        %v4265 = vpop.f32.mrb[0].mxu0
        %v4266 = vadd.f32 %v4108, %v4265
        %4267 = vdwg.mxu0
        %4268 = vmatprep.subr.mxu0 0.0
        %4269 = vmatpush1.msra.mxu0 %v4022
        %4270 = vmatprep.subr.mxu0 0.0
        %4271 = vmatpush1.msra.mxu0 0.0
        %4272 = vmatprep.subr.mxu0 0.0
        %4273 = vmatpush1.msra.mxu0 0.0
        %4274 = vmatprep.subr.mxu0 0.0
        %4275 = vmatpush1.msra.mxu0 0.0
        %4276 = vmatprep.subr.mxu0 0.0
        %4277 = vmatpush1.msra.mxu0 0.0
        %4278 = vmatprep.subr.mxu0 0.0
        %4279 = vmatpush1.msra.mxu0 0.0
        %4280 = vmatprep.subr.mxu0 0.0
        %4281 = vmatpush1.msra.mxu0 0.0
        %4282 = vmatprep.subr.mxu0 0.0
        %4283 = vmatpush1.msra.mxu0 0.0
        %4284 = vmatprep.subr.mxu0 0.0
        %4285 = vmatpush1.msra.mxu0 0.0
        %4286 = vmatprep.subr.mxu0 0.0
        %4287 = vmatpush1.msra.mxu0 0.0
        %4288 = vmatprep.subr.mxu0 0.0
        %4289 = vmatpush1.msra.mxu0 0.0
        %4290 = vmatprep.subr.mxu0 0.0
        %4291 = vmatpush1.msra.mxu0 0.0
        %4292 = vmatprep.subr.mxu0 0.0
        %4293 = vmatpush1.msra.mxu0 0.0
        %4294 = vmatprep.subr.mxu0 0.0
        %4295 = vmatpush1.msra.mxu0 0.0
        %4296 = vmatprep.subr.mxu0 0.0
        %4297 = vmatpush1.msra.mxu0 0.0
        %4298 = vmatprep.subr.mxu0 0.0
        %4299 = vmatpush1.msra.mxu0 0.0
        %4300 = vmatprep.subr.mxu0 0.0
        %4301 = vmatpush1.msra.mxu0 0.0
        %4302 = vmatprep.subr.mxu0 0.0
        %4303 = vmatpush1.msra.mxu0 0.0
        %4304 = vmatprep.subr.mxu0 0.0
        %4305 = vmatpush1.msra.mxu0 0.0
        %4306 = vmatprep.subr.mxu0 0.0
        %4307 = vmatpush1.msra.mxu0 0.0
        %4308 = vmatprep.subr.mxu0 0.0
        %4309 = vmatpush1.msra.mxu0 0.0
        %4310 = vmatprep.subr.mxu0 0.0
        %4311 = vmatpush1.msra.mxu0 0.0
        %4312 = vmatprep.subr.mxu0 0.0
        %4313 = vmatpush1.msra.mxu0 0.0
        %4314 = vmatprep.subr.mxu0 0.0
        %4315 = vmatpush1.msra.mxu0 0.0
        %4316 = vmatprep.subr.mxu0 0.0
        %4317 = vmatpush1.msra.mxu0 0.0
        %4318 = vmatprep.subr.mxu0 0.0
        %4319 = vmatpush1.msra.mxu0 0.0
        %4320 = vmatprep.subr.mxu0 0.0
        %4321 = vmatpush1.msra.mxu0 0.0
        %4322 = vmatprep.subr.mxu0 0.0
        %4323 = vmatpush1.msra.mxu0 0.0
        %4324 = vmatprep.subr.mxu0 0.0
        %4325 = vmatpush1.msra.mxu0 0.0
        %4326 = vmatprep.subr.mxu0 0.0
        %4327 = vmatpush1.msra.mxu0 0.0
        %4328 = vmatprep.subr.mxu0 0.0
        %4329 = vmatpush1.msra.mxu0 0.0
        %4330 = vmatprep.subr.mxu0 0.0
        %4331 = vmatpush1.msra.mxu0 0.0
        %4332 = vmatprep.mubr.f32.mxu0 0.0
        %4333 = vmatmul.mubr.f32.gmra.mrb[0].mxu0 %v4186
        %v4334 = vpop.f32.mrb[0].mxu0
        %v4335 = vadd.f32 %v4177, %v4334
        %v4336 = vpop.f32.mrb[0].mxu0
        %4337 = vmatprep.mubr.f32.mxu0 0.0
        %4338 = vmatmul.mubr.f32.gmra.mrb[0].mxu0 %v4189
        %v4339 = vpop.f32.mrb[0].mxu0
        %v4340 = vadd.f32 %v4182, %v4339
        %v4341 = vpop.f32.mrb[0].mxu0
        %4342 = vdwg.mxu0
        %v4343 = vld [vmem:[%s9] sm:$0xff]
        %v4344 = vld [vmem:[%s9 + $0x8] sm:$0xff]
        %4346 = vset.pattern.permute.xlu0 0
        %4347 = vperm.xlu0 %4346, %v4343
        %v4348 = vpop.permute.xlu0 %4347
        %4351 = vset.pattern.permute.xlu0 0
        %4352 = vperm.xlu0 %4351, %v4344
        %v4353 = vpop.permute.xlu0 %4352
        %v4355 = vmul.f32 %v4258, %v4348
        %v4356 = vmul.f32 %v4260, %v4348
        %v4357 = vmul.f32 %v4335, %v4348
        %v4358 = vmul.f32 %v4264, %v4353
        %v4359 = vmul.f32 %v4266, %v4353
        %v4360 = vmul.f32 %v4340, %v4353
        %s4361 = scalar_lea.vmem %s9, 16
        %v4362 = vld [vmem:[%s4361] sm:$0xff]
        %v4363 = vld [vmem:[%s4361 + $0x8] sm:$0xff]
        %4365 = vset.pattern.permute.xlu0 0
        %4366 = vperm.xlu0 %4365, %v4362
        %v4367 = vpop.permute.xlu0 %4366
        %4370 = vset.pattern.permute.xlu0 0
        %4371 = vperm.xlu0 %4370, %v4363
        %v4372 = vpop.permute.xlu0 %4371
        %v4374 = vadd.f32 %v4355, %v4367
        %v4375 = vadd.f32 %v4356, %v4367
        %v4376 = vadd.f32 %v4357, %v4367
        %v4377 = vadd.f32 %v4358, %v4372
        %v4378 = vadd.f32 %v4359, %v4372
        %v4379 = vadd.f32 %v4360, %v4372
        %v4380 = vxor.u32 %v4374, 2147483648
        %v4381 = vxor.u32 %v4375, 2147483648
        %v4382 = vxor.u32 %v4376, 2147483648
        %v4383 = vxor.u32 %v4377, 2147483648
        %v4384 = vxor.u32 %v4378, 2147483648
        %v4385 = vxor.u32 %v4379, 2147483648
        %v4386 = vmul.f32 %v4380, 1.442695
        %v4387 = vpow.pop %v4386
        %v4388 = vmul.f32 %v4381, 1.442695
        %v4389 = vpow.pop %v4388
        %v4390 = vmul.f32 %v4382, 1.442695
        %v4391 = vpow.pop %v4390
        %v4392 = vmul.f32 %v4383, 1.442695
        %v4393 = vpow.pop %v4392
        %v4394 = vmul.f32 %v4384, 1.442695
        %v4395 = vpow.pop %v4394
        %v4396 = vmul.f32 %v4385, 1.442695
        %v4397 = vpow.pop %v4396
        %v4398 = vadd.f32 %v4387, 1.0
        %v4399 = vadd.f32 %v4389, 1.0
        %v4400 = vadd.f32 %v4391, 1.0
        %v4401 = vadd.f32 %v4393, 1.0
        %v4402 = vadd.f32 %v4395, 1.0
        %v4403 = vadd.f32 %v4397, 1.0
        %v4404 = vrcp.pop %v4398
        %v4405 = vmul.f32 1.0, %v4404
        %v4406 = vrcp.pop %v4399
        %v4407 = vmul.f32 1.0, %v4406
        %v4408 = vrcp.pop %v4400
        %v4409 = vmul.f32 1.0, %v4408
        %v4410 = vrcp.pop %v4401
        %v4411 = vmul.f32 1.0, %v4410
        %v4412 = vrcp.pop %v4402
        %v4413 = vmul.f32 1.0, %v4412
        %v4414 = vrcp.pop %v4403
        %v4415 = vmul.f32 1.0, %v4414
        %v4416 = vmul.f32 %v4374, %v4405
        %v4417 = vmul.f32 %v4375, %v4407
        %v4418 = vmul.f32 %v4376, %v4409
        %v4419 = vmul.f32 %v4377, %v4411
        %v4420 = vmul.f32 %v4378, %v4413
        %v4421 = vmul.f32 %v4379, %v4415
        %4422 = vst [vmem:[%s410] sm:$0xff] %v4416
        %4423 = vst [vmem:[%s410 + $0x8] sm:$0xff] %v4417
        %4424 = vst [vmem:[%s410 + $0x10] sm:$0xff] %v4418
        %4425 = vst [vmem:[%s410 + $0x18] sm:$0xff] %v4419
        %4426 = vst [vmem:[%s410 + $0x20] sm:$0xff] %v4420
        %4427 = vst [vmem:[%s410 + $0x28] sm:$0xff] %v4421
        %s4428 = sand.u32 %s266, 1
        %s4429 = sand.u32 %s266, 1
        %s4430 = smul.addr %s4429, 48
        %s4431 = scalar_lea.vmem [#allocation3], %s4430
        // Predicated region
        $region88: #{c3_forward.1} parent=82 // pred_check
          %p4432 = pneg %p276
        $region89: #{c3_forward.1} parent=82 // pred_check_branch
          %4434 = sbr.rel (%p4432) target = $region91
        $region90: #{c3_forward.1} parent=82 // pred_region
          %s4435 = smul.u32 3, %s22
          %s4436 = smul.addr %s4435, 8
          %s4437 = scalar_lea.vmem %s11, %s4436
          // Predicated region
          $region92: #{c3_forward.1} parent=90 // pred_check
            _
          $region93: #{c3_forward.1} parent=90 // pred_check_branch
            %4439 = sbr.rel (0) target = $region95
          $region94: #{c3_forward.1} parent=90 // pred_region
            // Predicated region
            $region96: #{c3_forward.1} parent=94 // pred_check
              _
            $region97: #{c3_forward.1} parent=94 // pred_check_branch
              %4441 = sbr.rel (0) target = $region99
            $region98: #{c3_forward.1} parent=94 // pred_region
              loop: start=0, step=1, limit=1
              $region100: #{c3_forward.1} parent=98 // loop_pre_header
                _
              $region101: #{c3_forward.1} parent=98 // loop_header
                %s4443 = sphi 0, %s4447
                %p4444 = scmp.ge.s32.totalorder %s4443, 1
                %s4448 = sphi %s4431, %s4431
                %s4449 = sphi %s4437, %s4437
              $region102: #{c3_forward.1} parent=98 // loop_header_branch
                %4446 = sbr.rel (%p4444) target = $region106
              $region103: #{c3_forward.1} parent=98 // loop_body
                %v4450 = vld [vmem:[%s4448] sm:$0xff]
                %4451 = vst [vmem:[%s4449] sm:$0xff] %v4450
                %v4452 = vld [vmem:[%s4448 + $0x8] sm:$0xff]
                %4453 = vst [vmem:[%s4449 + $0x8] sm:$0xff] %v4452
                %v4454 = vld [vmem:[%s4448 + $0x10] sm:$0xff]
                %4455 = vst [vmem:[%s4449 + $0x10] sm:$0xff] %v4454
                %v4456 = vld [vmem:[%s4448 + $0x18] sm:$0xff]
                %4457 = vst [vmem:[%s4449 + $0x30] sm:$0xff] %v4456
                %v4458 = vld [vmem:[%s4448 + $0x20] sm:$0xff]
                %4459 = vst [vmem:[%s4449 + $0x38] sm:$0xff] %v4458
                %v4460 = vld [vmem:[%s4448 + $0x28] sm:$0xff]
                %4461 = vst [vmem:[%s4449 + $0x40] sm:$0xff] %v4460
              $region104: #{c3_forward.1} parent=98 // loop_footer
                %s4447 = sadd.s32 1, %s4443
              $region105: #{c3_forward.1} parent=98 // loop_footer_branch
                %4442 = sbr.rel target = $region101
              $region106: #{c3_forward.1} parent=98 // loop_exit
                _
            $region99: #{c3_forward.1} parent=94 // pred_fallthru
              _
            // Predicated region
            $region107: #{c3_forward.1} parent=94 // pred_check
              _
            $region108: #{c3_forward.1} parent=94 // pred_check_branch
              %4463 = sbr.rel target = $region110
            $region109: #{c3_forward.1} parent=94 // pred_region
              _
            $region110: #{c3_forward.1} parent=94 // pred_fallthru
              _
          $region95: #{c3_forward.1} parent=90 // pred_fallthru
            _
          %4464 = vnop
        $region91: #{c3_forward.1} parent=82 // pred_fallthru
          _
      $region83: #{c3_forward.1} parent=5 // pred_fallthru
        _
      %p4465 = scmp.le.s32.totalorder 2, %s17
      // Predicated region
      $region111: #{c3_forward.1} parent=5 // pred_check
        %p4466 = pneg %p4465
      $region112: #{c3_forward.1} parent=5 // pred_check_branch
        %4468 = sbr.rel (%p4466) target = $region114
      $region113: #{c3_forward.1} parent=5 // pred_region
        %s4469 = ssub.s32 %s17, 2
        // Predicated region
        $region115: #{c3_forward.1} parent=113 // pred_check
          %p4470 = pneg %p282
        $region116: #{c3_forward.1} parent=113 // pred_check_branch
          %4472 = sbr.rel (%p4470) target = $region118
        $region117: #{c3_forward.1} parent=113 // pred_region
          %s4473 = sand.u32 %s267, 1
          %s4474 = sand.u32 %s267, 1
          %s4475 = smul.addr %s4474, 48
          %s4476 = scalar_lea.vmem [#allocation3], %s4475
        $region118: #{c3_forward.1} parent=113 // pred_fallthru
          _
      $region114: #{c3_forward.1} parent=5 // pred_fallthru
        _
    $region6: #{c3_forward.1} parent=1 // loop_footer
      %s21 = sadd.s32 1, %s17
    $region7: #{c3_forward.1} parent=1 // loop_footer_branch
      %16 = sbr.rel target = $region3
    $region8: #{c3_forward.1} parent=1 // loop_exit
      _

</llo_original>
